<compile_context>
chip_gen: v7x
topology: tpu7x:2x2x1
jax: 0.10.0
libtpu: 0.0.40
codegen_flags: <defaults>
</compile_context>

<pallas_src>
import functools

import jax
import jax.numpy as jnp
from jax.experimental import pallas as pl
from jax.experimental.pallas import tpu as pltpu


_VMEM_LIMIT = 48 * 1024 * 1024  # safe on v7x (64 MiB physical); ample headroom


def _round_up(x, m):
    return (x + m - 1) // m * m


# ---------------------------------------------------------------------------
# Fused kernel: per image n
#   x_ref   : (1, Ho+1, Wo+1, 4*fin)   space-to-depth of pad(x, 1)   (cdt)
#   w1_ref  : (4, 4*fin, Fp)           conv1 tap weights             (cdt)
#   ws_ref  : (4, 4*fin, Fp)           shortcut tap weights (ws/4)   (cdt)
#   w2_ref  : (9, Fp, Fp)              conv2 tap weights             (cdt)
#   b_ref   : (1, Fp)                  shortcut bias                 (f32)
#   o_ref   : (1, Ho*Wo, Fp)           final output                  (f32)
#   hpad_ref: (Ho+2, Wo+2, Fp)         VMEM scratch, zero-padded h1  (cdt)
# ---------------------------------------------------------------------------
def _resd_fused_kernel(gamma_ref, x_ref, w1_ref, ws_ref, w2_ref, b_ref,
                       o_ref, hpad_ref):
    _, hp1, wp1, c1 = x_ref.shape
    ho, wo = hp1 - 1, wp1 - 1
    fp = w1_ref.shape[-1]
    m = ho * wo

    x = x_ref[0]                                   # (Ho+1, Wo+1, C1), cdt

    # ---- conv1 (4 taps) + shortcut (same 4 taps, sparse weight), f32 acc ----
    acc_r = jnp.zeros((m, fp), jnp.float32)
    acc_s = jnp.zeros((m, fp), jnp.float32)
    for di in range(2):
        for dj in range(2):
            t = di * 2 + dj
            patch = x[di:di + ho, dj:dj + wo, :].reshape(m, c1)
            acc_r = acc_r + jnp.dot(patch, w1_ref[t],
                                    preferred_element_type=jnp.float32)
            acc_s = acc_s + jnp.dot(patch, ws_ref[t],
                                    preferred_element_type=jnp.float32)

    # ---- LeakyReLU(0.2) in f32, stash h1 into a zero-padded VMEM scratch ----
    h1 = jnp.where(acc_r > 0, acc_r, 0.2 * acc_r)
    hpad_ref[...] = jnp.zeros_like(hpad_ref)
    hpad_ref[pl.ds(1, ho), pl.ds(1, wo), :] = (
        h1.reshape(ho, wo, fp).astype(hpad_ref.dtype))
    hp = hpad_ref[...]                              # (Ho+2, Wo+2, Fp), cdt

    # ---- conv2: 3x3 / stride 1 / pad 1 as 9 taps over the padded scratch ----
    acc2 = jnp.zeros((m, fp), jnp.float32)
    for i in range(3):
        for j in range(3):
            patch2 = hp[i:i + ho, j:j + wo, :].reshape(m, fp)
            acc2 = acc2 + jnp.dot(patch2, w2_ref[i * 3 + j],
                                  preferred_element_type=jnp.float32)

    # ---- f32 epilogue: LeakyReLU, bias, gamma combine, lane-dense store ----
    r = jnp.where(acc2 > 0, acc2, 0.2 * acc2)
    s = acc_s + b_ref[...]                          # (M,Fp) + (1,Fp)
    o_ref[0] = s + gamma_ref[0, 0] * r


def _resd_fused_call(gamma11, xs2d, w1m, wsm, w2m, bias_row, Ho, Wo):
    N = xs2d.shape[0]
    C1 = xs2d.shape[-1]
    Fp = w1m.shape[-1]
    M = Ho * Wo
    isz = xs2d.dtype.itemsize

    # Per-grid-step VMEM footprint sanity check (double-buffered activations,
    # resident weights, scratch, f32 output block).
    footprint = (2 * (Ho + 1) * (Wo + 1) * C1 * isz
                 + (4 * C1 * Fp + 4 * C1 * Fp + 9 * Fp * Fp) * isz
                 + (Ho + 2) * (Wo + 2) * Fp * isz
                 + 2 * M * Fp * 4 + Fp * 4)
    assert footprint < _VMEM_LIMIT // 2, (
        f"per-image VMEM footprint {footprint} too large; needs row-band tiling")

    flops = N * (2 * M * C1 * Fp * 4       # conv1 taps
                 + 2 * M * C1 * Fp * 4     # shortcut taps
                 + 2 * M * Fp * Fp * 9)    # conv2 taps
    bytes_accessed = (xs2d.size * isz
                      + w1m.size * w1m.dtype.itemsize
                      + wsm.size * wsm.dtype.itemsize
                      + w2m.size * w2m.dtype.itemsize
                      + bias_row.size * 4 + 4
                      + N * M * Fp * 4)

    return pl.pallas_call(
        _resd_fused_kernel,
        out_shape=jax.ShapeDtypeStruct((N, M, Fp), jnp.float32),
        grid=(N,),
        in_specs=[
            pl.BlockSpec((1, 1), lambda n: (0, 0),
                         memory_space=pltpu.MemorySpace.SMEM),      # gamma
            pl.BlockSpec((1, Ho + 1, Wo + 1, C1), lambda n: (n, 0, 0, 0)),
            pl.BlockSpec((4, C1, Fp), lambda n: (0, 0, 0)),          # w1 (resident)
            pl.BlockSpec((4, C1, Fp), lambda n: (0, 0, 0)),          # ws (resident)
            pl.BlockSpec((9, Fp, Fp), lambda n: (0, 0, 0)),          # w2 (resident)
            pl.BlockSpec((1, Fp), lambda n: (0, 0)),                 # bias row
        ],
        out_specs=pl.BlockSpec((1, M, Fp), lambda n: (n, 0, 0)),
        scratch_shapes=[pltpu.VMEM((Ho + 2, Wo + 2, Fp), xs2d.dtype)],
        compiler_params=pltpu.CompilerParams(
            dimension_semantics=("parallel",),
            vmem_limit_bytes=_VMEM_LIMIT),
        cost_estimate=pl.CostEstimate(flops=flops, transcendentals=0,
                                      bytes_accessed=bytes_accessed),
    )(gamma11, xs2d, w1m, wsm, w2m, bias_row)


# ---------------------------------------------------------------------------
# resD forward (downsample=True)
# ---------------------------------------------------------------------------
@functools.partial(jax.jit, static_argnames=("use_bf16",))
def resd_forward(x_nchw, params, use_bf16=True):
    w1, w2, ws, bs, gamma = params
    N, fin, H, W = x_nchw.shape
    fout = w1.shape[0]
    assert H % 2 == 0 and W % 2 == 0, "downsample path assumes even H, W"
    Ho, Wo = H // 2, W // 2
    Fp = _round_up(fout, 128)                       # lane-dense output channels
    cdt = jnp.bfloat16 if use_bf16 else jnp.float32

    # Activations: NHWC, cast to compute dtype BEFORE pad / space-to-depth
    # (all wrapper-side ops are ~1x the input volume; no im2col expansion).
    x = jnp.transpose(x_nchw, (0, 2, 3, 1)).astype(cdt)       # (N, H, W, fin)
    xp = jnp.pad(x, ((0, 0), (1, 1), (1, 1), (0, 0)))          # (N, H+2, W+2, fin)
    xs2d = xp.reshape(N, Ho + 1, 2, Wo + 1, 2, fin)
    xs2d = jnp.transpose(xs2d, (0, 1, 3, 2, 4, 5)).reshape(N, Ho + 1, Wo + 1,
                                                           4 * fin)

    # conv_r[0] weight (fout, fin, 4, 4) -> 4 stride-1 taps over the s2d input
    w1r = w1.reshape(fout, fin, 2, 2, 2, 2)                    # (o,c,di,ph,dj,pw)
    w1m = jnp.transpose(w1r, (2, 4, 3, 5, 1, 0)).reshape(4, 4 * fin, fout)
    w1m = jnp.pad(w1m, ((0, 0), (0, 0), (0, Fp - fout))).astype(cdt)

    # conv_r[2] weight (fout, fout, 3, 3) -> 9 taps
    w2m = jnp.transpose(w2, (2, 3, 1, 0)).reshape(9, fout, fout)
    w2m = jnp.pad(w2m, ((0, 0), (0, Fp - fout), (0, Fp - fout))).astype(cdt)

    # shortcut avg_pool2(conv_s(x)) -> 4 phase-sparse taps over the SAME s2d input
    if fin != fout:                                            # learned shortcut
        wsmat = ws.reshape(fout, fin).T                        # (fin, fout)
        bias = bs
    else:
        wsmat = jnp.eye(fin, dtype=jnp.float32)
        bias = jnp.zeros((fout,), jnp.float32)
    wsm = jnp.zeros((2, 2, 2, 2, fin, fout), jnp.float32)
    for di in range(2):
        for dj in range(2):
            wsm = wsm.at[di, dj, 1 - di, 1 - dj].set(wsmat / 4.0)
    wsm = wsm.reshape(4, 4 * fin, fout)
    wsm = jnp.pad(wsm, ((0, 0), (0, 0), (0, Fp - fout))).astype(cdt)

    bias_row = jnp.pad(bias.reshape(1, fout).astype(jnp.float32),
                       ((0, 0), (0, Fp - fout)))
    gamma11 = gamma.reshape(1, 1).astype(jnp.float32)

    out_flat = _resd_fused_call(gamma11, xs2d, w1m, wsm, w2m, bias_row, Ho, Wo)
    out = out_flat[:, :, :fout].reshape(N, Ho, Wo, fout)
    return jnp.transpose(out, (0, 3, 1, 2))                    # back to NCHW


# ---------------------------------------------------------------------------
# Pure-JAX reference (sanity check)
# ---------------------------------------------------------------------------
def resd_reference(x, params):
    w1, w2, ws, bs, gamma = params
    dn = ('NCHW', 'OIHW', 'NCHW')
    lrelu = lambda t: jnp.where(t > 0, t, 0.2 * t)
    h = lrelu(jax.lax.conv_general_dilated(x, w1, (2, 2), ((1, 1), (1, 1)),
                                           dimension_numbers=dn))
    h = lrelu(jax.lax.conv_general_dilated(h, w2, (1, 1), ((1, 1), (1, 1)),
                                           dimension_numbers=dn))
    if w1.shape[1] != w1.shape[0]:   # learned shortcut (fin != fout)
        s = jax.lax.conv_general_dilated(x, ws, (1, 1), ((0, 0), (0, 0)),
                                         dimension_numbers=dn)
        s = s + bs.reshape(1, -1, 1, 1)
    else:
        s = x
    Nb, C, H, W = s.shape
    s = s.reshape(Nb, C, H // 2, 2, W // 2, 2).mean(axis=(3, 5))
    return s + gamma * h


# ---------------------------------------------------------------------------
# Main
# ---------------------------------------------------------------------------
if __name__ == "__main__":
    key = jax.random.PRNGKey(0)
    N, fin, fout, H, W = 2, 4, 8, 16, 16

    kx, k1, k2, k3, k4 = jax.random.split(key, 5)
    x = jax.random.normal(kx, (N, fin, H, W), dtype=jnp.float32)

    # Parameter shapes from resD.__init__
    w1 = 0.1 * jax.random.normal(k1, (fout, fin, 4, 4), dtype=jnp.float32)   # conv_r[0]
    w2 = 0.1 * jax.random.normal(k2, (fout, fout, 3, 3), dtype=jnp.float32)  # conv_r[2]
    ws = 0.1 * jax.random.normal(k3, (fout, fin, 1, 1), dtype=jnp.float32)   # conv_s weight
    bs = 0.1 * jax.random.normal(k4, (fout,), dtype=jnp.float32)             # conv_s bias

    # gamma = 0 matches nn.Parameter(torch.zeros(1)); also test gamma != 0 so
    # the fused residual path is exercised in the output.
    for g in (0.0, 0.5):
        gamma = jnp.full((1,), g, dtype=jnp.float32)
        params = (w1, w2, ws, bs, gamma)

        ref = jax.block_until_ready(resd_reference(x, params))

        # f32 path: bit-faithful to the PyTorch module
        out_f32 = jax.block_until_ready(resd_forward(x, params, use_bf16=False))
        assert out_f32.shape == (N, fout, H // 2, W // 2), out_f32.shape
        err32 = float(jnp.max(jnp.abs(out_f32 - ref)))
        assert jnp.allclose(out_f32, ref, rtol=1e-4, atol=1e-4), err32

        # bf16-MXU path (f32 accumulation + f32 epilogue): perf configuration.
        out_bf = jax.block_until_ready(resd_forward(x, params, use_bf16=True))
        errbf = float(jnp.max(jnp.abs(out_bf - ref)))
        assert jnp.allclose(out_bf, ref, rtol=2e-2, atol=2e-2), errbf

    print("KERNEL_OK")
</pallas_src>

<mosaic_0001>
module attributes {stable_mosaic.version = 11 : i64} {
  func.func @_resd_fused_kernel(%arg0: i32, %arg1: memref<1x1xf32, #tpu.memory_space<smem>>, %arg2: memref<1x9x9x16xf32, #tpu.memory_space<vmem>>, %arg3: memref<4x16x128xf32, #tpu.memory_space<vmem>>, %arg4: memref<4x16x128xf32, #tpu.memory_space<vmem>>, %arg5: memref<9x128x128xf32, #tpu.memory_space<vmem>>, %arg6: memref<1x128xf32, #tpu.memory_space<vmem>>, %arg7: memref<1x64x128xf32, #tpu.memory_space<vmem>>, %arg8: memref<10x10x128xf32, #tpu.memory_space<vmem>>) attributes {dimension_semantics = [#tpu.dimension_semantics<parallel>], iteration_bounds = array<i64: 2>, scalar_prefetch = 0 : i64, scratch_operands = 1 : i64, tpu.core_type = #tpu.core_type<tc>, window_params = [{transform_indices = @transform_0, window_bounds = array<i64: 1, 1>}, {transform_indices = @transform_1, window_bounds = array<i64: 1, 9, 9, 16>}, {pipeline_mode = #tpu.pipeline_mode<synchronous>, transform_indices = @transform_2, window_bounds = array<i64: 4, 16, 128>}, {pipeline_mode = #tpu.pipeline_mode<synchronous>, transform_indices = @transform_3, window_bounds = array<i64: 4, 16, 128>}, {pipeline_mode = #tpu.pipeline_mode<synchronous>, transform_indices = @transform_4, window_bounds = array<i64: 9, 128, 128>}, {pipeline_mode = #tpu.pipeline_mode<synchronous>, transform_indices = @transform_5, window_bounds = array<i64: 1, 128>}, {transform_indices = @transform_6, window_bounds = array<i64: 1, 64, 128>}]} {
    %c0 = arith.constant 0 : index
    %c0_0 = arith.constant 0 : index
    %c0_1 = arith.constant 0 : index
    %c0_2 = arith.constant 0 : index
    %0 = vector.load %arg2[%c0, %c0_0, %c0_1, %c0_2] : memref<1x9x9x16xf32, #tpu.memory_space<vmem>>, vector<1x9x9x16xf32>
    %1 = vector.shape_cast %0 : vector<1x9x9x16xf32> to vector<9x9x16xf32>
    %cst = arith.constant 0.000000e+00 : f32
    %2 = vector.broadcast %cst : f32 to vector<64x128xf32>
    %cst_3 = arith.constant 0.000000e+00 : f32
    %3 = vector.broadcast %cst_3 : f32 to vector<64x128xf32>
    %4 = vector.extract_strided_slice %1 {offsets = [0, 0, 0], sizes = [8, 8, 16], strides = [1, 1, 1]} : vector<9x9x16xf32> to vector<8x8x16xf32>
    %5 = vector.shape_cast %4 : vector<8x8x16xf32> to vector<64x16xf32>
    %c0_4 = arith.constant 0 : index
    %c0_5 = arith.constant 0 : index
    %c0_6 = arith.constant 0 : index
    %6 = vector.load %arg3[%c0_4, %c0_5, %c0_6] : memref<4x16x128xf32, #tpu.memory_space<vmem>>, vector<1x16x128xf32>
    %7 = vector.shape_cast %6 : vector<1x16x128xf32> to vector<16x128xf32>
    %cst_7 = arith.constant dense<0.000000e+00> : vector<64x128xf32>
    %8 = tpu.matmul %5, %7, %cst_7 {dimension_numbers = #tpu.dot_dimension_numbers<[1], [0], [0], [1], [0, 0, 1, 1], [], []>} : vector<64x16xf32>, vector<16x128xf32>, vector<64x128xf32> -> vector<64x128xf32>
    %9 = arith.addf %2, %8 : vector<64x128xf32>
    %c0_8 = arith.constant 0 : index
    %c0_9 = arith.constant 0 : index
    %c0_10 = arith.constant 0 : index
    %10 = vector.load %arg4[%c0_8, %c0_9, %c0_10] : memref<4x16x128xf32, #tpu.memory_space<vmem>>, vector<1x16x128xf32>
    %11 = vector.shape_cast %10 : vector<1x16x128xf32> to vector<16x128xf32>
    %cst_11 = arith.constant dense<0.000000e+00> : vector<64x128xf32>
    %12 = tpu.matmul %5, %11, %cst_11 {dimension_numbers = #tpu.dot_dimension_numbers<[1], [0], [0], [1], [0, 0, 1, 1], [], []>} : vector<64x16xf32>, vector<16x128xf32>, vector<64x128xf32> -> vector<64x128xf32>
    %13 = arith.addf %3, %12 : vector<64x128xf32>
    %14 = vector.extract_strided_slice %1 {offsets = [0, 1, 0], sizes = [8, 8, 16], strides = [1, 1, 1]} : vector<9x9x16xf32> to vector<8x8x16xf32>
    %15 = vector.shape_cast %14 : vector<8x8x16xf32> to vector<64x16xf32>
    %c1 = arith.constant 1 : index
    %c0_12 = arith.constant 0 : index
    %c0_13 = arith.constant 0 : index
    %16 = vector.load %arg3[%c1, %c0_12, %c0_13] : memref<4x16x128xf32, #tpu.memory_space<vmem>>, vector<1x16x128xf32>
    %17 = vector.shape_cast %16 : vector<1x16x128xf32> to vector<16x128xf32>
    %cst_14 = arith.constant dense<0.000000e+00> : vector<64x128xf32>
    %18 = tpu.matmul %15, %17, %cst_14 {dimension_numbers = #tpu.dot_dimension_numbers<[1], [0], [0], [1], [0, 0, 1, 1], [], []>} : vector<64x16xf32>, vector<16x128xf32>, vector<64x128xf32> -> vector<64x128xf32>
    %19 = arith.addf %9, %18 : vector<64x128xf32>
    %c1_15 = arith.constant 1 : index
    %c0_16 = arith.constant 0 : index
    %c0_17 = arith.constant 0 : index
    %20 = vector.load %arg4[%c1_15, %c0_16, %c0_17] : memref<4x16x128xf32, #tpu.memory_space<vmem>>, vector<1x16x128xf32>
    %21 = vector.shape_cast %20 : vector<1x16x128xf32> to vector<16x128xf32>
    %cst_18 = arith.constant dense<0.000000e+00> : vector<64x128xf32>
    %22 = tpu.matmul %15, %21, %cst_18 {dimension_numbers = #tpu.dot_dimension_numbers<[1], [0], [0], [1], [0, 0, 1, 1], [], []>} : vector<64x16xf32>, vector<16x128xf32>, vector<64x128xf32> -> vector<64x128xf32>
    %23 = arith.addf %13, %22 : vector<64x128xf32>
    %24 = vector.extract_strided_slice %1 {offsets = [1, 0, 0], sizes = [8, 8, 16], strides = [1, 1, 1]} : vector<9x9x16xf32> to vector<8x8x16xf32>
    %25 = vector.shape_cast %24 : vector<8x8x16xf32> to vector<64x16xf32>
    %c2 = arith.constant 2 : index
    %c0_19 = arith.constant 0 : index
    %c0_20 = arith.constant 0 : index
    %26 = vector.load %arg3[%c2, %c0_19, %c0_20] : memref<4x16x128xf32, #tpu.memory_space<vmem>>, vector<1x16x128xf32>
    %27 = vector.shape_cast %26 : vector<1x16x128xf32> to vector<16x128xf32>
    %cst_21 = arith.constant dense<0.000000e+00> : vector<64x128xf32>
    %28 = tpu.matmul %25, %27, %cst_21 {dimension_numbers = #tpu.dot_dimension_numbers<[1], [0], [0], [1], [0, 0, 1, 1], [], []>} : vector<64x16xf32>, vector<16x128xf32>, vector<64x128xf32> -> vector<64x128xf32>
    %29 = arith.addf %19, %28 : vector<64x128xf32>
    %c2_22 = arith.constant 2 : index
    %c0_23 = arith.constant 0 : index
    %c0_24 = arith.constant 0 : index
    %30 = vector.load %arg4[%c2_22, %c0_23, %c0_24] : memref<4x16x128xf32, #tpu.memory_space<vmem>>, vector<1x16x128xf32>
    %31 = vector.shape_cast %30 : vector<1x16x128xf32> to vector<16x128xf32>
    %cst_25 = arith.constant dense<0.000000e+00> : vector<64x128xf32>
    %32 = tpu.matmul %25, %31, %cst_25 {dimension_numbers = #tpu.dot_dimension_numbers<[1], [0], [0], [1], [0, 0, 1, 1], [], []>} : vector<64x16xf32>, vector<16x128xf32>, vector<64x128xf32> -> vector<64x128xf32>
    %33 = arith.addf %23, %32 : vector<64x128xf32>
    %34 = vector.extract_strided_slice %1 {offsets = [1, 1, 0], sizes = [8, 8, 16], strides = [1, 1, 1]} : vector<9x9x16xf32> to vector<8x8x16xf32>
    %35 = vector.shape_cast %34 : vector<8x8x16xf32> to vector<64x16xf32>
    %c3 = arith.constant 3 : index
    %c0_26 = arith.constant 0 : index
    %c0_27 = arith.constant 0 : index
    %36 = vector.load %arg3[%c3, %c0_26, %c0_27] : memref<4x16x128xf32, #tpu.memory_space<vmem>>, vector<1x16x128xf32>
    %37 = vector.shape_cast %36 : vector<1x16x128xf32> to vector<16x128xf32>
    %cst_28 = arith.constant dense<0.000000e+00> : vector<64x128xf32>
    %38 = tpu.matmul %35, %37, %cst_28 {dimension_numbers = #tpu.dot_dimension_numbers<[1], [0], [0], [1], [0, 0, 1, 1], [], []>} : vector<64x16xf32>, vector<16x128xf32>, vector<64x128xf32> -> vector<64x128xf32>
    %39 = arith.addf %29, %38 : vector<64x128xf32>
    %c3_29 = arith.constant 3 : index
    %c0_30 = arith.constant 0 : index
    %c0_31 = arith.constant 0 : index
    %40 = vector.load %arg4[%c3_29, %c0_30, %c0_31] : memref<4x16x128xf32, #tpu.memory_space<vmem>>, vector<1x16x128xf32>
    %41 = vector.shape_cast %40 : vector<1x16x128xf32> to vector<16x128xf32>
    %cst_32 = arith.constant dense<0.000000e+00> : vector<64x128xf32>
    %42 = tpu.matmul %35, %41, %cst_32 {dimension_numbers = #tpu.dot_dimension_numbers<[1], [0], [0], [1], [0, 0, 1, 1], [], []>} : vector<64x16xf32>, vector<16x128xf32>, vector<64x128xf32> -> vector<64x128xf32>
    %43 = arith.addf %33, %42 : vector<64x128xf32>
    %cst_33 = arith.constant 0.000000e+00 : f32
    %44 = vector.broadcast %cst_33 : f32 to vector<64x128xf32>
    %45 = arith.cmpf ogt, %39, %44 : vector<64x128xf32>
    %cst_34 = arith.constant 2.000000e-01 : f32
    %46 = vector.broadcast %cst_34 : f32 to vector<64x128xf32>
    %47 = arith.mulf %46, %39 : vector<64x128xf32>
    %48 = arith.select %45, %39, %47 : vector<64x128xi1>, vector<64x128xf32>
    %cst_35 = arith.constant 0.000000e+00 : f32
    %49 = vector.broadcast %cst_35 : f32 to vector<10x10x128xf32>
    %c0_36 = arith.constant 0 : index
    %c0_37 = arith.constant 0 : index
    %c0_38 = arith.constant 0 : index
    %50 = vector.load %arg8[%c0_36, %c0_37, %c0_38] : memref<10x10x128xf32, #tpu.memory_space<vmem>>, vector<10x10x128xf32>
    tpu.vector_store %arg8[%c0_36, %c0_37, %c0_38], %49 {strides = array<i32>} : memref<10x10x128xf32, #tpu.memory_space<vmem>>, vector<10x10x128xf32>,
    %51 = vector.shape_cast %48 : vector<64x128xf32> to vector<8x8x128xf32>
    %c1_39 = arith.constant 1 : index
    %c1_40 = arith.constant 1 : index
    %c0_41 = arith.constant 0 : index
    %52 = vector.load %arg8[%c1_39, %c1_40, %c0_41] : memref<10x10x128xf32, #tpu.memory_space<vmem>>, vector<8x8x128xf32>
    tpu.vector_store %arg8[%c1_39, %c1_40, %c0_41], %51 {strides = array<i32>} : memref<10x10x128xf32, #tpu.memory_space<vmem>>, vector<8x8x128xf32>,
    %c0_42 = arith.constant 0 : index
    %c0_43 = arith.constant 0 : index
    %c0_44 = arith.constant 0 : index
    %53 = vector.load %arg8[%c0_42, %c0_43, %c0_44] : memref<10x10x128xf32, #tpu.memory_space<vmem>>, vector<10x10x128xf32>
    %cst_45 = arith.constant 0.000000e+00 : f32
    %54 = vector.broadcast %cst_45 : f32 to vector<64x128xf32>
    %55 = vector.extract_strided_slice %53 {offsets = [0, 0, 0], sizes = [8, 8, 128], strides = [1, 1, 1]} : vector<10x10x128xf32> to vector<8x8x128xf32>
    %56 = vector.shape_cast %55 : vector<8x8x128xf32> to vector<64x128xf32>
    %c0_46 = arith.constant 0 : index
    %c0_47 = arith.constant 0 : index
    %c0_48 = arith.constant 0 : index
    %57 = vector.load %arg5[%c0_46, %c0_47, %c0_48] : memref<9x128x128xf32, #tpu.memory_space<vmem>>, vector<1x128x128xf32>
    %58 = vector.shape_cast %57 : vector<1x128x128xf32> to vector<128x128xf32>
    %cst_49 = arith.constant dense<0.000000e+00> : vector<64x128xf32>
    %59 = tpu.matmul %56, %58, %cst_49 {dimension_numbers = #tpu.dot_dimension_numbers<[1], [0], [0], [1], [0, 0, 1, 1], [], []>} : vector<64x128xf32>, vector<128x128xf32>, vector<64x128xf32> -> vector<64x128xf32>
    %60 = arith.addf %54, %59 : vector<64x128xf32>
    %61 = vector.extract_strided_slice %53 {offsets = [0, 1, 0], sizes = [8, 8, 128], strides = [1, 1, 1]} : vector<10x10x128xf32> to vector<8x8x128xf32>
    %62 = vector.shape_cast %61 : vector<8x8x128xf32> to vector<64x128xf32>
    %c1_50 = arith.constant 1 : index
    %c0_51 = arith.constant 0 : index
    %c0_52 = arith.constant 0 : index
    %63 = vector.load %arg5[%c1_50, %c0_51, %c0_52] : memref<9x128x128xf32, #tpu.memory_space<vmem>>, vector<1x128x128xf32>
    %64 = vector.shape_cast %63 : vector<1x128x128xf32> to vector<128x128xf32>
    %cst_53 = arith.constant dense<0.000000e+00> : vector<64x128xf32>
    %65 = tpu.matmul %62, %64, %cst_53 {dimension_numbers = #tpu.dot_dimension_numbers<[1], [0], [0], [1], [0, 0, 1, 1], [], []>} : vector<64x128xf32>, vector<128x128xf32>, vector<64x128xf32> -> vector<64x128xf32>
    %66 = arith.addf %60, %65 : vector<64x128xf32>
    %67 = vector.extract_strided_slice %53 {offsets = [0, 2, 0], sizes = [8, 8, 128], strides = [1, 1, 1]} : vector<10x10x128xf32> to vector<8x8x128xf32>
    %68 = vector.shape_cast %67 : vector<8x8x128xf32> to vector<64x128xf32>
    %c2_54 = arith.constant 2 : index
    %c0_55 = arith.constant 0 : index
    %c0_56 = arith.constant 0 : index
    %69 = vector.load %arg5[%c2_54, %c0_55, %c0_56] : memref<9x128x128xf32, #tpu.memory_space<vmem>>, vector<1x128x128xf32>
    %70 = vector.shape_cast %69 : vector<1x128x128xf32> to vector<128x128xf32>
    %cst_57 = arith.constant dense<0.000000e+00> : vector<64x128xf32>
    %71 = tpu.matmul %68, %70, %cst_57 {dimension_numbers = #tpu.dot_dimension_numbers<[1], [0], [0], [1], [0, 0, 1, 1], [], []>} : vector<64x128xf32>, vector<128x128xf32>, vector<64x128xf32> -> vector<64x128xf32>
    %72 = arith.addf %66, %71 : vector<64x128xf32>
    %73 = vector.extract_strided_slice %53 {offsets = [1, 0, 0], sizes = [8, 8, 128], strides = [1, 1, 1]} : vector<10x10x128xf32> to vector<8x8x128xf32>
    %74 = vector.shape_cast %73 : vector<8x8x128xf32> to vector<64x128xf32>
    %c3_58 = arith.constant 3 : index
    %c0_59 = arith.constant 0 : index
    %c0_60 = arith.constant 0 : index
    %75 = vector.load %arg5[%c3_58, %c0_59, %c0_60] : memref<9x128x128xf32, #tpu.memory_space<vmem>>, vector<1x128x128xf32>
    %76 = vector.shape_cast %75 : vector<1x128x128xf32> to vector<128x128xf32>
    %cst_61 = arith.constant dense<0.000000e+00> : vector<64x128xf32>
    %77 = tpu.matmul %74, %76, %cst_61 {dimension_numbers = #tpu.dot_dimension_numbers<[1], [0], [0], [1], [0, 0, 1, 1], [], []>} : vector<64x128xf32>, vector<128x128xf32>, vector<64x128xf32> -> vector<64x128xf32>
    %78 = arith.addf %72, %77 : vector<64x128xf32>
    %79 = vector.extract_strided_slice %53 {offsets = [1, 1, 0], sizes = [8, 8, 128], strides = [1, 1, 1]} : vector<10x10x128xf32> to vector<8x8x128xf32>
    %80 = vector.shape_cast %79 : vector<8x8x128xf32> to vector<64x128xf32>
    %c4 = arith.constant 4 : index
    %c0_62 = arith.constant 0 : index
    %c0_63 = arith.constant 0 : index
    %81 = vector.load %arg5[%c4, %c0_62, %c0_63] : memref<9x128x128xf32, #tpu.memory_space<vmem>>, vector<1x128x128xf32>
    %82 = vector.shape_cast %81 : vector<1x128x128xf32> to vector<128x128xf32>
    %cst_64 = arith.constant dense<0.000000e+00> : vector<64x128xf32>
    %83 = tpu.matmul %80, %82, %cst_64 {dimension_numbers = #tpu.dot_dimension_numbers<[1], [0], [0], [1], [0, 0, 1, 1], [], []>} : vector<64x128xf32>, vector<128x128xf32>, vector<64x128xf32> -> vector<64x128xf32>
    %84 = arith.addf %78, %83 : vector<64x128xf32>
    %85 = vector.extract_strided_slice %53 {offsets = [1, 2, 0], sizes = [8, 8, 128], strides = [1, 1, 1]} : vector<10x10x128xf32> to vector<8x8x128xf32>
    %86 = vector.shape_cast %85 : vector<8x8x128xf32> to vector<64x128xf32>
    %c5 = arith.constant 5 : index
    %c0_65 = arith.constant 0 : index
    %c0_66 = arith.constant 0 : index
    %87 = vector.load %arg5[%c5, %c0_65, %c0_66] : memref<9x128x128xf32, #tpu.memory_space<vmem>>, vector<1x128x128xf32>
    %88 = vector.shape_cast %87 : vector<1x128x128xf32> to vector<128x128xf32>
    %cst_67 = arith.constant dense<0.000000e+00> : vector<64x128xf32>
    %89 = tpu.matmul %86, %88, %cst_67 {dimension_numbers = #tpu.dot_dimension_numbers<[1], [0], [0], [1], [0, 0, 1, 1], [], []>} : vector<64x128xf32>, vector<128x128xf32>, vector<64x128xf32> -> vector<64x128xf32>
    %90 = arith.addf %84, %89 : vector<64x128xf32>
    %91 = vector.extract_strided_slice %53 {offsets = [2, 0, 0], sizes = [8, 8, 128], strides = [1, 1, 1]} : vector<10x10x128xf32> to vector<8x8x128xf32>
    %92 = vector.shape_cast %91 : vector<8x8x128xf32> to vector<64x128xf32>
    %c6 = arith.constant 6 : index
    %c0_68 = arith.constant 0 : index
    %c0_69 = arith.constant 0 : index
    %93 = vector.load %arg5[%c6, %c0_68, %c0_69] : memref<9x128x128xf32, #tpu.memory_space<vmem>>, vector<1x128x128xf32>
    %94 = vector.shape_cast %93 : vector<1x128x128xf32> to vector<128x128xf32>
    %cst_70 = arith.constant dense<0.000000e+00> : vector<64x128xf32>
    %95 = tpu.matmul %92, %94, %cst_70 {dimension_numbers = #tpu.dot_dimension_numbers<[1], [0], [0], [1], [0, 0, 1, 1], [], []>} : vector<64x128xf32>, vector<128x128xf32>, vector<64x128xf32> -> vector<64x128xf32>
    %96 = arith.addf %90, %95 : vector<64x128xf32>
    %97 = vector.extract_strided_slice %53 {offsets = [2, 1, 0], sizes = [8, 8, 128], strides = [1, 1, 1]} : vector<10x10x128xf32> to vector<8x8x128xf32>
    %98 = vector.shape_cast %97 : vector<8x8x128xf32> to vector<64x128xf32>
    %c7 = arith.constant 7 : index
    %c0_71 = arith.constant 0 : index
    %c0_72 = arith.constant 0 : index
    %99 = vector.load %arg5[%c7, %c0_71, %c0_72] : memref<9x128x128xf32, #tpu.memory_space<vmem>>, vector<1x128x128xf32>
    %100 = vector.shape_cast %99 : vector<1x128x128xf32> to vector<128x128xf32>
    %cst_73 = arith.constant dense<0.000000e+00> : vector<64x128xf32>
    %101 = tpu.matmul %98, %100, %cst_73 {dimension_numbers = #tpu.dot_dimension_numbers<[1], [0], [0], [1], [0, 0, 1, 1], [], []>} : vector<64x128xf32>, vector<128x128xf32>, vector<64x128xf32> -> vector<64x128xf32>
    %102 = arith.addf %96, %101 : vector<64x128xf32>
    %103 = vector.extract_strided_slice %53 {offsets = [2, 2, 0], sizes = [8, 8, 128], strides = [1, 1, 1]} : vector<10x10x128xf32> to vector<8x8x128xf32>
    %104 = vector.shape_cast %103 : vector<8x8x128xf32> to vector<64x128xf32>
    %c8 = arith.constant 8 : index
    %c0_74 = arith.constant 0 : index
    %c0_75 = arith.constant 0 : index
    %105 = vector.load %arg5[%c8, %c0_74, %c0_75] : memref<9x128x128xf32, #tpu.memory_space<vmem>>, vector<1x128x128xf32>
    %106 = vector.shape_cast %105 : vector<1x128x128xf32> to vector<128x128xf32>
    %cst_76 = arith.constant dense<0.000000e+00> : vector<64x128xf32>
    %107 = tpu.matmul %104, %106, %cst_76 {dimension_numbers = #tpu.dot_dimension_numbers<[1], [0], [0], [1], [0, 0, 1, 1], [], []>} : vector<64x128xf32>, vector<128x128xf32>, vector<64x128xf32> -> vector<64x128xf32>
    %108 = arith.addf %102, %107 : vector<64x128xf32>
    %cst_77 = arith.constant 0.000000e+00 : f32
    %109 = vector.broadcast %cst_77 : f32 to vector<64x128xf32>
    %110 = arith.cmpf ogt, %108, %109 : vector<64x128xf32>
    %cst_78 = arith.constant 2.000000e-01 : f32
    %111 = vector.broadcast %cst_78 : f32 to vector<64x128xf32>
    %112 = arith.mulf %111, %108 : vector<64x128xf32>
    %113 = arith.select %110, %108, %112 : vector<64x128xi1>, vector<64x128xf32>
    %c0_79 = arith.constant 0 : index
    %c0_80 = arith.constant 0 : index
    %114 = vector.load %arg6[%c0_79, %c0_80] : memref<1x128xf32, #tpu.memory_space<vmem>>, vector<1x128xf32>
    %115 = vector.broadcast %114 : vector<1x128xf32> to vector<64x128xf32>
    %116 = arith.addf %43, %115 : vector<64x128xf32>
    %c0_81 = arith.constant 0 : index
    %c0_82 = arith.constant 0 : index
    %117 = memref.load %arg1[%c0_81, %c0_82] : memref<1x1xf32, #tpu.memory_space<smem>>
    %118 = vector.broadcast %117 : f32 to vector<64x128xf32>
    %119 = arith.mulf %118, %113 : vector<64x128xf32>
    %120 = arith.addf %116, %119 : vector<64x128xf32>
    %c0_83 = arith.constant 0 : index
    %c0_84 = arith.constant 0 : index
    %c0_85 = arith.constant 0 : index
    %121 = vector.load %arg7[%c0_83, %c0_84, %c0_85] : memref<1x64x128xf32, #tpu.memory_space<vmem>>, vector<1x64x128xf32>
    %122 = vector.shape_cast %121 : vector<1x64x128xf32> to vector<64x128xf32>
    %123 = vector.shape_cast %120 : vector<64x128xf32> to vector<1x64x128xf32>
    tpu.vector_store %arg7[%c0_83, %c0_84, %c0_85], %123 {strides = array<i32>} : memref<1x64x128xf32, #tpu.memory_space<vmem>>, vector<1x64x128xf32>,
    return
  }
  func.func @transform_0(%arg0: i32) -> (i32, i32) {
    %c0_i32 = arith.constant 0 : i32
    %c0_i32_0 = arith.constant 0 : i32
    %c0_i32_1 = arith.constant 0 : i32
    return %c0_i32, %c0_i32_0 : i32, i32
  }
  func.func @transform_1(%arg0: i32) -> (i32, i32, i32, i32) {
    %c0_i32 = arith.constant 0 : i32
    %c0_i32_0 = arith.constant 0 : i32
    %c0_i32_1 = arith.constant 0 : i32
    %c0_i32_2 = arith.constant 0 : i32
    return %arg0, %c0_i32, %c0_i32_0, %c0_i32_1 : i32, i32, i32, i32
  }
  func.func @transform_2(%arg0: i32) -> (i32, i32, i32) {
    %c0_i32 = arith.constant 0 : i32
    %c0_i32_0 = arith.constant 0 : i32
    %c0_i32_1 = arith.constant 0 : i32
    %c0_i32_2 = arith.constant 0 : i32
    return %c0_i32, %c0_i32_0, %c0_i32_1 : i32, i32, i32
  }
  func.func @transform_3(%arg0: i32) -> (i32, i32, i32) {
    %c0_i32 = arith.constant 0 : i32
    %c0_i32_0 = arith.constant 0 : i32
    %c0_i32_1 = arith.constant 0 : i32
    %c0_i32_2 = arith.constant 0 : i32
    return %c0_i32, %c0_i32_0, %c0_i32_1 : i32, i32, i32
  }
  func.func @transform_4(%arg0: i32) -> (i32, i32, i32) {
    %c0_i32 = arith.constant 0 : i32
    %c0_i32_0 = arith.constant 0 : i32
    %c0_i32_1 = arith.constant 0 : i32
    %c0_i32_2 = arith.constant 0 : i32
    return %c0_i32, %c0_i32_0, %c0_i32_1 : i32, i32, i32
  }
  func.func @transform_5(%arg0: i32) -> (i32, i32) {
    %c0_i32 = arith.constant 0 : i32
    %c0_i32_0 = arith.constant 0 : i32
    %c0_i32_1 = arith.constant 0 : i32
    return %c0_i32, %c0_i32_0 : i32, i32
  }
  func.func @transform_6(%arg0: i32) -> (i32, i32, i32) {
    %c0_i32 = arith.constant 0 : i32
    %c0_i32_0 = arith.constant 0 : i32
    %c0_i32_1 = arith.constant 0 : i32
    return %arg0, %c0_i32, %c0_i32_0 : i32, i32, i32
  }
}

</mosaic_0001>

<llo_original>
// kernel: resd_forward.1
$region0: #{resd_forward.1}
  #allocation0 [shape = 'u32[]', space=smem, size = 0x4, offset = 0x4, fixed_abs, tag = 'smem constant byte address 0x4 - core index']
  #allocation1 [shape = 'u32[144,128]{1,0:T(1,128)}', space=vmem, size = 0x12000, scoped, tag = 'internal scratch']
  #allocation2 [shape = 'f32[10,10,128]{2,1,0:T(8,128)}', space=vmem, size = 0x14000, scoped, tag = 'scratch operand']
  #allocation3 [shape = 'f32[1,1]{1,0:T(1,128)S(6)}', space=smem, size = 0x200, scoped, tag = 'scoped memory for resd_forward.1']
  %s0 = inlined_call_operand.<no memory space> [shape: f32[1,1], index: 0, kind: input, shape index: {}]
  %s1 = inlined_call_operand.vmem [shape: f32[2,9,9,16], index: 1, kind: input, shape index: {}]
  %s2 = inlined_call_operand.vmem [shape: f32[4,16,128], index: 2, kind: input, shape index: {}]
  %s3 = inlined_call_operand.vmem [shape: f32[4,16,128], index: 3, kind: input, shape index: {}]
  %s4 = inlined_call_operand.vmem [shape: f32[9,128,128], index: 4, kind: input, shape index: {}]
  %s5 = inlined_call_operand.vmem [shape: f32[1,128], index: 5, kind: input, shape index: {}]
  %s6 = inlined_call_operand.vmem [shape: f32[2,64,128], index: 6, kind: output, shape index: {}]
  %s7 = sld [smem:[#allocation0]]
  $region57: #{resd_forward.1} parent=0
    _
  %s9 = ssub.s32 1, %s7
  %s10 = scalar_select 0, %s9, %s7
  %11 = sst [smem:[#allocation3]] %s0
  loop: start=0, step=1, limit=4
  $region2: #{resd_forward.1} parent=0 // loop_pre_header
    _
  $region3: #{resd_forward.1} parent=0 // loop_header
    %s13 = sphi 0, %s17
    %p14 = scmp.ge.s32.totalorder %s13, 4
    %s21 = sphi 0, %s21
    %s23 = sphi 0, %s21
    %s24 = sphi 0, %s23
    %s38 = sphi 0, %s24
    %s44 = sphi 0, %s46
    %s47 = sphi 0, %s44
    %s48 = sphi 0, %s47
    %s64 = sphi 0, %s48
    %s68 = sphi 0, %s68
    %s70 = sphi 0, %s68
    %s71 = sphi 0, %s70
    %s85 = sphi 0, %s71
    %s89 = sphi 0, %s89
    %s91 = sphi 0, %s89
    %s92 = sphi 0, %s91
    %s106 = sphi 0, %s92
    %s110 = sphi 0, %s110
    %s112 = sphi 0, %s110
    %s113 = sphi 0, %s112
    %s127 = sphi 0, %s113
    %s131 = sphi 0, %s131
    %s133 = sphi 0, %s131
    %s134 = sphi 0, %s133
    %s148 = sphi 0, %s134
    %s154 = sphi 0, %s156
    %s157 = sphi 0, %s154
    %s158 = sphi 0, %s157
    %s174 = sphi 0, %s158
  $region4: #{resd_forward.1} parent=0 // loop_header_branch
    %16 = sbr.rel (%p14) target = $region8
  $region5: #{resd_forward.1} parent=0 // loop_body
    %s18 = ssub.s32 %s13, 1
    %s19 = ssub.s32 %s13, 2
    %s20 = sadd.s32 %s13, 1
    %s22 = sadd.s32 %s21, 1
    %p25 = scmp.eq.s32.totalorder %s13, 1
    %p26 = scmp.ne.s32.totalorder %s21, %s23
    %p27 = scmp.eq.s32.totalorder %s13, 0
    %p28 = por %p26, %p27
    %p29 = scmp.ne.s32.totalorder %s21, %s23
    %p30 = scmp.eq.s32.totalorder %s18, 1
    %p31 = por %p29, %p30
    %p32 = scmp.ne.s32.totalorder %s23, %s24
    %p33 = scmp.eq.s32.totalorder %s18, 0
    %p34 = por %p32, %p33
    %p35 = scmp.ne.s32.totalorder %s23, %s24
    %p36 = scmp.eq.s32.totalorder %s19, 1
    %p37 = por %p35, %p36
    %p39 = scmp.ne.s32.totalorder %s24, %s38
    %p40 = scmp.eq.s32.totalorder %s19, 0
    %p41 = por %p39, %p40
    %s42 = ssub.s32 %s13, %s20
    %p43 = scmp.eq.s32.totalorder %s42, 0
    %s45 = sadd.s32 %s44, 1
    %s46 = scalar_select %p43, %s44, %s45
    %p49 = pneg %p43
    %p50 = scmp.eq.s32.totalorder %s13, 1
    %p51 = por %p49, %p50
    %p52 = scmp.ne.s32.totalorder %s44, %s47
    %p53 = scmp.eq.s32.totalorder %s13, 0
    %p54 = por %p52, %p53
    %p55 = scmp.ne.s32.totalorder %s44, %s47
    %p56 = scmp.eq.s32.totalorder %s18, 1
    %p57 = por %p55, %p56
    %p58 = scmp.ne.s32.totalorder %s47, %s48
    %p59 = scmp.eq.s32.totalorder %s18, 0
    %p60 = por %p58, %p59
    %p61 = scmp.ne.s32.totalorder %s47, %s48
    %p62 = scmp.eq.s32.totalorder %s19, 1
    %p63 = por %p61, %p62
    %p65 = scmp.ne.s32.totalorder %s48, %s64
    %p66 = scmp.eq.s32.totalorder %s19, 0
    %p67 = por %p65, %p66
    %s69 = sadd.s32 %s68, 1
    %p72 = scmp.eq.s32.totalorder %s13, 1
    %p73 = scmp.ne.s32.totalorder %s68, %s70
    %p74 = scmp.eq.s32.totalorder %s13, 0
    %p75 = por %p73, %p74
    %p76 = scmp.ne.s32.totalorder %s68, %s70
    %p77 = scmp.eq.s32.totalorder %s18, 1
    %p78 = por %p76, %p77
    %p79 = scmp.ne.s32.totalorder %s70, %s71
    %p80 = scmp.eq.s32.totalorder %s18, 0
    %p81 = por %p79, %p80
    %p82 = scmp.ne.s32.totalorder %s70, %s71
    %p83 = scmp.eq.s32.totalorder %s19, 1
    %p84 = por %p82, %p83
    %p86 = scmp.ne.s32.totalorder %s71, %s85
    %p87 = scmp.eq.s32.totalorder %s19, 0
    %p88 = por %p86, %p87
    %s90 = sadd.s32 %s89, 1
    %p93 = scmp.eq.s32.totalorder %s13, 1
    %p94 = scmp.ne.s32.totalorder %s89, %s91
    %p95 = scmp.eq.s32.totalorder %s13, 0
    %p96 = por %p94, %p95
    %p97 = scmp.ne.s32.totalorder %s89, %s91
    %p98 = scmp.eq.s32.totalorder %s18, 1
    %p99 = por %p97, %p98
    %p100 = scmp.ne.s32.totalorder %s91, %s92
    %p101 = scmp.eq.s32.totalorder %s18, 0
    %p102 = por %p100, %p101
    %p103 = scmp.ne.s32.totalorder %s91, %s92
    %p104 = scmp.eq.s32.totalorder %s19, 1
    %p105 = por %p103, %p104
    %p107 = scmp.ne.s32.totalorder %s92, %s106
    %p108 = scmp.eq.s32.totalorder %s19, 0
    %p109 = por %p107, %p108
    %s111 = sadd.s32 %s110, 1
    %p114 = scmp.eq.s32.totalorder %s13, 1
    %p115 = scmp.ne.s32.totalorder %s110, %s112
    %p116 = scmp.eq.s32.totalorder %s13, 0
    %p117 = por %p115, %p116
    %p118 = scmp.ne.s32.totalorder %s110, %s112
    %p119 = scmp.eq.s32.totalorder %s18, 1
    %p120 = por %p118, %p119
    %p121 = scmp.ne.s32.totalorder %s112, %s113
    %p122 = scmp.eq.s32.totalorder %s18, 0
    %p123 = por %p121, %p122
    %p124 = scmp.ne.s32.totalorder %s112, %s113
    %p125 = scmp.eq.s32.totalorder %s19, 1
    %p126 = por %p124, %p125
    %p128 = scmp.ne.s32.totalorder %s113, %s127
    %p129 = scmp.eq.s32.totalorder %s19, 0
    %p130 = por %p128, %p129
    %s132 = sadd.s32 %s131, 1
    %p135 = scmp.eq.s32.totalorder %s13, 1
    %p136 = scmp.ne.s32.totalorder %s131, %s133
    %p137 = scmp.eq.s32.totalorder %s13, 0
    %p138 = por %p136, %p137
    %p139 = scmp.ne.s32.totalorder %s131, %s133
    %p140 = scmp.eq.s32.totalorder %s18, 1
    %p141 = por %p139, %p140
    %p142 = scmp.ne.s32.totalorder %s133, %s134
    %p143 = scmp.eq.s32.totalorder %s18, 0
    %p144 = por %p142, %p143
    %p145 = scmp.ne.s32.totalorder %s133, %s134
    %p146 = scmp.eq.s32.totalorder %s19, 1
    %p147 = por %p145, %p146
    %p149 = scmp.ne.s32.totalorder %s134, %s148
    %p150 = scmp.eq.s32.totalorder %s19, 0
    %p151 = por %p149, %p150
    %s152 = ssub.s32 %s13, %s20
    %p153 = scmp.eq.s32.totalorder %s152, 0
    %s155 = sadd.s32 %s154, 1
    %s156 = scalar_select %p153, %s154, %s155
    %p159 = pneg %p153
    %p160 = scmp.eq.s32.totalorder %s13, 1
    %p161 = por %p159, %p160
    %p162 = scmp.ne.s32.totalorder %s154, %s157
    %p163 = scmp.eq.s32.totalorder %s13, 0
    %p164 = por %p162, %p163
    %p165 = scmp.ne.s32.totalorder %s154, %s157
    %p166 = scmp.eq.s32.totalorder %s18, 1
    %p167 = por %p165, %p166
    %p168 = scmp.ne.s32.totalorder %s157, %s158
    %p169 = scmp.eq.s32.totalorder %s18, 0
    %p170 = por %p168, %p169
    %p171 = scmp.ne.s32.totalorder %s157, %s158
    %p172 = scmp.eq.s32.totalorder %s19, 1
    %p173 = por %p171, %p172
    %p175 = scmp.ne.s32.totalorder %s158, %s174
    %p176 = scmp.eq.s32.totalorder %s19, 0
    %p177 = por %p175, %p176
    %p178 = scmp.le.s32.totalorder 1, %s13
    %p179 = scmp.lt.s32.totalorder %s13, 3
    %p180 = pnand %p178, %p179
    %p181 = pneg %p180
    // Predicated region
    $region9: #{resd_forward.1} parent=5 // pred_check
      _
    $region10: #{resd_forward.1} parent=5 // pred_check_branch
      %183 = sbr.rel (%p180) target = $region12
    $region11: #{resd_forward.1} parent=5 // pred_region
      %s184 = ssub.s32 %s13, 1
      // Predicated region
      $region13: #{resd_forward.1} parent=11 // pred_check
        %p185 = pneg %p34
      $region14: #{resd_forward.1} parent=11 // pred_check_branch
        %187 = sbr.rel (%p185) target = $region16
      $region15: #{resd_forward.1} parent=11 // pred_region
        _
      $region16: #{resd_forward.1} parent=11 // pred_fallthru
        _
      // Predicated region
      $region17: #{resd_forward.1} parent=11 // pred_check
        %p188 = pneg %p81
      $region18: #{resd_forward.1} parent=11 // pred_check_branch
        %190 = sbr.rel (%p188) target = $region20
      $region19: #{resd_forward.1} parent=11 // pred_region
        _
      $region20: #{resd_forward.1} parent=11 // pred_fallthru
        _
      // Predicated region
      $region21: #{resd_forward.1} parent=11 // pred_check
        %p191 = pneg %p102
      $region22: #{resd_forward.1} parent=11 // pred_check_branch
        %193 = sbr.rel (%p191) target = $region24
      $region23: #{resd_forward.1} parent=11 // pred_region
        _
      $region24: #{resd_forward.1} parent=11 // pred_fallthru
        _
      // Predicated region
      $region25: #{resd_forward.1} parent=11 // pred_check
        %p194 = pneg %p123
      $region26: #{resd_forward.1} parent=11 // pred_check_branch
        %196 = sbr.rel (%p194) target = $region28
      $region27: #{resd_forward.1} parent=11 // pred_region
        _
      $region28: #{resd_forward.1} parent=11 // pred_fallthru
        _
      // Predicated region
      $region29: #{resd_forward.1} parent=11 // pred_check
        %p197 = pneg %p144
      $region30: #{resd_forward.1} parent=11 // pred_check_branch
        %199 = sbr.rel (%p197) target = $region32
      $region31: #{resd_forward.1} parent=11 // pred_region
        _
      $region32: #{resd_forward.1} parent=11 // pred_fallthru
        _
    $region12: #{resd_forward.1} parent=5 // pred_fallthru
      _
    %p200 = scmp.lt.s32.totalorder %s13, 2
    // Predicated region
    $region33: #{resd_forward.1} parent=5 // pred_check
      %p201 = pneg %p200
    $region34: #{resd_forward.1} parent=5 // pred_check_branch
      %203 = sbr.rel (%p201) target = $region36
    $region35: #{resd_forward.1} parent=5 // pred_region
      // Predicated region
      $region37: #{resd_forward.1} parent=35 // pred_check
        %p204 = pneg %p54
      $region38: #{resd_forward.1} parent=35 // pred_check_branch
        %206 = sbr.rel (%p204) target = $region40
      $region39: #{resd_forward.1} parent=35 // pred_region
        %p207 = scmp.lt.s32.totalorder %s13, 1
        %s208 = scalar_select %p207, %s13, 1
        %s209 = smul.addr %s208, 18
        %s210 = smul.addr %s209, 8
        %s211 = scalar_lea.vmem %s1, %s210
      $region40: #{resd_forward.1} parent=35 // pred_fallthru
        _
    $region36: #{resd_forward.1} parent=5 // pred_fallthru
      _
    %p212 = scmp.le.s32.totalorder 1, %s13
    %p213 = scmp.lt.s32.totalorder %s13, 3
    %p214 = pnand %p212, %p213
    %p215 = pneg %p214
    // Predicated region
    $region41: #{resd_forward.1} parent=5 // pred_check
      _
    $region42: #{resd_forward.1} parent=5 // pred_check_branch
      %217 = sbr.rel (%p214) target = $region44
    $region43: #{resd_forward.1} parent=5 // pred_region
      %s218 = ssub.s32 %s13, 1
      %p219 = pneg %p34
      %p220 = pneg %p31
      %p221 = scmp.lt.s32.totalorder %s18, 1
      %s222 = scalar_select %p221, %s18, 1
      %s223 = smul.addr %s222, 18
      %s224 = smul.addr %s223, 8
      %s225 = scalar_lea.vmem %s1, %s224
      %p226 = pneg %p60
      %p227 = pneg %p57
      %p228 = pneg %p81
      %p229 = pneg %p78
      %p230 = pneg %p102
      %p231 = pneg %p99
      %p232 = pneg %p123
      %p233 = pneg %p120
      %p234 = pneg %p144
      %p235 = pneg %p141
      %p236 = pneg %p170
      %p237 = pneg %p167
      %p238 = scmp.lt.s32.totalorder %s18, 1
      %s239 = scalar_select %p238, %s18, 1
      %s240 = smul.addr %s239, 8
      %s241 = smul.addr %s240, 8
      %s242 = scalar_lea.vmem %s6, %s241
      %p243 = scmp.lt.s32.totalorder %s18, 1
      %s244 = scalar_select %p243, %s18, 1
      %s245 = smul.addr %s244, 18
      %s246 = smul.addr %s245, 8
      %s247 = scalar_lea.vmem %s1, %s246
      %p248 = scmp.lt.s32.totalorder %s18, 1
      %s249 = scalar_select %p248, %s18, 1
      %s250 = smul.addr %s249, 8
      %s251 = smul.addr %s250, 8
      %s252 = scalar_lea.vmem %s6, %s251
      %v253 = vld [vmem:[%s247] sm:$0xff]
      %v254 = vld [vmem:[%s247 + $0x8] sm:$0x1]
      %v255 = vld [vmem:[%s247 + $0x10] sm:$0xff]
      %v256 = vld [vmem:[%s247 + $0x18] sm:$0x1]
      %v257 = vld [vmem:[%s247 + $0x20] sm:$0xff]
      %v258 = vld [vmem:[%s247 + $0x28] sm:$0x1]
      %v259 = vld [vmem:[%s247 + $0x30] sm:$0xff]
      %v260 = vld [vmem:[%s247 + $0x38] sm:$0x1]
      %v261 = vld [vmem:[%s247 + $0x40] sm:$0xff]
      %v262 = vld [vmem:[%s247 + $0x48] sm:$0x1]
      %v263 = vld [vmem:[%s247 + $0x50] sm:$0xff]
      %v264 = vld [vmem:[%s247 + $0x58] sm:$0x1]
      %v265 = vld [vmem:[%s247 + $0x60] sm:$0xff]
      %v266 = vld [vmem:[%s247 + $0x68] sm:$0x1]
      %v267 = vld [vmem:[%s247 + $0x70] sm:$0xff]
      %v268 = vld [vmem:[%s247 + $0x78] sm:$0x1]
      %v269 = vld [vmem:[%s247 + $0x80] sm:$0xff]
      %v270 = vld [vmem:[%s247 + $0x88] sm:$0x1]
      %v271 = vld [vmem:[%s2] sm:$0xff]
      %v272 = vld [vmem:[%s2 + $0x8] sm:$0xff]
      %v273 = vld [vmem:[%s3] sm:$0xff]
      %v274 = vld [vmem:[%s3 + $0x8] sm:$0xff]
      %vm291 = vcmask 1046528
      %v292 = vrot.slane %v253, 1
      %v293 = vrot.slane %v254, 1
      %v294 = vsel %vm291, %v292, %v293
      %v295 = vrot.slane %v255, 1
      %v296 = vrot.slane %v256, 1
      %v297 = vsel %vm291, %v295, %v296
      %v298 = vrot.slane %v257, 1
      %v299 = vrot.slane %v258, 1
      %v300 = vsel %vm291, %v298, %v299
      %v301 = vrot.slane %v259, 1
      %v302 = vrot.slane %v260, 1
      %v303 = vsel %vm291, %v301, %v302
      %v304 = vrot.slane %v261, 1
      %v305 = vrot.slane %v262, 1
      %v306 = vsel %vm291, %v304, %v305
      %v307 = vrot.slane %v263, 1
      %v308 = vrot.slane %v264, 1
      %v309 = vsel %vm291, %v307, %v308
      %v310 = vrot.slane %v265, 1
      %v311 = vrot.slane %v266, 1
      %v312 = vsel %vm291, %v310, %v311
      %v313 = vrot.slane %v267, 1
      %v314 = vrot.slane %v268, 1
      %v315 = vsel %vm291, %v313, %v314
      %s316 = scalar_lea.vmem %s2, 16
      %v317 = vld [vmem:[%s316] sm:$0xff]
      %v318 = vld [vmem:[%s316 + $0x8] sm:$0xff]
      %vm319 = vcmask 130048
      %v320 = vsel %vm319, %v294, 0
      %v322 = vsel %vm319, %v297, 0
      %v324 = vsel %vm319, %v300, 0
      %v326 = vsel %vm319, %v303, 0
      %v328 = vsel %vm319, %v306, 0
      %v330 = vsel %vm319, %v309, 0
      %v332 = vsel %vm319, %v312, 0
      %v334 = vsel %vm319, %v315, 0
      %336 = vmatprep.subr.mxu0 0.0
      %337 = vmatpush1.msra.mxu0 %v317
      %338 = vmatprep.subr.mxu0 0.0
      %339 = vmatpush1.msra.mxu0 %v318
      %340 = vmatprep.subr.mxu0 0.0
      %341 = vmatpush1.msra.mxu0 0.0
      %342 = vmatprep.subr.mxu0 0.0
      %343 = vmatpush1.msra.mxu0 0.0
      %344 = vmatprep.subr.mxu0 0.0
      %345 = vmatpush1.msra.mxu0 0.0
      %346 = vmatprep.subr.mxu0 0.0
      %347 = vmatpush1.msra.mxu0 0.0
      %348 = vmatprep.subr.mxu0 0.0
      %349 = vmatpush1.msra.mxu0 0.0
      %350 = vmatprep.subr.mxu0 0.0
      %351 = vmatpush1.msra.mxu0 0.0
      %352 = vmatprep.subr.mxu0 0.0
      %353 = vmatpush1.msra.mxu0 0.0
      %354 = vmatprep.subr.mxu0 0.0
      %355 = vmatpush1.msra.mxu0 0.0
      %356 = vmatprep.subr.mxu0 0.0
      %357 = vmatpush1.msra.mxu0 0.0
      %358 = vmatprep.subr.mxu0 0.0
      %359 = vmatpush1.msra.mxu0 0.0
      %360 = vmatprep.subr.mxu0 0.0
      %361 = vmatpush1.msra.mxu0 0.0
      %362 = vmatprep.subr.mxu0 0.0
      %363 = vmatpush1.msra.mxu0 0.0
      %364 = vmatprep.subr.mxu0 0.0
      %365 = vmatpush1.msra.mxu0 0.0
      %366 = vmatprep.subr.mxu0 0.0
      %367 = vmatpush1.msra.mxu0 0.0
      %368 = vmatprep.subr.mxu0 0.0
      %369 = vmatpush1.msra.mxu0 0.0
      %370 = vmatprep.subr.mxu0 0.0
      %371 = vmatpush1.msra.mxu0 0.0
      %372 = vmatprep.subr.mxu0 0.0
      %373 = vmatpush1.msra.mxu0 0.0
      %374 = vmatprep.subr.mxu0 0.0
      %375 = vmatpush1.msra.mxu0 0.0
      %376 = vmatprep.subr.mxu0 0.0
      %377 = vmatpush1.msra.mxu0 0.0
      %378 = vmatprep.subr.mxu0 0.0
      %379 = vmatpush1.msra.mxu0 0.0
      %380 = vmatprep.subr.mxu0 0.0
      %381 = vmatpush1.msra.mxu0 0.0
      %382 = vmatprep.subr.mxu0 0.0
      %383 = vmatpush1.msra.mxu0 0.0
      %384 = vmatprep.subr.mxu0 0.0
      %385 = vmatpush1.msra.mxu0 0.0
      %386 = vmatprep.subr.mxu0 0.0
      %387 = vmatpush1.msra.mxu0 0.0
      %388 = vmatprep.subr.mxu0 0.0
      %389 = vmatpush1.msra.mxu0 0.0
      %390 = vmatprep.subr.mxu0 0.0
      %391 = vmatpush1.msra.mxu0 0.0
      %392 = vmatprep.subr.mxu0 0.0
      %393 = vmatpush1.msra.mxu0 0.0
      %394 = vmatprep.subr.mxu0 0.0
      %395 = vmatpush1.msra.mxu0 0.0
      %396 = vmatprep.subr.mxu0 0.0
      %397 = vmatpush1.msra.mxu0 0.0
      %398 = vmatprep.subr.mxu0 0.0
      %399 = vmatpush1.msra.mxu0 0.0
      %400 = vmatprep.mubr.f32.mxu0 0.0
      %401 = vmatmul.mubr.f32.gmra.mrb[0].mxu0 %v320
      %v402 = vpop.f32.mrb[0].mxu0
      %v403 = vadd.f32 0.0, %v402
      %v404 = vpop.f32.mrb[0].mxu0
      %405 = vmatprep.mubr.f32.mxu0 0.0
      %406 = vmatmul.mubr.f32.gmra.mrb[0].mxu0 %v322
      %v407 = vpop.f32.mrb[0].mxu0
      %v408 = vadd.f32 0.0, %v407
      %v409 = vpop.f32.mrb[0].mxu0
      %410 = vmatprep.mubr.f32.mxu0 0.0
      %411 = vmatmul.mubr.f32.gmra.mrb[0].mxu0 %v324
      %v412 = vpop.f32.mrb[0].mxu0
      %v413 = vadd.f32 0.0, %v412
      %v414 = vpop.f32.mrb[0].mxu0
      %415 = vmatprep.mubr.f32.mxu0 0.0
      %416 = vmatmul.mubr.f32.gmra.mrb[0].mxu0 %v326
      %v417 = vpop.f32.mrb[0].mxu0
      %v418 = vadd.f32 0.0, %v417
      %v419 = vpop.f32.mrb[0].mxu0
      %420 = vmatprep.mubr.f32.mxu0 0.0
      %421 = vmatmul.mubr.f32.gmra.mrb[0].mxu0 %v328
      %v422 = vpop.f32.mrb[0].mxu0
      %v423 = vadd.f32 0.0, %v422
      %v424 = vpop.f32.mrb[0].mxu0
      %425 = vmatprep.mubr.f32.mxu0 0.0
      %426 = vmatmul.mubr.f32.gmra.mrb[0].mxu0 %v330
      %v427 = vpop.f32.mrb[0].mxu0
      %v428 = vadd.f32 0.0, %v427
      %v429 = vpop.f32.mrb[0].mxu0
      %430 = vmatprep.mubr.f32.mxu0 0.0
      %431 = vmatmul.mubr.f32.gmra.mrb[0].mxu0 %v332
      %v432 = vpop.f32.mrb[0].mxu0
      %v433 = vadd.f32 0.0, %v432
      %v434 = vpop.f32.mrb[0].mxu0
      %435 = vmatprep.mubr.f32.mxu0 0.0
      %436 = vmatmul.mubr.f32.gmra.mrb[0].mxu0 %v334
      %v437 = vpop.f32.mrb[0].mxu0
      %v438 = vadd.f32 0.0, %v437
      %v439 = vpop.f32.mrb[0].mxu0
      %440 = vdwg.mxu0
      %v441 = vsel %vm319, %v253, 0
      %v443 = vsel %vm319, %v255, 0
      %v445 = vsel %vm319, %v257, 0
      %v447 = vsel %vm319, %v259, 0
      %v449 = vsel %vm319, %v261, 0
      %v451 = vsel %vm319, %v263, 0
      %v453 = vsel %vm319, %v265, 0
      %v455 = vsel %vm319, %v267, 0
      %457 = vmatprep.subr.mxu0 0.0
      %458 = vmatpush1.msra.mxu0 %v271
      %459 = vmatprep.subr.mxu0 0.0
      %460 = vmatpush1.msra.mxu0 %v272
      %461 = vmatprep.subr.mxu0 0.0
      %462 = vmatpush1.msra.mxu0 0.0
      %463 = vmatprep.subr.mxu0 0.0
      %464 = vmatpush1.msra.mxu0 0.0
      %465 = vmatprep.subr.mxu0 0.0
      %466 = vmatpush1.msra.mxu0 0.0
      %467 = vmatprep.subr.mxu0 0.0
      %468 = vmatpush1.msra.mxu0 0.0
      %469 = vmatprep.subr.mxu0 0.0
      %470 = vmatpush1.msra.mxu0 0.0
      %471 = vmatprep.subr.mxu0 0.0
      %472 = vmatpush1.msra.mxu0 0.0
      %473 = vmatprep.subr.mxu0 0.0
      %474 = vmatpush1.msra.mxu0 0.0
      %475 = vmatprep.subr.mxu0 0.0
      %476 = vmatpush1.msra.mxu0 0.0
      %477 = vmatprep.subr.mxu0 0.0
      %478 = vmatpush1.msra.mxu0 0.0
      %479 = vmatprep.subr.mxu0 0.0
      %480 = vmatpush1.msra.mxu0 0.0
      %481 = vmatprep.subr.mxu0 0.0
      %482 = vmatpush1.msra.mxu0 0.0
      %483 = vmatprep.subr.mxu0 0.0
      %484 = vmatpush1.msra.mxu0 0.0
      %485 = vmatprep.subr.mxu0 0.0
      %486 = vmatpush1.msra.mxu0 0.0
      %487 = vmatprep.subr.mxu0 0.0
      %488 = vmatpush1.msra.mxu0 0.0
      %489 = vmatprep.subr.mxu0 0.0
      %490 = vmatpush1.msra.mxu0 0.0
      %491 = vmatprep.subr.mxu0 0.0
      %492 = vmatpush1.msra.mxu0 0.0
      %493 = vmatprep.subr.mxu0 0.0
      %494 = vmatpush1.msra.mxu0 0.0
      %495 = vmatprep.subr.mxu0 0.0
      %496 = vmatpush1.msra.mxu0 0.0
      %497 = vmatprep.subr.mxu0 0.0
      %498 = vmatpush1.msra.mxu0 0.0
      %499 = vmatprep.subr.mxu0 0.0
      %500 = vmatpush1.msra.mxu0 0.0
      %501 = vmatprep.subr.mxu0 0.0
      %502 = vmatpush1.msra.mxu0 0.0
      %503 = vmatprep.subr.mxu0 0.0
      %504 = vmatpush1.msra.mxu0 0.0
      %505 = vmatprep.subr.mxu0 0.0
      %506 = vmatpush1.msra.mxu0 0.0
      %507 = vmatprep.subr.mxu0 0.0
      %508 = vmatpush1.msra.mxu0 0.0
      %509 = vmatprep.subr.mxu0 0.0
      %510 = vmatpush1.msra.mxu0 0.0
      %511 = vmatprep.subr.mxu0 0.0
      %512 = vmatpush1.msra.mxu0 0.0
      %513 = vmatprep.subr.mxu0 0.0
      %514 = vmatpush1.msra.mxu0 0.0
      %515 = vmatprep.subr.mxu0 0.0
      %516 = vmatpush1.msra.mxu0 0.0
      %517 = vmatprep.subr.mxu0 0.0
      %518 = vmatpush1.msra.mxu0 0.0
      %519 = vmatprep.subr.mxu0 0.0
      %520 = vmatpush1.msra.mxu0 0.0
      %521 = vmatprep.mubr.f32.mxu0 0.0
      %522 = vmatmul.mubr.f32.gmra.mrb[0].mxu0 %v441
      %v523 = vpop.f32.mrb[0].mxu0
      %v524 = vadd.f32 %v403, %v523
      %v525 = vpop.f32.mrb[0].mxu0
      %526 = vmatprep.mubr.f32.mxu0 0.0
      %527 = vmatmul.mubr.f32.gmra.mrb[0].mxu0 %v443
      %v528 = vpop.f32.mrb[0].mxu0
      %v529 = vadd.f32 %v408, %v528
      %v530 = vpop.f32.mrb[0].mxu0
      %531 = vmatprep.mubr.f32.mxu0 0.0
      %532 = vmatmul.mubr.f32.gmra.mrb[0].mxu0 %v445
      %v533 = vpop.f32.mrb[0].mxu0
      %v534 = vadd.f32 %v413, %v533
      %v535 = vpop.f32.mrb[0].mxu0
      %536 = vmatprep.mubr.f32.mxu0 0.0
      %537 = vmatmul.mubr.f32.gmra.mrb[0].mxu0 %v447
      %v538 = vpop.f32.mrb[0].mxu0
      %v539 = vadd.f32 %v418, %v538
      %v540 = vpop.f32.mrb[0].mxu0
      %541 = vmatprep.mubr.f32.mxu0 0.0
      %542 = vmatmul.mubr.f32.gmra.mrb[0].mxu0 %v449
      %v543 = vpop.f32.mrb[0].mxu0
      %v544 = vadd.f32 %v423, %v543
      %v545 = vpop.f32.mrb[0].mxu0
      %546 = vmatprep.mubr.f32.mxu0 0.0
      %547 = vmatmul.mubr.f32.gmra.mrb[0].mxu0 %v451
      %v548 = vpop.f32.mrb[0].mxu0
      %v549 = vadd.f32 %v428, %v548
      %v550 = vpop.f32.mrb[0].mxu0
      %551 = vmatprep.mubr.f32.mxu0 0.0
      %552 = vmatmul.mubr.f32.gmra.mrb[0].mxu0 %v453
      %v553 = vpop.f32.mrb[0].mxu0
      %v554 = vadd.f32 %v433, %v553
      %v555 = vpop.f32.mrb[0].mxu0
      %556 = vmatprep.mubr.f32.mxu0 0.0
      %557 = vmatmul.mubr.f32.gmra.mrb[0].mxu0 %v455
      %v558 = vpop.f32.mrb[0].mxu0
      %v559 = vadd.f32 %v438, %v558
      %v560 = vpop.f32.mrb[0].mxu0
      %561 = vdwg.mxu0
      %s562 = scalar_lea.vmem %s3, 16
      %v563 = vld [vmem:[%s562] sm:$0xff]
      %v564 = vld [vmem:[%s562 + $0x8] sm:$0xff]
      %565 = vmatprep.subr.mxu0 0.0
      %566 = vmatpush1.msra.mxu0 %v563
      %567 = vmatprep.subr.mxu0 0.0
      %568 = vmatpush1.msra.mxu0 %v564
      %569 = vmatprep.subr.mxu0 0.0
      %570 = vmatpush1.msra.mxu0 0.0
      %571 = vmatprep.subr.mxu0 0.0
      %572 = vmatpush1.msra.mxu0 0.0
      %573 = vmatprep.subr.mxu0 0.0
      %574 = vmatpush1.msra.mxu0 0.0
      %575 = vmatprep.subr.mxu0 0.0
      %576 = vmatpush1.msra.mxu0 0.0
      %577 = vmatprep.subr.mxu0 0.0
      %578 = vmatpush1.msra.mxu0 0.0
      %579 = vmatprep.subr.mxu0 0.0
      %580 = vmatpush1.msra.mxu0 0.0
      %581 = vmatprep.subr.mxu0 0.0
      %582 = vmatpush1.msra.mxu0 0.0
      %583 = vmatprep.subr.mxu0 0.0
      %584 = vmatpush1.msra.mxu0 0.0
      %585 = vmatprep.subr.mxu0 0.0
      %586 = vmatpush1.msra.mxu0 0.0
      %587 = vmatprep.subr.mxu0 0.0
      %588 = vmatpush1.msra.mxu0 0.0
      %589 = vmatprep.subr.mxu0 0.0
      %590 = vmatpush1.msra.mxu0 0.0
      %591 = vmatprep.subr.mxu0 0.0
      %592 = vmatpush1.msra.mxu0 0.0
      %593 = vmatprep.subr.mxu0 0.0
      %594 = vmatpush1.msra.mxu0 0.0
      %595 = vmatprep.subr.mxu0 0.0
      %596 = vmatpush1.msra.mxu0 0.0
      %597 = vmatprep.subr.mxu0 0.0
      %598 = vmatpush1.msra.mxu0 0.0
      %599 = vmatprep.subr.mxu0 0.0
      %600 = vmatpush1.msra.mxu0 0.0
      %601 = vmatprep.subr.mxu0 0.0
      %602 = vmatpush1.msra.mxu0 0.0
      %603 = vmatprep.subr.mxu0 0.0
      %604 = vmatpush1.msra.mxu0 0.0
      %605 = vmatprep.subr.mxu0 0.0
      %606 = vmatpush1.msra.mxu0 0.0
      %607 = vmatprep.subr.mxu0 0.0
      %608 = vmatpush1.msra.mxu0 0.0
      %609 = vmatprep.subr.mxu0 0.0
      %610 = vmatpush1.msra.mxu0 0.0
      %611 = vmatprep.subr.mxu0 0.0
      %612 = vmatpush1.msra.mxu0 0.0
      %613 = vmatprep.subr.mxu0 0.0
      %614 = vmatpush1.msra.mxu0 0.0
      %615 = vmatprep.subr.mxu0 0.0
      %616 = vmatpush1.msra.mxu0 0.0
      %617 = vmatprep.subr.mxu0 0.0
      %618 = vmatpush1.msra.mxu0 0.0
      %619 = vmatprep.subr.mxu0 0.0
      %620 = vmatpush1.msra.mxu0 0.0
      %621 = vmatprep.subr.mxu0 0.0
      %622 = vmatpush1.msra.mxu0 0.0
      %623 = vmatprep.subr.mxu0 0.0
      %624 = vmatpush1.msra.mxu0 0.0
      %625 = vmatprep.subr.mxu0 0.0
      %626 = vmatpush1.msra.mxu0 0.0
      %627 = vmatprep.subr.mxu0 0.0
      %628 = vmatpush1.msra.mxu0 0.0
      %629 = vmatprep.mubr.f32.mxu0 0.0
      %630 = vmatmul.mubr.f32.gmra.mrb[0].mxu0 %v320
      %v631 = vpop.f32.mrb[0].mxu0
      %v632 = vadd.f32 0.0, %v631
      %v633 = vpop.f32.mrb[0].mxu0
      %634 = vmatprep.mubr.f32.mxu0 0.0
      %635 = vmatmul.mubr.f32.gmra.mrb[0].mxu0 %v322
      %v636 = vpop.f32.mrb[0].mxu0
      %v637 = vadd.f32 0.0, %v636
      %v638 = vpop.f32.mrb[0].mxu0
      %639 = vmatprep.mubr.f32.mxu0 0.0
      %640 = vmatmul.mubr.f32.gmra.mrb[0].mxu0 %v324
      %v641 = vpop.f32.mrb[0].mxu0
      %v642 = vadd.f32 0.0, %v641
      %v643 = vpop.f32.mrb[0].mxu0
      %644 = vmatprep.mubr.f32.mxu0 0.0
      %645 = vmatmul.mubr.f32.gmra.mrb[0].mxu0 %v326
      %v646 = vpop.f32.mrb[0].mxu0
      %v647 = vadd.f32 0.0, %v646
      %v648 = vpop.f32.mrb[0].mxu0
      %649 = vmatprep.mubr.f32.mxu0 0.0
      %650 = vmatmul.mubr.f32.gmra.mrb[0].mxu0 %v328
      %v651 = vpop.f32.mrb[0].mxu0
      %v652 = vadd.f32 0.0, %v651
      %v653 = vpop.f32.mrb[0].mxu0
      %654 = vmatprep.mubr.f32.mxu0 0.0
      %655 = vmatmul.mubr.f32.gmra.mrb[0].mxu0 %v330
      %v656 = vpop.f32.mrb[0].mxu0
      %v657 = vadd.f32 0.0, %v656
      %v658 = vpop.f32.mrb[0].mxu0
      %659 = vmatprep.mubr.f32.mxu0 0.0
      %660 = vmatmul.mubr.f32.gmra.mrb[0].mxu0 %v332
      %v661 = vpop.f32.mrb[0].mxu0
      %v662 = vadd.f32 0.0, %v661
      %v663 = vpop.f32.mrb[0].mxu0
      %664 = vmatprep.mubr.f32.mxu0 0.0
      %665 = vmatmul.mubr.f32.gmra.mrb[0].mxu0 %v334
      %v666 = vpop.f32.mrb[0].mxu0
      %v667 = vadd.f32 0.0, %v666
      %v668 = vpop.f32.mrb[0].mxu0
      %669 = vdwg.mxu0
      %670 = vmatprep.subr.mxu0 0.0
      %671 = vmatpush1.msra.mxu0 %v273
      %672 = vmatprep.subr.mxu0 0.0
      %673 = vmatpush1.msra.mxu0 %v274
      %674 = vmatprep.subr.mxu0 0.0
      %675 = vmatpush1.msra.mxu0 0.0
      %676 = vmatprep.subr.mxu0 0.0
      %677 = vmatpush1.msra.mxu0 0.0
      %678 = vmatprep.subr.mxu0 0.0
      %679 = vmatpush1.msra.mxu0 0.0
      %680 = vmatprep.subr.mxu0 0.0
      %681 = vmatpush1.msra.mxu0 0.0
      %682 = vmatprep.subr.mxu0 0.0
      %683 = vmatpush1.msra.mxu0 0.0
      %684 = vmatprep.subr.mxu0 0.0
      %685 = vmatpush1.msra.mxu0 0.0
      %686 = vmatprep.subr.mxu0 0.0
      %687 = vmatpush1.msra.mxu0 0.0
      %688 = vmatprep.subr.mxu0 0.0
      %689 = vmatpush1.msra.mxu0 0.0
      %690 = vmatprep.subr.mxu0 0.0
      %691 = vmatpush1.msra.mxu0 0.0
      %692 = vmatprep.subr.mxu0 0.0
      %693 = vmatpush1.msra.mxu0 0.0
      %694 = vmatprep.subr.mxu0 0.0
      %695 = vmatpush1.msra.mxu0 0.0
      %696 = vmatprep.subr.mxu0 0.0
      %697 = vmatpush1.msra.mxu0 0.0
      %698 = vmatprep.subr.mxu0 0.0
      %699 = vmatpush1.msra.mxu0 0.0
      %700 = vmatprep.subr.mxu0 0.0
      %701 = vmatpush1.msra.mxu0 0.0
      %702 = vmatprep.subr.mxu0 0.0
      %703 = vmatpush1.msra.mxu0 0.0
      %704 = vmatprep.subr.mxu0 0.0
      %705 = vmatpush1.msra.mxu0 0.0
      %706 = vmatprep.subr.mxu0 0.0
      %707 = vmatpush1.msra.mxu0 0.0
      %708 = vmatprep.subr.mxu0 0.0
      %709 = vmatpush1.msra.mxu0 0.0
      %710 = vmatprep.subr.mxu0 0.0
      %711 = vmatpush1.msra.mxu0 0.0
      %712 = vmatprep.subr.mxu0 0.0
      %713 = vmatpush1.msra.mxu0 0.0
      %714 = vmatprep.subr.mxu0 0.0
      %715 = vmatpush1.msra.mxu0 0.0
      %716 = vmatprep.subr.mxu0 0.0
      %717 = vmatpush1.msra.mxu0 0.0
      %718 = vmatprep.subr.mxu0 0.0
      %719 = vmatpush1.msra.mxu0 0.0
      %720 = vmatprep.subr.mxu0 0.0
      %721 = vmatpush1.msra.mxu0 0.0
      %722 = vmatprep.subr.mxu0 0.0
      %723 = vmatpush1.msra.mxu0 0.0
      %724 = vmatprep.subr.mxu0 0.0
      %725 = vmatpush1.msra.mxu0 0.0
      %726 = vmatprep.subr.mxu0 0.0
      %727 = vmatpush1.msra.mxu0 0.0
      %728 = vmatprep.subr.mxu0 0.0
      %729 = vmatpush1.msra.mxu0 0.0
      %730 = vmatprep.subr.mxu0 0.0
      %731 = vmatpush1.msra.mxu0 0.0
      %732 = vmatprep.subr.mxu0 0.0
      %733 = vmatpush1.msra.mxu0 0.0
      %734 = vmatprep.mubr.f32.mxu0 0.0
      %735 = vmatmul.mubr.f32.gmra.mrb[0].mxu0 %v441
      %v736 = vpop.f32.mrb[0].mxu0
      %v737 = vadd.f32 %v632, %v736
      %v738 = vpop.f32.mrb[0].mxu0
      %739 = vmatprep.mubr.f32.mxu0 0.0
      %740 = vmatmul.mubr.f32.gmra.mrb[0].mxu0 %v443
      %v741 = vpop.f32.mrb[0].mxu0
      %v742 = vadd.f32 %v637, %v741
      %v743 = vpop.f32.mrb[0].mxu0
      %744 = vmatprep.mubr.f32.mxu0 0.0
      %745 = vmatmul.mubr.f32.gmra.mrb[0].mxu0 %v445
      %v746 = vpop.f32.mrb[0].mxu0
      %v747 = vadd.f32 %v642, %v746
      %v748 = vpop.f32.mrb[0].mxu0
      %749 = vmatprep.mubr.f32.mxu0 0.0
      %750 = vmatmul.mubr.f32.gmra.mrb[0].mxu0 %v447
      %v751 = vpop.f32.mrb[0].mxu0
      %v752 = vadd.f32 %v647, %v751
      %v753 = vpop.f32.mrb[0].mxu0
      %754 = vmatprep.mubr.f32.mxu0 0.0
      %755 = vmatmul.mubr.f32.gmra.mrb[0].mxu0 %v449
      %v756 = vpop.f32.mrb[0].mxu0
      %v757 = vadd.f32 %v652, %v756
      %v758 = vpop.f32.mrb[0].mxu0
      %759 = vmatprep.mubr.f32.mxu0 0.0
      %760 = vmatmul.mubr.f32.gmra.mrb[0].mxu0 %v451
      %v761 = vpop.f32.mrb[0].mxu0
      %v762 = vadd.f32 %v657, %v761
      %v763 = vpop.f32.mrb[0].mxu0
      %764 = vmatprep.mubr.f32.mxu0 0.0
      %765 = vmatmul.mubr.f32.gmra.mrb[0].mxu0 %v453
      %v766 = vpop.f32.mrb[0].mxu0
      %v767 = vadd.f32 %v662, %v766
      %v768 = vpop.f32.mrb[0].mxu0
      %769 = vmatprep.mubr.f32.mxu0 0.0
      %770 = vmatmul.mubr.f32.gmra.mrb[0].mxu0 %v455
      %v771 = vpop.f32.mrb[0].mxu0
      %v772 = vadd.f32 %v667, %v771
      %v773 = vpop.f32.mrb[0].mxu0
      %774 = vdwg.mxu0
      %s775 = scalar_lea.vmem %s2, 32
      %v776 = vld [vmem:[%s775] sm:$0xff]
      %v777 = vld [vmem:[%s775 + $0x8] sm:$0xff]
      %v779 = vsel %vm319, %v269, 0
      %781 = vmatprep.subr.mxu0 0.0
      %782 = vmatpush1.msra.mxu0 %v776
      %783 = vmatprep.subr.mxu0 0.0
      %784 = vmatpush1.msra.mxu0 %v777
      %785 = vmatprep.subr.mxu0 0.0
      %786 = vmatpush1.msra.mxu0 0.0
      %787 = vmatprep.subr.mxu0 0.0
      %788 = vmatpush1.msra.mxu0 0.0
      %789 = vmatprep.subr.mxu0 0.0
      %790 = vmatpush1.msra.mxu0 0.0
      %791 = vmatprep.subr.mxu0 0.0
      %792 = vmatpush1.msra.mxu0 0.0
      %793 = vmatprep.subr.mxu0 0.0
      %794 = vmatpush1.msra.mxu0 0.0
      %795 = vmatprep.subr.mxu0 0.0
      %796 = vmatpush1.msra.mxu0 0.0
      %797 = vmatprep.subr.mxu0 0.0
      %798 = vmatpush1.msra.mxu0 0.0
      %799 = vmatprep.subr.mxu0 0.0
      %800 = vmatpush1.msra.mxu0 0.0
      %801 = vmatprep.subr.mxu0 0.0
      %802 = vmatpush1.msra.mxu0 0.0
      %803 = vmatprep.subr.mxu0 0.0
      %804 = vmatpush1.msra.mxu0 0.0
      %805 = vmatprep.subr.mxu0 0.0
      %806 = vmatpush1.msra.mxu0 0.0
      %807 = vmatprep.subr.mxu0 0.0
      %808 = vmatpush1.msra.mxu0 0.0
      %809 = vmatprep.subr.mxu0 0.0
      %810 = vmatpush1.msra.mxu0 0.0
      %811 = vmatprep.subr.mxu0 0.0
      %812 = vmatpush1.msra.mxu0 0.0
      %813 = vmatprep.subr.mxu0 0.0
      %814 = vmatpush1.msra.mxu0 0.0
      %815 = vmatprep.subr.mxu0 0.0
      %816 = vmatpush1.msra.mxu0 0.0
      %817 = vmatprep.subr.mxu0 0.0
      %818 = vmatpush1.msra.mxu0 0.0
      %819 = vmatprep.subr.mxu0 0.0
      %820 = vmatpush1.msra.mxu0 0.0
      %821 = vmatprep.subr.mxu0 0.0
      %822 = vmatpush1.msra.mxu0 0.0
      %823 = vmatprep.subr.mxu0 0.0
      %824 = vmatpush1.msra.mxu0 0.0
      %825 = vmatprep.subr.mxu0 0.0
      %826 = vmatpush1.msra.mxu0 0.0
      %827 = vmatprep.subr.mxu0 0.0
      %828 = vmatpush1.msra.mxu0 0.0
      %829 = vmatprep.subr.mxu0 0.0
      %830 = vmatpush1.msra.mxu0 0.0
      %831 = vmatprep.subr.mxu0 0.0
      %832 = vmatpush1.msra.mxu0 0.0
      %833 = vmatprep.subr.mxu0 0.0
      %834 = vmatpush1.msra.mxu0 0.0
      %835 = vmatprep.subr.mxu0 0.0
      %836 = vmatpush1.msra.mxu0 0.0
      %837 = vmatprep.subr.mxu0 0.0
      %838 = vmatpush1.msra.mxu0 0.0
      %839 = vmatprep.subr.mxu0 0.0
      %840 = vmatpush1.msra.mxu0 0.0
      %841 = vmatprep.subr.mxu0 0.0
      %842 = vmatpush1.msra.mxu0 0.0
      %843 = vmatprep.subr.mxu0 0.0
      %844 = vmatpush1.msra.mxu0 0.0
      %845 = vmatprep.mubr.f32.mxu0 0.0
      %846 = vmatmul.mubr.f32.gmra.mrb[0].mxu0 %v443
      %v847 = vpop.f32.mrb[0].mxu0
      %v848 = vadd.f32 0.0, %v847
      %v849 = vpop.f32.mrb[0].mxu0
      %850 = vmatprep.mubr.f32.mxu0 0.0
      %851 = vmatmul.mubr.f32.gmra.mrb[0].mxu0 %v445
      %v852 = vpop.f32.mrb[0].mxu0
      %v853 = vadd.f32 0.0, %v852
      %v854 = vpop.f32.mrb[0].mxu0
      %855 = vmatprep.mubr.f32.mxu0 0.0
      %856 = vmatmul.mubr.f32.gmra.mrb[0].mxu0 %v447
      %v857 = vpop.f32.mrb[0].mxu0
      %v858 = vadd.f32 0.0, %v857
      %v859 = vpop.f32.mrb[0].mxu0
      %860 = vmatprep.mubr.f32.mxu0 0.0
      %861 = vmatmul.mubr.f32.gmra.mrb[0].mxu0 %v449
      %v862 = vpop.f32.mrb[0].mxu0
      %v863 = vadd.f32 0.0, %v862
      %v864 = vpop.f32.mrb[0].mxu0
      %865 = vmatprep.mubr.f32.mxu0 0.0
      %866 = vmatmul.mubr.f32.gmra.mrb[0].mxu0 %v451
      %v867 = vpop.f32.mrb[0].mxu0
      %v868 = vadd.f32 0.0, %v867
      %v869 = vpop.f32.mrb[0].mxu0
      %870 = vmatprep.mubr.f32.mxu0 0.0
      %871 = vmatmul.mubr.f32.gmra.mrb[0].mxu0 %v453
      %v872 = vpop.f32.mrb[0].mxu0
      %v873 = vadd.f32 0.0, %v872
      %v874 = vpop.f32.mrb[0].mxu0
      %875 = vmatprep.mubr.f32.mxu0 0.0
      %876 = vmatmul.mubr.f32.gmra.mrb[0].mxu0 %v455
      %v877 = vpop.f32.mrb[0].mxu0
      %v878 = vadd.f32 0.0, %v877
      %v879 = vpop.f32.mrb[0].mxu0
      %880 = vmatprep.mubr.f32.mxu0 0.0
      %881 = vmatmul.mubr.f32.gmra.mrb[0].mxu0 %v779
      %v882 = vpop.f32.mrb[0].mxu0
      %v883 = vadd.f32 0.0, %v882
      %v884 = vpop.f32.mrb[0].mxu0
      %885 = vdwg.mxu0
      %v886 = vadd.f32 %v524, %v848
      %v887 = vadd.f32 %v529, %v853
      %v888 = vadd.f32 %v534, %v858
      %v889 = vadd.f32 %v539, %v863
      %v890 = vadd.f32 %v544, %v868
      %v891 = vadd.f32 %v549, %v873
      %v892 = vadd.f32 %v554, %v878
      %v893 = vadd.f32 %v559, %v883
      %s894 = scalar_lea.vmem %s3, 32
      %v895 = vld [vmem:[%s894] sm:$0xff]
      %v896 = vld [vmem:[%s894 + $0x8] sm:$0xff]
      %897 = vmatprep.subr.mxu0 0.0
      %898 = vmatpush1.msra.mxu0 %v895
      %899 = vmatprep.subr.mxu0 0.0
      %900 = vmatpush1.msra.mxu0 %v896
      %901 = vmatprep.subr.mxu0 0.0
      %902 = vmatpush1.msra.mxu0 0.0
      %903 = vmatprep.subr.mxu0 0.0
      %904 = vmatpush1.msra.mxu0 0.0
      %905 = vmatprep.subr.mxu0 0.0
      %906 = vmatpush1.msra.mxu0 0.0
      %907 = vmatprep.subr.mxu0 0.0
      %908 = vmatpush1.msra.mxu0 0.0
      %909 = vmatprep.subr.mxu0 0.0
      %910 = vmatpush1.msra.mxu0 0.0
      %911 = vmatprep.subr.mxu0 0.0
      %912 = vmatpush1.msra.mxu0 0.0
      %913 = vmatprep.subr.mxu0 0.0
      %914 = vmatpush1.msra.mxu0 0.0
      %915 = vmatprep.subr.mxu0 0.0
      %916 = vmatpush1.msra.mxu0 0.0
      %917 = vmatprep.subr.mxu0 0.0
      %918 = vmatpush1.msra.mxu0 0.0
      %919 = vmatprep.subr.mxu0 0.0
      %920 = vmatpush1.msra.mxu0 0.0
      %921 = vmatprep.subr.mxu0 0.0
      %922 = vmatpush1.msra.mxu0 0.0
      %923 = vmatprep.subr.mxu0 0.0
      %924 = vmatpush1.msra.mxu0 0.0
      %925 = vmatprep.subr.mxu0 0.0
      %926 = vmatpush1.msra.mxu0 0.0
      %927 = vmatprep.subr.mxu0 0.0
      %928 = vmatpush1.msra.mxu0 0.0
      %929 = vmatprep.subr.mxu0 0.0
      %930 = vmatpush1.msra.mxu0 0.0
      %931 = vmatprep.subr.mxu0 0.0
      %932 = vmatpush1.msra.mxu0 0.0
      %933 = vmatprep.subr.mxu0 0.0
      %934 = vmatpush1.msra.mxu0 0.0
      %935 = vmatprep.subr.mxu0 0.0
      %936 = vmatpush1.msra.mxu0 0.0
      %937 = vmatprep.subr.mxu0 0.0
      %938 = vmatpush1.msra.mxu0 0.0
      %939 = vmatprep.subr.mxu0 0.0
      %940 = vmatpush1.msra.mxu0 0.0
      %941 = vmatprep.subr.mxu0 0.0
      %942 = vmatpush1.msra.mxu0 0.0
      %943 = vmatprep.subr.mxu0 0.0
      %944 = vmatpush1.msra.mxu0 0.0
      %945 = vmatprep.subr.mxu0 0.0
      %946 = vmatpush1.msra.mxu0 0.0
      %947 = vmatprep.subr.mxu0 0.0
      %948 = vmatpush1.msra.mxu0 0.0
      %949 = vmatprep.subr.mxu0 0.0
      %950 = vmatpush1.msra.mxu0 0.0
      %951 = vmatprep.subr.mxu0 0.0
      %952 = vmatpush1.msra.mxu0 0.0
      %953 = vmatprep.subr.mxu0 0.0
      %954 = vmatpush1.msra.mxu0 0.0
      %955 = vmatprep.subr.mxu0 0.0
      %956 = vmatpush1.msra.mxu0 0.0
      %957 = vmatprep.subr.mxu0 0.0
      %958 = vmatpush1.msra.mxu0 0.0
      %959 = vmatprep.subr.mxu0 0.0
      %960 = vmatpush1.msra.mxu0 0.0
      %961 = vmatprep.mubr.f32.mxu0 0.0
      %962 = vmatmul.mubr.f32.gmra.mrb[0].mxu0 %v443
      %v963 = vpop.f32.mrb[0].mxu0
      %v964 = vadd.f32 0.0, %v963
      %v965 = vpop.f32.mrb[0].mxu0
      %966 = vmatprep.mubr.f32.mxu0 0.0
      %967 = vmatmul.mubr.f32.gmra.mrb[0].mxu0 %v445
      %v968 = vpop.f32.mrb[0].mxu0
      %v969 = vadd.f32 0.0, %v968
      %v970 = vpop.f32.mrb[0].mxu0
      %971 = vmatprep.mubr.f32.mxu0 0.0
      %972 = vmatmul.mubr.f32.gmra.mrb[0].mxu0 %v447
      %v973 = vpop.f32.mrb[0].mxu0
      %v974 = vadd.f32 0.0, %v973
      %v975 = vpop.f32.mrb[0].mxu0
      %976 = vmatprep.mubr.f32.mxu0 0.0
      %977 = vmatmul.mubr.f32.gmra.mrb[0].mxu0 %v449
      %v978 = vpop.f32.mrb[0].mxu0
      %v979 = vadd.f32 0.0, %v978
      %v980 = vpop.f32.mrb[0].mxu0
      %981 = vmatprep.mubr.f32.mxu0 0.0
      %982 = vmatmul.mubr.f32.gmra.mrb[0].mxu0 %v451
      %v983 = vpop.f32.mrb[0].mxu0
      %v984 = vadd.f32 0.0, %v983
      %v985 = vpop.f32.mrb[0].mxu0
      %986 = vmatprep.mubr.f32.mxu0 0.0
      %987 = vmatmul.mubr.f32.gmra.mrb[0].mxu0 %v453
      %v988 = vpop.f32.mrb[0].mxu0
      %v989 = vadd.f32 0.0, %v988
      %v990 = vpop.f32.mrb[0].mxu0
      %991 = vmatprep.mubr.f32.mxu0 0.0
      %992 = vmatmul.mubr.f32.gmra.mrb[0].mxu0 %v455
      %v993 = vpop.f32.mrb[0].mxu0
      %v994 = vadd.f32 0.0, %v993
      %v995 = vpop.f32.mrb[0].mxu0
      %996 = vmatprep.mubr.f32.mxu0 0.0
      %997 = vmatmul.mubr.f32.gmra.mrb[0].mxu0 %v779
      %v998 = vpop.f32.mrb[0].mxu0
      %v999 = vadd.f32 0.0, %v998
      %v1000 = vpop.f32.mrb[0].mxu0
      %1001 = vdwg.mxu0
      %v1002 = vadd.f32 %v737, %v964
      %v1003 = vadd.f32 %v742, %v969
      %v1004 = vadd.f32 %v747, %v974
      %v1005 = vadd.f32 %v752, %v979
      %v1006 = vadd.f32 %v757, %v984
      %v1007 = vadd.f32 %v762, %v989
      %v1008 = vadd.f32 %v767, %v994
      %v1009 = vadd.f32 %v772, %v999
      %v1011 = vrot.slane %v269, 1
      %v1012 = vrot.slane %v270, 1
      %v1013 = vsel %vm291, %v1011, %v1012
      %s1014 = scalar_lea.vmem %s2, 48
      %v1015 = vld [vmem:[%s1014] sm:$0xff]
      %v1016 = vld [vmem:[%s1014 + $0x8] sm:$0xff]
      %v1017 = vsel %vm319, %v1013, 0
      %1019 = vmatprep.subr.mxu0 0.0
      %1020 = vmatpush1.msra.mxu0 %v1015
      %1021 = vmatprep.subr.mxu0 0.0
      %1022 = vmatpush1.msra.mxu0 %v1016
      %1023 = vmatprep.subr.mxu0 0.0
      %1024 = vmatpush1.msra.mxu0 0.0
      %1025 = vmatprep.subr.mxu0 0.0
      %1026 = vmatpush1.msra.mxu0 0.0
      %1027 = vmatprep.subr.mxu0 0.0
      %1028 = vmatpush1.msra.mxu0 0.0
      %1029 = vmatprep.subr.mxu0 0.0
      %1030 = vmatpush1.msra.mxu0 0.0
      %1031 = vmatprep.subr.mxu0 0.0
      %1032 = vmatpush1.msra.mxu0 0.0
      %1033 = vmatprep.subr.mxu0 0.0
      %1034 = vmatpush1.msra.mxu0 0.0
      %1035 = vmatprep.subr.mxu0 0.0
      %1036 = vmatpush1.msra.mxu0 0.0
      %1037 = vmatprep.subr.mxu0 0.0
      %1038 = vmatpush1.msra.mxu0 0.0
      %1039 = vmatprep.subr.mxu0 0.0
      %1040 = vmatpush1.msra.mxu0 0.0
      %1041 = vmatprep.subr.mxu0 0.0
      %1042 = vmatpush1.msra.mxu0 0.0
      %1043 = vmatprep.subr.mxu0 0.0
      %1044 = vmatpush1.msra.mxu0 0.0
      %1045 = vmatprep.subr.mxu0 0.0
      %1046 = vmatpush1.msra.mxu0 0.0
      %1047 = vmatprep.subr.mxu0 0.0
      %1048 = vmatpush1.msra.mxu0 0.0
      %1049 = vmatprep.subr.mxu0 0.0
      %1050 = vmatpush1.msra.mxu0 0.0
      %1051 = vmatprep.subr.mxu0 0.0
      %1052 = vmatpush1.msra.mxu0 0.0
      %1053 = vmatprep.subr.mxu0 0.0
      %1054 = vmatpush1.msra.mxu0 0.0
      %1055 = vmatprep.subr.mxu0 0.0
      %1056 = vmatpush1.msra.mxu0 0.0
      %1057 = vmatprep.subr.mxu0 0.0
      %1058 = vmatpush1.msra.mxu0 0.0
      %1059 = vmatprep.subr.mxu0 0.0
      %1060 = vmatpush1.msra.mxu0 0.0
      %1061 = vmatprep.subr.mxu0 0.0
      %1062 = vmatpush1.msra.mxu0 0.0
      %1063 = vmatprep.subr.mxu0 0.0
      %1064 = vmatpush1.msra.mxu0 0.0
      %1065 = vmatprep.subr.mxu0 0.0
      %1066 = vmatpush1.msra.mxu0 0.0
      %1067 = vmatprep.subr.mxu0 0.0
      %1068 = vmatpush1.msra.mxu0 0.0
      %1069 = vmatprep.subr.mxu0 0.0
      %1070 = vmatpush1.msra.mxu0 0.0
      %1071 = vmatprep.subr.mxu0 0.0
      %1072 = vmatpush1.msra.mxu0 0.0
      %1073 = vmatprep.subr.mxu0 0.0
      %1074 = vmatpush1.msra.mxu0 0.0
      %1075 = vmatprep.subr.mxu0 0.0
      %1076 = vmatpush1.msra.mxu0 0.0
      %1077 = vmatprep.subr.mxu0 0.0
      %1078 = vmatpush1.msra.mxu0 0.0
      %1079 = vmatprep.subr.mxu0 0.0
      %1080 = vmatpush1.msra.mxu0 0.0
      %1081 = vmatprep.subr.mxu0 0.0
      %1082 = vmatpush1.msra.mxu0 0.0
      %1083 = vmatprep.mubr.f32.mxu0 0.0
      %1084 = vmatmul.mubr.f32.gmra.mrb[0].mxu0 %v322
      %v1085 = vpop.f32.mrb[0].mxu0
      %v1086 = vadd.f32 0.0, %v1085
      %v1087 = vpop.f32.mrb[0].mxu0
      %1088 = vmatprep.mubr.f32.mxu0 0.0
      %1089 = vmatmul.mubr.f32.gmra.mrb[0].mxu0 %v324
      %v1090 = vpop.f32.mrb[0].mxu0
      %v1091 = vadd.f32 0.0, %v1090
      %v1092 = vpop.f32.mrb[0].mxu0
      %1093 = vmatprep.mubr.f32.mxu0 0.0
      %1094 = vmatmul.mubr.f32.gmra.mrb[0].mxu0 %v326
      %v1095 = vpop.f32.mrb[0].mxu0
      %v1096 = vadd.f32 0.0, %v1095
      %v1097 = vpop.f32.mrb[0].mxu0
      %1098 = vmatprep.mubr.f32.mxu0 0.0
      %1099 = vmatmul.mubr.f32.gmra.mrb[0].mxu0 %v328
      %v1100 = vpop.f32.mrb[0].mxu0
      %v1101 = vadd.f32 0.0, %v1100
      %v1102 = vpop.f32.mrb[0].mxu0
      %1103 = vmatprep.mubr.f32.mxu0 0.0
      %1104 = vmatmul.mubr.f32.gmra.mrb[0].mxu0 %v330
      %v1105 = vpop.f32.mrb[0].mxu0
      %v1106 = vadd.f32 0.0, %v1105
      %v1107 = vpop.f32.mrb[0].mxu0
      %1108 = vmatprep.mubr.f32.mxu0 0.0
      %1109 = vmatmul.mubr.f32.gmra.mrb[0].mxu0 %v332
      %v1110 = vpop.f32.mrb[0].mxu0
      %v1111 = vadd.f32 0.0, %v1110
      %v1112 = vpop.f32.mrb[0].mxu0
      %1113 = vmatprep.mubr.f32.mxu0 0.0
      %1114 = vmatmul.mubr.f32.gmra.mrb[0].mxu0 %v334
      %v1115 = vpop.f32.mrb[0].mxu0
      %v1116 = vadd.f32 0.0, %v1115
      %v1117 = vpop.f32.mrb[0].mxu0
      %1118 = vmatprep.mubr.f32.mxu0 0.0
      %1119 = vmatmul.mubr.f32.gmra.mrb[0].mxu0 %v1017
      %v1120 = vpop.f32.mrb[0].mxu0
      %v1121 = vadd.f32 0.0, %v1120
      %v1122 = vpop.f32.mrb[0].mxu0
      %1123 = vdwg.mxu0
      %v1124 = vadd.f32 %v886, %v1086
      %v1125 = vadd.f32 %v887, %v1091
      %v1126 = vadd.f32 %v888, %v1096
      %v1127 = vadd.f32 %v889, %v1101
      %v1128 = vadd.f32 %v890, %v1106
      %v1129 = vadd.f32 %v891, %v1111
      %v1130 = vadd.f32 %v892, %v1116
      %v1131 = vadd.f32 %v893, %v1121
      %s1132 = scalar_lea.vmem %s3, 48
      %v1133 = vld [vmem:[%s1132] sm:$0xff]
      %v1134 = vld [vmem:[%s1132 + $0x8] sm:$0xff]
      %1135 = vmatprep.subr.mxu0 0.0
      %1136 = vmatpush1.msra.mxu0 %v1133
      %1137 = vmatprep.subr.mxu0 0.0
      %1138 = vmatpush1.msra.mxu0 %v1134
      %1139 = vmatprep.subr.mxu0 0.0
      %1140 = vmatpush1.msra.mxu0 0.0
      %1141 = vmatprep.subr.mxu0 0.0
      %1142 = vmatpush1.msra.mxu0 0.0
      %1143 = vmatprep.subr.mxu0 0.0
      %1144 = vmatpush1.msra.mxu0 0.0
      %1145 = vmatprep.subr.mxu0 0.0
      %1146 = vmatpush1.msra.mxu0 0.0
      %1147 = vmatprep.subr.mxu0 0.0
      %1148 = vmatpush1.msra.mxu0 0.0
      %1149 = vmatprep.subr.mxu0 0.0
      %1150 = vmatpush1.msra.mxu0 0.0
      %1151 = vmatprep.subr.mxu0 0.0
      %1152 = vmatpush1.msra.mxu0 0.0
      %1153 = vmatprep.subr.mxu0 0.0
      %1154 = vmatpush1.msra.mxu0 0.0
      %1155 = vmatprep.subr.mxu0 0.0
      %1156 = vmatpush1.msra.mxu0 0.0
      %1157 = vmatprep.subr.mxu0 0.0
      %1158 = vmatpush1.msra.mxu0 0.0
      %1159 = vmatprep.subr.mxu0 0.0
      %1160 = vmatpush1.msra.mxu0 0.0
      %1161 = vmatprep.subr.mxu0 0.0
      %1162 = vmatpush1.msra.mxu0 0.0
      %1163 = vmatprep.subr.mxu0 0.0
      %1164 = vmatpush1.msra.mxu0 0.0
      %1165 = vmatprep.subr.mxu0 0.0
      %1166 = vmatpush1.msra.mxu0 0.0
      %1167 = vmatprep.subr.mxu0 0.0
      %1168 = vmatpush1.msra.mxu0 0.0
      %1169 = vmatprep.subr.mxu0 0.0
      %1170 = vmatpush1.msra.mxu0 0.0
      %1171 = vmatprep.subr.mxu0 0.0
      %1172 = vmatpush1.msra.mxu0 0.0
      %1173 = vmatprep.subr.mxu0 0.0
      %1174 = vmatpush1.msra.mxu0 0.0
      %1175 = vmatprep.subr.mxu0 0.0
      %1176 = vmatpush1.msra.mxu0 0.0
      %1177 = vmatprep.subr.mxu0 0.0
      %1178 = vmatpush1.msra.mxu0 0.0
      %1179 = vmatprep.subr.mxu0 0.0
      %1180 = vmatpush1.msra.mxu0 0.0
      %1181 = vmatprep.subr.mxu0 0.0
      %1182 = vmatpush1.msra.mxu0 0.0
      %1183 = vmatprep.subr.mxu0 0.0
      %1184 = vmatpush1.msra.mxu0 0.0
      %1185 = vmatprep.subr.mxu0 0.0
      %1186 = vmatpush1.msra.mxu0 0.0
      %1187 = vmatprep.subr.mxu0 0.0
      %1188 = vmatpush1.msra.mxu0 0.0
      %1189 = vmatprep.subr.mxu0 0.0
      %1190 = vmatpush1.msra.mxu0 0.0
      %1191 = vmatprep.subr.mxu0 0.0
      %1192 = vmatpush1.msra.mxu0 0.0
      %1193 = vmatprep.subr.mxu0 0.0
      %1194 = vmatpush1.msra.mxu0 0.0
      %1195 = vmatprep.subr.mxu0 0.0
      %1196 = vmatpush1.msra.mxu0 0.0
      %1197 = vmatprep.subr.mxu0 0.0
      %1198 = vmatpush1.msra.mxu0 0.0
      %1199 = vmatprep.mubr.f32.mxu0 0.0
      %1200 = vmatmul.mubr.f32.gmra.mrb[0].mxu0 %v322
      %v1201 = vpop.f32.mrb[0].mxu0
      %v1202 = vadd.f32 0.0, %v1201
      %v1203 = vpop.f32.mrb[0].mxu0
      %1204 = vmatprep.mubr.f32.mxu0 0.0
      %1205 = vmatmul.mubr.f32.gmra.mrb[0].mxu0 %v324
      %v1206 = vpop.f32.mrb[0].mxu0
      %v1207 = vadd.f32 0.0, %v1206
      %v1208 = vpop.f32.mrb[0].mxu0
      %1209 = vmatprep.mubr.f32.mxu0 0.0
      %1210 = vmatmul.mubr.f32.gmra.mrb[0].mxu0 %v326
      %v1211 = vpop.f32.mrb[0].mxu0
      %v1212 = vadd.f32 0.0, %v1211
      %v1213 = vpop.f32.mrb[0].mxu0
      %1214 = vmatprep.mubr.f32.mxu0 0.0
      %1215 = vmatmul.mubr.f32.gmra.mrb[0].mxu0 %v328
      %v1216 = vpop.f32.mrb[0].mxu0
      %v1217 = vadd.f32 0.0, %v1216
      %v1218 = vpop.f32.mrb[0].mxu0
      %1219 = vmatprep.mubr.f32.mxu0 0.0
      %1220 = vmatmul.mubr.f32.gmra.mrb[0].mxu0 %v330
      %v1221 = vpop.f32.mrb[0].mxu0
      %v1222 = vadd.f32 0.0, %v1221
      %v1223 = vpop.f32.mrb[0].mxu0
      %1224 = vmatprep.mubr.f32.mxu0 0.0
      %1225 = vmatmul.mubr.f32.gmra.mrb[0].mxu0 %v332
      %v1226 = vpop.f32.mrb[0].mxu0
      %v1227 = vadd.f32 0.0, %v1226
      %v1228 = vpop.f32.mrb[0].mxu0
      %1229 = vmatprep.mubr.f32.mxu0 0.0
      %1230 = vmatmul.mubr.f32.gmra.mrb[0].mxu0 %v334
      %v1231 = vpop.f32.mrb[0].mxu0
      %v1232 = vadd.f32 0.0, %v1231
      %v1233 = vpop.f32.mrb[0].mxu0
      %1234 = vmatprep.mubr.f32.mxu0 0.0
      %1235 = vmatmul.mubr.f32.gmra.mrb[0].mxu0 %v1017
      %v1236 = vpop.f32.mrb[0].mxu0
      %v1237 = vadd.f32 0.0, %v1236
      %v1238 = vpop.f32.mrb[0].mxu0
      %1239 = vdwg.mxu0
      %v1240 = vadd.f32 %v1002, %v1202
      %v1241 = vadd.f32 %v1003, %v1207
      %v1242 = vadd.f32 %v1004, %v1212
      %v1243 = vadd.f32 %v1005, %v1217
      %v1244 = vadd.f32 %v1006, %v1222
      %v1245 = vadd.f32 %v1007, %v1227
      %v1246 = vadd.f32 %v1008, %v1232
      %v1247 = vadd.f32 %v1009, %v1237
      %vm1248 = vcmp.gt.f32.partialorder %v1124, 0.0
      %vm1249 = vcmp.gt.f32.partialorder %v1125, 0.0
      %vm1250 = vcmp.gt.f32.partialorder %v1126, 0.0
      %vm1251 = vcmp.gt.f32.partialorder %v1127, 0.0
      %vm1252 = vcmp.gt.f32.partialorder %v1128, 0.0
      %vm1253 = vcmp.gt.f32.partialorder %v1129, 0.0
      %vm1254 = vcmp.gt.f32.partialorder %v1130, 0.0
      %vm1255 = vcmp.gt.f32.partialorder %v1131, 0.0
      %v1256 = vmul.f32 %v1124, 0.2
      %v1257 = vmul.f32 %v1125, 0.2
      %v1258 = vmul.f32 %v1126, 0.2
      %v1259 = vmul.f32 %v1127, 0.2
      %v1260 = vmul.f32 %v1128, 0.2
      %v1261 = vmul.f32 %v1129, 0.2
      %v1262 = vmul.f32 %v1130, 0.2
      %v1263 = vmul.f32 %v1131, 0.2
      %v1264 = vsel %vm1248, %v1124, %v1256
      %v1265 = vsel %vm1249, %v1125, %v1257
      %v1266 = vsel %vm1250, %v1126, %v1258
      %v1267 = vsel %vm1251, %v1127, %v1259
      %v1268 = vsel %vm1252, %v1128, %v1260
      %v1269 = vsel %vm1253, %v1129, %v1261
      %v1270 = vsel %vm1254, %v1130, %v1262
      %v1271 = vsel %vm1255, %v1131, %v1263
      %1272 = vst [vmem:[#allocation2] sm:$0xff] 0.0
      %1273 = vst [vmem:[#allocation2 + $0x8] sm:$0x3] 0.0
      %1274 = vst [vmem:[#allocation2 + $0x10] sm:$0xff] 0.0
      %1275 = vst [vmem:[#allocation2 + $0x18] sm:$0x3] 0.0
      %1276 = vst [vmem:[#allocation2 + $0x20] sm:$0xff] 0.0
      %1277 = vst [vmem:[#allocation2 + $0x28] sm:$0x3] 0.0
      %1278 = vst [vmem:[#allocation2 + $0x30] sm:$0xff] 0.0
      %1279 = vst [vmem:[#allocation2 + $0x38] sm:$0x3] 0.0
      %1280 = vst [vmem:[#allocation2 + $0x40] sm:$0xff] 0.0
      %1281 = vst [vmem:[#allocation2 + $0x48] sm:$0x3] 0.0
      %1282 = vst [vmem:[#allocation2 + $0x50] sm:$0xff] 0.0
      %1283 = vst [vmem:[#allocation2 + $0x58] sm:$0x3] 0.0
      %1284 = vst [vmem:[#allocation2 + $0x60] sm:$0xff] 0.0
      %1285 = vst [vmem:[#allocation2 + $0x68] sm:$0x3] 0.0
      %1286 = vst [vmem:[#allocation2 + $0x70] sm:$0xff] 0.0
      %1287 = vst [vmem:[#allocation2 + $0x78] sm:$0x3] 0.0
      %1288 = vst [vmem:[#allocation2 + $0x80] sm:$0xff] 0.0
      %1289 = vst [vmem:[#allocation2 + $0x88] sm:$0x3] 0.0
      %1290 = vst [vmem:[#allocation2 + $0x90] sm:$0xff] 0.0
      %1291 = vst [vmem:[#allocation2 + $0x98] sm:$0x3] 0.0
      %s1292 = scalar_lea.vmem [#allocation2], 16
      %1293 = vst [vmem:[%s1292 + $0x1] sm:$0xff] %v1264
      %1294 = vst [vmem:[%s1292 + $0x11] sm:$0xff] %v1265
      %1295 = vst [vmem:[%s1292 + $0x21] sm:$0xff] %v1266
      %1296 = vst [vmem:[%s1292 + $0x31] sm:$0xff] %v1267
      %1297 = vst [vmem:[%s1292 + $0x41] sm:$0xff] %v1268
      %1298 = vst [vmem:[%s1292 + $0x51] sm:$0xff] %v1269
      %1299 = vst [vmem:[%s1292 + $0x61] sm:$0xff] %v1270
      %1300 = vst [vmem:[%s1292 + $0x71] sm:$0xff] %v1271
      %v1301 = vld [vmem:[#allocation2] sm:$0xff]
      %v1302 = vld [vmem:[#allocation2 + $0x8] sm:$0x3]
      %v1303 = vld [vmem:[#allocation2 + $0x10] sm:$0xff]
      %v1304 = vld [vmem:[#allocation2 + $0x18] sm:$0x3]
      %v1305 = vld [vmem:[#allocation2 + $0x20] sm:$0xff]
      %v1306 = vld [vmem:[#allocation2 + $0x28] sm:$0x3]
      %v1307 = vld [vmem:[#allocation2 + $0x30] sm:$0xff]
      %v1308 = vld [vmem:[#allocation2 + $0x38] sm:$0x3]
      %v1309 = vld [vmem:[#allocation2 + $0x40] sm:$0xff]
      %v1310 = vld [vmem:[#allocation2 + $0x48] sm:$0x3]
      %v1311 = vld [vmem:[#allocation2 + $0x50] sm:$0xff]
      %v1312 = vld [vmem:[#allocation2 + $0x58] sm:$0x3]
      %v1313 = vld [vmem:[#allocation2 + $0x60] sm:$0xff]
      %v1314 = vld [vmem:[#allocation2 + $0x68] sm:$0x3]
      %v1315 = vld [vmem:[#allocation2 + $0x70] sm:$0xff]
      %v1316 = vld [vmem:[#allocation2 + $0x78] sm:$0x3]
      %v1317 = vld [vmem:[#allocation2 + $0x80] sm:$0xff]
      %v1318 = vld [vmem:[#allocation2 + $0x88] sm:$0x3]
      %v1319 = vld [vmem:[#allocation2 + $0x90] sm:$0xff]
      %v1320 = vld [vmem:[#allocation2 + $0x98] sm:$0x3]
      %v1321 = vld [vmem:[%s4] sm:$0xff]
      %v1322 = vld [vmem:[%s4 + $0x8] sm:$0xff]
      %v1323 = vld [vmem:[%s4 + $0x10] sm:$0xff]
      %v1324 = vld [vmem:[%s4 + $0x18] sm:$0xff]
      %v1325 = vld [vmem:[%s4 + $0x20] sm:$0xff]
      %v1326 = vld [vmem:[%s4 + $0x28] sm:$0xff]
      %v1327 = vld [vmem:[%s4 + $0x30] sm:$0xff]
      %v1328 = vld [vmem:[%s4 + $0x38] sm:$0xff]
      %v1329 = vld [vmem:[%s4 + $0x40] sm:$0xff]
      %v1330 = vld [vmem:[%s4 + $0x48] sm:$0xff]
      %v1331 = vld [vmem:[%s4 + $0x50] sm:$0xff]
      %v1332 = vld [vmem:[%s4 + $0x58] sm:$0xff]
      %v1333 = vld [vmem:[%s4 + $0x60] sm:$0xff]
      %v1334 = vld [vmem:[%s4 + $0x68] sm:$0xff]
      %v1335 = vld [vmem:[%s4 + $0x70] sm:$0xff]
      %v1336 = vld [vmem:[%s4 + $0x78] sm:$0xff]
      %v1353 = vrot.slane %v1301, 1
      %v1354 = vrot.slane %v1302, 1
      %v1355 = vsel %vm291, %v1353, %v1354
      %v1356 = vrot.slane %v1303, 1
      %v1357 = vrot.slane %v1304, 1
      %v1358 = vsel %vm291, %v1356, %v1357
      %v1359 = vrot.slane %v1305, 1
      %v1360 = vrot.slane %v1306, 1
      %v1361 = vsel %vm291, %v1359, %v1360
      %v1362 = vrot.slane %v1307, 1
      %v1363 = vrot.slane %v1308, 1
      %v1364 = vsel %vm291, %v1362, %v1363
      %v1365 = vrot.slane %v1309, 1
      %v1366 = vrot.slane %v1310, 1
      %v1367 = vsel %vm291, %v1365, %v1366
      %v1368 = vrot.slane %v1311, 1
      %v1369 = vrot.slane %v1312, 1
      %v1370 = vsel %vm291, %v1368, %v1369
      %v1371 = vrot.slane %v1313, 1
      %v1372 = vrot.slane %v1314, 1
      %v1373 = vsel %vm291, %v1371, %v1372
      %v1374 = vrot.slane %v1315, 1
      %v1375 = vrot.slane %v1316, 1
      %v1376 = vsel %vm291, %v1374, %v1375
      %s1385 = scalar_lea.vmem %s4, 128
      %v1386 = vld [vmem:[%s1385] sm:$0xff]
      %v1387 = vld [vmem:[%s1385 + $0x8] sm:$0xff]
      %v1388 = vld [vmem:[%s1385 + $0x10] sm:$0xff]
      %v1389 = vld [vmem:[%s1385 + $0x18] sm:$0xff]
      %v1390 = vld [vmem:[%s1385 + $0x20] sm:$0xff]
      %v1391 = vld [vmem:[%s1385 + $0x28] sm:$0xff]
      %v1392 = vld [vmem:[%s1385 + $0x30] sm:$0xff]
      %v1393 = vld [vmem:[%s1385 + $0x38] sm:$0xff]
      %v1394 = vld [vmem:[%s1385 + $0x40] sm:$0xff]
      %v1395 = vld [vmem:[%s1385 + $0x48] sm:$0xff]
      %v1396 = vld [vmem:[%s1385 + $0x50] sm:$0xff]
      %v1397 = vld [vmem:[%s1385 + $0x58] sm:$0xff]
      %v1398 = vld [vmem:[%s1385 + $0x60] sm:$0xff]
      %v1399 = vld [vmem:[%s1385 + $0x68] sm:$0xff]
      %v1400 = vld [vmem:[%s1385 + $0x70] sm:$0xff]
      %v1401 = vld [vmem:[%s1385 + $0x78] sm:$0xff]
      %1402 = vmatprep.subr.mxu0 0.0
      %1403 = vmatpush1.msra.mxu0 %v1386
      %1404 = vmatprep.subr.mxu0 0.0
      %1405 = vmatpush1.msra.mxu0 %v1387
      %1406 = vmatprep.subr.mxu0 0.0
      %1407 = vmatpush1.msra.mxu0 %v1388
      %1408 = vmatprep.subr.mxu0 0.0
      %1409 = vmatpush1.msra.mxu0 %v1389
      %1410 = vmatprep.subr.mxu0 0.0
      %1411 = vmatpush1.msra.mxu0 %v1390
      %1412 = vmatprep.subr.mxu0 0.0
      %1413 = vmatpush1.msra.mxu0 %v1391
      %1414 = vmatprep.subr.mxu0 0.0
      %1415 = vmatpush1.msra.mxu0 %v1392
      %1416 = vmatprep.subr.mxu0 0.0
      %1417 = vmatpush1.msra.mxu0 %v1393
      %1418 = vmatprep.subr.mxu0 0.0
      %1419 = vmatpush1.msra.mxu0 %v1394
      %1420 = vmatprep.subr.mxu0 0.0
      %1421 = vmatpush1.msra.mxu0 %v1395
      %1422 = vmatprep.subr.mxu0 0.0
      %1423 = vmatpush1.msra.mxu0 %v1396
      %1424 = vmatprep.subr.mxu0 0.0
      %1425 = vmatpush1.msra.mxu0 %v1397
      %1426 = vmatprep.subr.mxu0 0.0
      %1427 = vmatpush1.msra.mxu0 %v1398
      %1428 = vmatprep.subr.mxu0 0.0
      %1429 = vmatpush1.msra.mxu0 %v1399
      %1430 = vmatprep.subr.mxu0 0.0
      %1431 = vmatpush1.msra.mxu0 %v1400
      %1432 = vmatprep.subr.mxu0 0.0
      %1433 = vmatpush1.msra.mxu0 %v1401
      %1434 = vmatprep.subr.mxu0 0.0
      %1435 = vmatpush1.msra.mxu0 0.0
      %1436 = vmatprep.subr.mxu0 0.0
      %1437 = vmatpush1.msra.mxu0 0.0
      %1438 = vmatprep.subr.mxu0 0.0
      %1439 = vmatpush1.msra.mxu0 0.0
      %1440 = vmatprep.subr.mxu0 0.0
      %1441 = vmatpush1.msra.mxu0 0.0
      %1442 = vmatprep.subr.mxu0 0.0
      %1443 = vmatpush1.msra.mxu0 0.0
      %1444 = vmatprep.subr.mxu0 0.0
      %1445 = vmatpush1.msra.mxu0 0.0
      %1446 = vmatprep.subr.mxu0 0.0
      %1447 = vmatpush1.msra.mxu0 0.0
      %1448 = vmatprep.subr.mxu0 0.0
      %1449 = vmatpush1.msra.mxu0 0.0
      %1450 = vmatprep.subr.mxu0 0.0
      %1451 = vmatpush1.msra.mxu0 0.0
      %1452 = vmatprep.subr.mxu0 0.0
      %1453 = vmatpush1.msra.mxu0 0.0
      %1454 = vmatprep.subr.mxu0 0.0
      %1455 = vmatpush1.msra.mxu0 0.0
      %1456 = vmatprep.subr.mxu0 0.0
      %1457 = vmatpush1.msra.mxu0 0.0
      %1458 = vmatprep.subr.mxu0 0.0
      %1459 = vmatpush1.msra.mxu0 0.0
      %1460 = vmatprep.subr.mxu0 0.0
      %1461 = vmatpush1.msra.mxu0 0.0
      %1462 = vmatprep.subr.mxu0 0.0
      %1463 = vmatpush1.msra.mxu0 0.0
      %1464 = vmatprep.subr.mxu0 0.0
      %1465 = vmatpush1.msra.mxu0 0.0
      %1466 = vmatprep.mubr.f32.mxu0 0.0
      %1467 = vmatmul.mubr.f32.gmra.mrb[0].mxu0 %v1355
      %v1468 = vpop.f32.mrb[0].mxu0
      %v1469 = vadd.f32 0.0, %v1468
      %v1470 = vpop.f32.mrb[0].mxu0
      %1471 = vmatprep.mubr.f32.mxu0 0.0
      %1472 = vmatmul.mubr.f32.gmra.mrb[0].mxu0 %v1358
      %v1473 = vpop.f32.mrb[0].mxu0
      %v1474 = vadd.f32 0.0, %v1473
      %v1475 = vpop.f32.mrb[0].mxu0
      %1476 = vmatprep.mubr.f32.mxu0 0.0
      %1477 = vmatmul.mubr.f32.gmra.mrb[0].mxu0 %v1361
      %v1478 = vpop.f32.mrb[0].mxu0
      %v1479 = vadd.f32 0.0, %v1478
      %v1480 = vpop.f32.mrb[0].mxu0
      %1481 = vmatprep.mubr.f32.mxu0 0.0
      %1482 = vmatmul.mubr.f32.gmra.mrb[0].mxu0 %v1364
      %v1483 = vpop.f32.mrb[0].mxu0
      %v1484 = vadd.f32 0.0, %v1483
      %v1485 = vpop.f32.mrb[0].mxu0
      %1486 = vmatprep.mubr.f32.mxu0 0.0
      %1487 = vmatmul.mubr.f32.gmra.mrb[0].mxu0 %v1367
      %v1488 = vpop.f32.mrb[0].mxu0
      %v1489 = vadd.f32 0.0, %v1488
      %v1490 = vpop.f32.mrb[0].mxu0
      %1491 = vmatprep.mubr.f32.mxu0 0.0
      %1492 = vmatmul.mubr.f32.gmra.mrb[0].mxu0 %v1370
      %v1493 = vpop.f32.mrb[0].mxu0
      %v1494 = vadd.f32 0.0, %v1493
      %v1495 = vpop.f32.mrb[0].mxu0
      %1496 = vmatprep.mubr.f32.mxu0 0.0
      %1497 = vmatmul.mubr.f32.gmra.mrb[0].mxu0 %v1373
      %v1498 = vpop.f32.mrb[0].mxu0
      %v1499 = vadd.f32 0.0, %v1498
      %v1500 = vpop.f32.mrb[0].mxu0
      %1501 = vmatprep.mubr.f32.mxu0 0.0
      %1502 = vmatmul.mubr.f32.gmra.mrb[0].mxu0 %v1376
      %v1503 = vpop.f32.mrb[0].mxu0
      %v1504 = vadd.f32 0.0, %v1503
      %v1505 = vpop.f32.mrb[0].mxu0
      %1506 = vdwg.mxu0
      %1507 = vmatprep.subr.mxu0 0.0
      %1508 = vmatpush1.msra.mxu0 %v1321
      %1509 = vmatprep.subr.mxu0 0.0
      %1510 = vmatpush1.msra.mxu0 %v1322
      %1511 = vmatprep.subr.mxu0 0.0
      %1512 = vmatpush1.msra.mxu0 %v1323
      %1513 = vmatprep.subr.mxu0 0.0
      %1514 = vmatpush1.msra.mxu0 %v1324
      %1515 = vmatprep.subr.mxu0 0.0
      %1516 = vmatpush1.msra.mxu0 %v1325
      %1517 = vmatprep.subr.mxu0 0.0
      %1518 = vmatpush1.msra.mxu0 %v1326
      %1519 = vmatprep.subr.mxu0 0.0
      %1520 = vmatpush1.msra.mxu0 %v1327
      %1521 = vmatprep.subr.mxu0 0.0
      %1522 = vmatpush1.msra.mxu0 %v1328
      %1523 = vmatprep.subr.mxu0 0.0
      %1524 = vmatpush1.msra.mxu0 %v1329
      %1525 = vmatprep.subr.mxu0 0.0
      %1526 = vmatpush1.msra.mxu0 %v1330
      %1527 = vmatprep.subr.mxu0 0.0
      %1528 = vmatpush1.msra.mxu0 %v1331
      %1529 = vmatprep.subr.mxu0 0.0
      %1530 = vmatpush1.msra.mxu0 %v1332
      %1531 = vmatprep.subr.mxu0 0.0
      %1532 = vmatpush1.msra.mxu0 %v1333
      %1533 = vmatprep.subr.mxu0 0.0
      %1534 = vmatpush1.msra.mxu0 %v1334
      %1535 = vmatprep.subr.mxu0 0.0
      %1536 = vmatpush1.msra.mxu0 %v1335
      %1537 = vmatprep.subr.mxu0 0.0
      %1538 = vmatpush1.msra.mxu0 %v1336
      %1539 = vmatprep.subr.mxu0 0.0
      %1540 = vmatpush1.msra.mxu0 0.0
      %1541 = vmatprep.subr.mxu0 0.0
      %1542 = vmatpush1.msra.mxu0 0.0
      %1543 = vmatprep.subr.mxu0 0.0
      %1544 = vmatpush1.msra.mxu0 0.0
      %1545 = vmatprep.subr.mxu0 0.0
      %1546 = vmatpush1.msra.mxu0 0.0
      %1547 = vmatprep.subr.mxu0 0.0
      %1548 = vmatpush1.msra.mxu0 0.0
      %1549 = vmatprep.subr.mxu0 0.0
      %1550 = vmatpush1.msra.mxu0 0.0
      %1551 = vmatprep.subr.mxu0 0.0
      %1552 = vmatpush1.msra.mxu0 0.0
      %1553 = vmatprep.subr.mxu0 0.0
      %1554 = vmatpush1.msra.mxu0 0.0
      %1555 = vmatprep.subr.mxu0 0.0
      %1556 = vmatpush1.msra.mxu0 0.0
      %1557 = vmatprep.subr.mxu0 0.0
      %1558 = vmatpush1.msra.mxu0 0.0
      %1559 = vmatprep.subr.mxu0 0.0
      %1560 = vmatpush1.msra.mxu0 0.0
      %1561 = vmatprep.subr.mxu0 0.0
      %1562 = vmatpush1.msra.mxu0 0.0
      %1563 = vmatprep.subr.mxu0 0.0
      %1564 = vmatpush1.msra.mxu0 0.0
      %1565 = vmatprep.subr.mxu0 0.0
      %1566 = vmatpush1.msra.mxu0 0.0
      %1567 = vmatprep.subr.mxu0 0.0
      %1568 = vmatpush1.msra.mxu0 0.0
      %1569 = vmatprep.subr.mxu0 0.0
      %1570 = vmatpush1.msra.mxu0 0.0
      %1571 = vmatprep.mubr.f32.mxu0 0.0
      %1572 = vmatmul.mubr.f32.gmra.mrb[0].mxu0 %v1301
      %v1573 = vpop.f32.mrb[0].mxu0
      %v1574 = vadd.f32 %v1469, %v1573
      %v1575 = vpop.f32.mrb[0].mxu0
      %1576 = vmatprep.mubr.f32.mxu0 0.0
      %1577 = vmatmul.mubr.f32.gmra.mrb[0].mxu0 %v1303
      %v1578 = vpop.f32.mrb[0].mxu0
      %v1579 = vadd.f32 %v1474, %v1578
      %v1580 = vpop.f32.mrb[0].mxu0
      %1581 = vmatprep.mubr.f32.mxu0 0.0
      %1582 = vmatmul.mubr.f32.gmra.mrb[0].mxu0 %v1305
      %v1583 = vpop.f32.mrb[0].mxu0
      %v1584 = vadd.f32 %v1479, %v1583
      %v1585 = vpop.f32.mrb[0].mxu0
      %1586 = vmatprep.mubr.f32.mxu0 0.0
      %1587 = vmatmul.mubr.f32.gmra.mrb[0].mxu0 %v1307
      %v1588 = vpop.f32.mrb[0].mxu0
      %v1589 = vadd.f32 %v1484, %v1588
      %v1590 = vpop.f32.mrb[0].mxu0
      %1591 = vmatprep.mubr.f32.mxu0 0.0
      %1592 = vmatmul.mubr.f32.gmra.mrb[0].mxu0 %v1309
      %v1593 = vpop.f32.mrb[0].mxu0
      %v1594 = vadd.f32 %v1489, %v1593
      %v1595 = vpop.f32.mrb[0].mxu0
      %1596 = vmatprep.mubr.f32.mxu0 0.0
      %1597 = vmatmul.mubr.f32.gmra.mrb[0].mxu0 %v1311
      %v1598 = vpop.f32.mrb[0].mxu0
      %v1599 = vadd.f32 %v1494, %v1598
      %v1600 = vpop.f32.mrb[0].mxu0
      %1601 = vmatprep.mubr.f32.mxu0 0.0
      %1602 = vmatmul.mubr.f32.gmra.mrb[0].mxu0 %v1313
      %v1603 = vpop.f32.mrb[0].mxu0
      %v1604 = vadd.f32 %v1499, %v1603
      %v1605 = vpop.f32.mrb[0].mxu0
      %1606 = vmatprep.mubr.f32.mxu0 0.0
      %1607 = vmatmul.mubr.f32.gmra.mrb[0].mxu0 %v1315
      %v1608 = vpop.f32.mrb[0].mxu0
      %v1609 = vadd.f32 %v1504, %v1608
      %v1610 = vpop.f32.mrb[0].mxu0
      %1611 = vdwg.mxu0
      %vm1612 = vcmask 1045504
      %v1613 = vrot.slane %v1301, 2
      %v1614 = vrot.slane %v1302, 2
      %v1615 = vsel %vm1612, %v1613, %v1614
      %v1616 = vrot.slane %v1303, 2
      %v1617 = vrot.slane %v1304, 2
      %v1618 = vsel %vm1612, %v1616, %v1617
      %v1619 = vrot.slane %v1305, 2
      %v1620 = vrot.slane %v1306, 2
      %v1621 = vsel %vm1612, %v1619, %v1620
      %v1622 = vrot.slane %v1307, 2
      %v1623 = vrot.slane %v1308, 2
      %v1624 = vsel %vm1612, %v1622, %v1623
      %v1625 = vrot.slane %v1309, 2
      %v1626 = vrot.slane %v1310, 2
      %v1627 = vsel %vm1612, %v1625, %v1626
      %v1628 = vrot.slane %v1311, 2
      %v1629 = vrot.slane %v1312, 2
      %v1630 = vsel %vm1612, %v1628, %v1629
      %v1631 = vrot.slane %v1313, 2
      %v1632 = vrot.slane %v1314, 2
      %v1633 = vsel %vm1612, %v1631, %v1632
      %v1634 = vrot.slane %v1315, 2
      %v1635 = vrot.slane %v1316, 2
      %v1636 = vsel %vm1612, %v1634, %v1635
      %s1645 = scalar_lea.vmem %s4, 256
      %v1646 = vld [vmem:[%s1645] sm:$0xff]
      %v1647 = vld [vmem:[%s1645 + $0x8] sm:$0xff]
      %v1648 = vld [vmem:[%s1645 + $0x10] sm:$0xff]
      %v1649 = vld [vmem:[%s1645 + $0x18] sm:$0xff]
      %v1650 = vld [vmem:[%s1645 + $0x20] sm:$0xff]
      %v1651 = vld [vmem:[%s1645 + $0x28] sm:$0xff]
      %v1652 = vld [vmem:[%s1645 + $0x30] sm:$0xff]
      %v1653 = vld [vmem:[%s1645 + $0x38] sm:$0xff]
      %v1654 = vld [vmem:[%s1645 + $0x40] sm:$0xff]
      %v1655 = vld [vmem:[%s1645 + $0x48] sm:$0xff]
      %v1656 = vld [vmem:[%s1645 + $0x50] sm:$0xff]
      %v1657 = vld [vmem:[%s1645 + $0x58] sm:$0xff]
      %v1658 = vld [vmem:[%s1645 + $0x60] sm:$0xff]
      %v1659 = vld [vmem:[%s1645 + $0x68] sm:$0xff]
      %v1660 = vld [vmem:[%s1645 + $0x70] sm:$0xff]
      %v1661 = vld [vmem:[%s1645 + $0x78] sm:$0xff]
      %1662 = vmatprep.subr.mxu0 0.0
      %1663 = vmatpush1.msra.mxu0 %v1646
      %1664 = vmatprep.subr.mxu0 0.0
      %1665 = vmatpush1.msra.mxu0 %v1647
      %1666 = vmatprep.subr.mxu0 0.0
      %1667 = vmatpush1.msra.mxu0 %v1648
      %1668 = vmatprep.subr.mxu0 0.0
      %1669 = vmatpush1.msra.mxu0 %v1649
      %1670 = vmatprep.subr.mxu0 0.0
      %1671 = vmatpush1.msra.mxu0 %v1650
      %1672 = vmatprep.subr.mxu0 0.0
      %1673 = vmatpush1.msra.mxu0 %v1651
      %1674 = vmatprep.subr.mxu0 0.0
      %1675 = vmatpush1.msra.mxu0 %v1652
      %1676 = vmatprep.subr.mxu0 0.0
      %1677 = vmatpush1.msra.mxu0 %v1653
      %1678 = vmatprep.subr.mxu0 0.0
      %1679 = vmatpush1.msra.mxu0 %v1654
      %1680 = vmatprep.subr.mxu0 0.0
      %1681 = vmatpush1.msra.mxu0 %v1655
      %1682 = vmatprep.subr.mxu0 0.0
      %1683 = vmatpush1.msra.mxu0 %v1656
      %1684 = vmatprep.subr.mxu0 0.0
      %1685 = vmatpush1.msra.mxu0 %v1657
      %1686 = vmatprep.subr.mxu0 0.0
      %1687 = vmatpush1.msra.mxu0 %v1658
      %1688 = vmatprep.subr.mxu0 0.0
      %1689 = vmatpush1.msra.mxu0 %v1659
      %1690 = vmatprep.subr.mxu0 0.0
      %1691 = vmatpush1.msra.mxu0 %v1660
      %1692 = vmatprep.subr.mxu0 0.0
      %1693 = vmatpush1.msra.mxu0 %v1661
      %1694 = vmatprep.subr.mxu0 0.0
      %1695 = vmatpush1.msra.mxu0 0.0
      %1696 = vmatprep.subr.mxu0 0.0
      %1697 = vmatpush1.msra.mxu0 0.0
      %1698 = vmatprep.subr.mxu0 0.0
      %1699 = vmatpush1.msra.mxu0 0.0
      %1700 = vmatprep.subr.mxu0 0.0
      %1701 = vmatpush1.msra.mxu0 0.0
      %1702 = vmatprep.subr.mxu0 0.0
      %1703 = vmatpush1.msra.mxu0 0.0
      %1704 = vmatprep.subr.mxu0 0.0
      %1705 = vmatpush1.msra.mxu0 0.0
      %1706 = vmatprep.subr.mxu0 0.0
      %1707 = vmatpush1.msra.mxu0 0.0
      %1708 = vmatprep.subr.mxu0 0.0
      %1709 = vmatpush1.msra.mxu0 0.0
      %1710 = vmatprep.subr.mxu0 0.0
      %1711 = vmatpush1.msra.mxu0 0.0
      %1712 = vmatprep.subr.mxu0 0.0
      %1713 = vmatpush1.msra.mxu0 0.0
      %1714 = vmatprep.subr.mxu0 0.0
      %1715 = vmatpush1.msra.mxu0 0.0
      %1716 = vmatprep.subr.mxu0 0.0
      %1717 = vmatpush1.msra.mxu0 0.0
      %1718 = vmatprep.subr.mxu0 0.0
      %1719 = vmatpush1.msra.mxu0 0.0
      %1720 = vmatprep.subr.mxu0 0.0
      %1721 = vmatpush1.msra.mxu0 0.0
      %1722 = vmatprep.subr.mxu0 0.0
      %1723 = vmatpush1.msra.mxu0 0.0
      %1724 = vmatprep.subr.mxu0 0.0
      %1725 = vmatpush1.msra.mxu0 0.0
      %1726 = vmatprep.mubr.f32.mxu0 0.0
      %1727 = vmatmul.mubr.f32.gmra.mrb[0].mxu0 %v1615
      %v1728 = vpop.f32.mrb[0].mxu0
      %v1729 = vadd.f32 0.0, %v1728
      %v1730 = vpop.f32.mrb[0].mxu0
      %1731 = vmatprep.mubr.f32.mxu0 0.0
      %1732 = vmatmul.mubr.f32.gmra.mrb[0].mxu0 %v1618
      %v1733 = vpop.f32.mrb[0].mxu0
      %v1734 = vadd.f32 0.0, %v1733
      %v1735 = vpop.f32.mrb[0].mxu0
      %1736 = vmatprep.mubr.f32.mxu0 0.0
      %1737 = vmatmul.mubr.f32.gmra.mrb[0].mxu0 %v1621
      %v1738 = vpop.f32.mrb[0].mxu0
      %v1739 = vadd.f32 0.0, %v1738
      %v1740 = vpop.f32.mrb[0].mxu0
      %1741 = vmatprep.mubr.f32.mxu0 0.0
      %1742 = vmatmul.mubr.f32.gmra.mrb[0].mxu0 %v1624
      %v1743 = vpop.f32.mrb[0].mxu0
      %v1744 = vadd.f32 0.0, %v1743
      %v1745 = vpop.f32.mrb[0].mxu0
      %1746 = vmatprep.mubr.f32.mxu0 0.0
      %1747 = vmatmul.mubr.f32.gmra.mrb[0].mxu0 %v1627
      %v1748 = vpop.f32.mrb[0].mxu0
      %v1749 = vadd.f32 0.0, %v1748
      %v1750 = vpop.f32.mrb[0].mxu0
      %1751 = vmatprep.mubr.f32.mxu0 0.0
      %1752 = vmatmul.mubr.f32.gmra.mrb[0].mxu0 %v1630
      %v1753 = vpop.f32.mrb[0].mxu0
      %v1754 = vadd.f32 0.0, %v1753
      %v1755 = vpop.f32.mrb[0].mxu0
      %1756 = vmatprep.mubr.f32.mxu0 0.0
      %1757 = vmatmul.mubr.f32.gmra.mrb[0].mxu0 %v1633
      %v1758 = vpop.f32.mrb[0].mxu0
      %v1759 = vadd.f32 0.0, %v1758
      %v1760 = vpop.f32.mrb[0].mxu0
      %1761 = vmatprep.mubr.f32.mxu0 0.0
      %1762 = vmatmul.mubr.f32.gmra.mrb[0].mxu0 %v1636
      %v1763 = vpop.f32.mrb[0].mxu0
      %v1764 = vadd.f32 0.0, %v1763
      %v1765 = vpop.f32.mrb[0].mxu0
      %1766 = vdwg.mxu0
      %v1767 = vadd.f32 %v1574, %v1729
      %v1768 = vadd.f32 %v1579, %v1734
      %v1769 = vadd.f32 %v1584, %v1739
      %v1770 = vadd.f32 %v1589, %v1744
      %v1771 = vadd.f32 %v1594, %v1749
      %v1772 = vadd.f32 %v1599, %v1754
      %v1773 = vadd.f32 %v1604, %v1759
      %v1774 = vadd.f32 %v1609, %v1764
      %s1775 = scalar_lea.vmem %s4, 384
      %v1776 = vld [vmem:[%s1775] sm:$0xff]
      %v1777 = vld [vmem:[%s1775 + $0x8] sm:$0xff]
      %v1778 = vld [vmem:[%s1775 + $0x10] sm:$0xff]
      %v1779 = vld [vmem:[%s1775 + $0x18] sm:$0xff]
      %v1780 = vld [vmem:[%s1775 + $0x20] sm:$0xff]
      %v1781 = vld [vmem:[%s1775 + $0x28] sm:$0xff]
      %v1782 = vld [vmem:[%s1775 + $0x30] sm:$0xff]
      %v1783 = vld [vmem:[%s1775 + $0x38] sm:$0xff]
      %v1784 = vld [vmem:[%s1775 + $0x40] sm:$0xff]
      %v1785 = vld [vmem:[%s1775 + $0x48] sm:$0xff]
      %v1786 = vld [vmem:[%s1775 + $0x50] sm:$0xff]
      %v1787 = vld [vmem:[%s1775 + $0x58] sm:$0xff]
      %v1788 = vld [vmem:[%s1775 + $0x60] sm:$0xff]
      %v1789 = vld [vmem:[%s1775 + $0x68] sm:$0xff]
      %v1790 = vld [vmem:[%s1775 + $0x70] sm:$0xff]
      %v1791 = vld [vmem:[%s1775 + $0x78] sm:$0xff]
      %1792 = vmatprep.subr.mxu0 0.0
      %1793 = vmatpush1.msra.mxu0 %v1776
      %1794 = vmatprep.subr.mxu0 0.0
      %1795 = vmatpush1.msra.mxu0 %v1777
      %1796 = vmatprep.subr.mxu0 0.0
      %1797 = vmatpush1.msra.mxu0 %v1778
      %1798 = vmatprep.subr.mxu0 0.0
      %1799 = vmatpush1.msra.mxu0 %v1779
      %1800 = vmatprep.subr.mxu0 0.0
      %1801 = vmatpush1.msra.mxu0 %v1780
      %1802 = vmatprep.subr.mxu0 0.0
      %1803 = vmatpush1.msra.mxu0 %v1781
      %1804 = vmatprep.subr.mxu0 0.0
      %1805 = vmatpush1.msra.mxu0 %v1782
      %1806 = vmatprep.subr.mxu0 0.0
      %1807 = vmatpush1.msra.mxu0 %v1783
      %1808 = vmatprep.subr.mxu0 0.0
      %1809 = vmatpush1.msra.mxu0 %v1784
      %1810 = vmatprep.subr.mxu0 0.0
      %1811 = vmatpush1.msra.mxu0 %v1785
      %1812 = vmatprep.subr.mxu0 0.0
      %1813 = vmatpush1.msra.mxu0 %v1786
      %1814 = vmatprep.subr.mxu0 0.0
      %1815 = vmatpush1.msra.mxu0 %v1787
      %1816 = vmatprep.subr.mxu0 0.0
      %1817 = vmatpush1.msra.mxu0 %v1788
      %1818 = vmatprep.subr.mxu0 0.0
      %1819 = vmatpush1.msra.mxu0 %v1789
      %1820 = vmatprep.subr.mxu0 0.0
      %1821 = vmatpush1.msra.mxu0 %v1790
      %1822 = vmatprep.subr.mxu0 0.0
      %1823 = vmatpush1.msra.mxu0 %v1791
      %1824 = vmatprep.subr.mxu0 0.0
      %1825 = vmatpush1.msra.mxu0 0.0
      %1826 = vmatprep.subr.mxu0 0.0
      %1827 = vmatpush1.msra.mxu0 0.0
      %1828 = vmatprep.subr.mxu0 0.0
      %1829 = vmatpush1.msra.mxu0 0.0
      %1830 = vmatprep.subr.mxu0 0.0
      %1831 = vmatpush1.msra.mxu0 0.0
      %1832 = vmatprep.subr.mxu0 0.0
      %1833 = vmatpush1.msra.mxu0 0.0
      %1834 = vmatprep.subr.mxu0 0.0
      %1835 = vmatpush1.msra.mxu0 0.0
      %1836 = vmatprep.subr.mxu0 0.0
      %1837 = vmatpush1.msra.mxu0 0.0
      %1838 = vmatprep.subr.mxu0 0.0
      %1839 = vmatpush1.msra.mxu0 0.0
      %1840 = vmatprep.subr.mxu0 0.0
      %1841 = vmatpush1.msra.mxu0 0.0
      %1842 = vmatprep.subr.mxu0 0.0
      %1843 = vmatpush1.msra.mxu0 0.0
      %1844 = vmatprep.subr.mxu0 0.0
      %1845 = vmatpush1.msra.mxu0 0.0
      %1846 = vmatprep.subr.mxu0 0.0
      %1847 = vmatpush1.msra.mxu0 0.0
      %1848 = vmatprep.subr.mxu0 0.0
      %1849 = vmatpush1.msra.mxu0 0.0
      %1850 = vmatprep.subr.mxu0 0.0
      %1851 = vmatpush1.msra.mxu0 0.0
      %1852 = vmatprep.subr.mxu0 0.0
      %1853 = vmatpush1.msra.mxu0 0.0
      %1854 = vmatprep.subr.mxu0 0.0
      %1855 = vmatpush1.msra.mxu0 0.0
      %1856 = vmatprep.mubr.f32.mxu0 0.0
      %1857 = vmatmul.mubr.f32.gmra.mrb[0].mxu0 %v1303
      %v1858 = vpop.f32.mrb[0].mxu0
      %v1859 = vadd.f32 0.0, %v1858
      %v1860 = vpop.f32.mrb[0].mxu0
      %1861 = vmatprep.mubr.f32.mxu0 0.0
      %1862 = vmatmul.mubr.f32.gmra.mrb[0].mxu0 %v1305
      %v1863 = vpop.f32.mrb[0].mxu0
      %v1864 = vadd.f32 0.0, %v1863
      %v1865 = vpop.f32.mrb[0].mxu0
      %1866 = vmatprep.mubr.f32.mxu0 0.0
      %1867 = vmatmul.mubr.f32.gmra.mrb[0].mxu0 %v1307
      %v1868 = vpop.f32.mrb[0].mxu0
      %v1869 = vadd.f32 0.0, %v1868
      %v1870 = vpop.f32.mrb[0].mxu0
      %1871 = vmatprep.mubr.f32.mxu0 0.0
      %1872 = vmatmul.mubr.f32.gmra.mrb[0].mxu0 %v1309
      %v1873 = vpop.f32.mrb[0].mxu0
      %v1874 = vadd.f32 0.0, %v1873
      %v1875 = vpop.f32.mrb[0].mxu0
      %1876 = vmatprep.mubr.f32.mxu0 0.0
      %1877 = vmatmul.mubr.f32.gmra.mrb[0].mxu0 %v1311
      %v1878 = vpop.f32.mrb[0].mxu0
      %v1879 = vadd.f32 0.0, %v1878
      %v1880 = vpop.f32.mrb[0].mxu0
      %1881 = vmatprep.mubr.f32.mxu0 0.0
      %1882 = vmatmul.mubr.f32.gmra.mrb[0].mxu0 %v1313
      %v1883 = vpop.f32.mrb[0].mxu0
      %v1884 = vadd.f32 0.0, %v1883
      %v1885 = vpop.f32.mrb[0].mxu0
      %1886 = vmatprep.mubr.f32.mxu0 0.0
      %1887 = vmatmul.mubr.f32.gmra.mrb[0].mxu0 %v1315
      %v1888 = vpop.f32.mrb[0].mxu0
      %v1889 = vadd.f32 0.0, %v1888
      %v1890 = vpop.f32.mrb[0].mxu0
      %1891 = vmatprep.mubr.f32.mxu0 0.0
      %1892 = vmatmul.mubr.f32.gmra.mrb[0].mxu0 %v1317
      %v1893 = vpop.f32.mrb[0].mxu0
      %v1894 = vadd.f32 0.0, %v1893
      %v1895 = vpop.f32.mrb[0].mxu0
      %1896 = vdwg.mxu0
      %v1897 = vadd.f32 %v1767, %v1859
      %v1898 = vadd.f32 %v1768, %v1864
      %v1899 = vadd.f32 %v1769, %v1869
      %v1900 = vadd.f32 %v1770, %v1874
      %v1901 = vadd.f32 %v1771, %v1879
      %v1902 = vadd.f32 %v1772, %v1884
      %v1903 = vadd.f32 %v1773, %v1889
      %v1904 = vadd.f32 %v1774, %v1894
      %v1907 = vrot.slane %v1317, 1
      %v1908 = vrot.slane %v1318, 1
      %v1909 = vsel %vm291, %v1907, %v1908
      %s1911 = scalar_lea.vmem %s4, 512
      %v1912 = vld [vmem:[%s1911] sm:$0xff]
      %v1913 = vld [vmem:[%s1911 + $0x8] sm:$0xff]
      %v1914 = vld [vmem:[%s1911 + $0x10] sm:$0xff]
      %v1915 = vld [vmem:[%s1911 + $0x18] sm:$0xff]
      %v1916 = vld [vmem:[%s1911 + $0x20] sm:$0xff]
      %v1917 = vld [vmem:[%s1911 + $0x28] sm:$0xff]
      %v1918 = vld [vmem:[%s1911 + $0x30] sm:$0xff]
      %v1919 = vld [vmem:[%s1911 + $0x38] sm:$0xff]
      %v1920 = vld [vmem:[%s1911 + $0x40] sm:$0xff]
      %v1921 = vld [vmem:[%s1911 + $0x48] sm:$0xff]
      %v1922 = vld [vmem:[%s1911 + $0x50] sm:$0xff]
      %v1923 = vld [vmem:[%s1911 + $0x58] sm:$0xff]
      %v1924 = vld [vmem:[%s1911 + $0x60] sm:$0xff]
      %v1925 = vld [vmem:[%s1911 + $0x68] sm:$0xff]
      %v1926 = vld [vmem:[%s1911 + $0x70] sm:$0xff]
      %v1927 = vld [vmem:[%s1911 + $0x78] sm:$0xff]
      %1928 = vmatprep.subr.mxu0 0.0
      %1929 = vmatpush1.msra.mxu0 %v1912
      %1930 = vmatprep.subr.mxu0 0.0
      %1931 = vmatpush1.msra.mxu0 %v1913
      %1932 = vmatprep.subr.mxu0 0.0
      %1933 = vmatpush1.msra.mxu0 %v1914
      %1934 = vmatprep.subr.mxu0 0.0
      %1935 = vmatpush1.msra.mxu0 %v1915
      %1936 = vmatprep.subr.mxu0 0.0
      %1937 = vmatpush1.msra.mxu0 %v1916
      %1938 = vmatprep.subr.mxu0 0.0
      %1939 = vmatpush1.msra.mxu0 %v1917
      %1940 = vmatprep.subr.mxu0 0.0
      %1941 = vmatpush1.msra.mxu0 %v1918
      %1942 = vmatprep.subr.mxu0 0.0
      %1943 = vmatpush1.msra.mxu0 %v1919
      %1944 = vmatprep.subr.mxu0 0.0
      %1945 = vmatpush1.msra.mxu0 %v1920
      %1946 = vmatprep.subr.mxu0 0.0
      %1947 = vmatpush1.msra.mxu0 %v1921
      %1948 = vmatprep.subr.mxu0 0.0
      %1949 = vmatpush1.msra.mxu0 %v1922
      %1950 = vmatprep.subr.mxu0 0.0
      %1951 = vmatpush1.msra.mxu0 %v1923
      %1952 = vmatprep.subr.mxu0 0.0
      %1953 = vmatpush1.msra.mxu0 %v1924
      %1954 = vmatprep.subr.mxu0 0.0
      %1955 = vmatpush1.msra.mxu0 %v1925
      %1956 = vmatprep.subr.mxu0 0.0
      %1957 = vmatpush1.msra.mxu0 %v1926
      %1958 = vmatprep.subr.mxu0 0.0
      %1959 = vmatpush1.msra.mxu0 %v1927
      %1960 = vmatprep.subr.mxu0 0.0
      %1961 = vmatpush1.msra.mxu0 0.0
      %1962 = vmatprep.subr.mxu0 0.0
      %1963 = vmatpush1.msra.mxu0 0.0
      %1964 = vmatprep.subr.mxu0 0.0
      %1965 = vmatpush1.msra.mxu0 0.0
      %1966 = vmatprep.subr.mxu0 0.0
      %1967 = vmatpush1.msra.mxu0 0.0
      %1968 = vmatprep.subr.mxu0 0.0
      %1969 = vmatpush1.msra.mxu0 0.0
      %1970 = vmatprep.subr.mxu0 0.0
      %1971 = vmatpush1.msra.mxu0 0.0
      %1972 = vmatprep.subr.mxu0 0.0
      %1973 = vmatpush1.msra.mxu0 0.0
      %1974 = vmatprep.subr.mxu0 0.0
      %1975 = vmatpush1.msra.mxu0 0.0
      %1976 = vmatprep.subr.mxu0 0.0
      %1977 = vmatpush1.msra.mxu0 0.0
      %1978 = vmatprep.subr.mxu0 0.0
      %1979 = vmatpush1.msra.mxu0 0.0
      %1980 = vmatprep.subr.mxu0 0.0
      %1981 = vmatpush1.msra.mxu0 0.0
      %1982 = vmatprep.subr.mxu0 0.0
      %1983 = vmatpush1.msra.mxu0 0.0
      %1984 = vmatprep.subr.mxu0 0.0
      %1985 = vmatpush1.msra.mxu0 0.0
      %1986 = vmatprep.subr.mxu0 0.0
      %1987 = vmatpush1.msra.mxu0 0.0
      %1988 = vmatprep.subr.mxu0 0.0
      %1989 = vmatpush1.msra.mxu0 0.0
      %1990 = vmatprep.subr.mxu0 0.0
      %1991 = vmatpush1.msra.mxu0 0.0
      %1992 = vmatprep.mubr.f32.mxu0 0.0
      %1993 = vmatmul.mubr.f32.gmra.mrb[0].mxu0 %v1358
      %v1994 = vpop.f32.mrb[0].mxu0
      %v1995 = vadd.f32 0.0, %v1994
      %v1996 = vpop.f32.mrb[0].mxu0
      %1997 = vmatprep.mubr.f32.mxu0 0.0
      %1998 = vmatmul.mubr.f32.gmra.mrb[0].mxu0 %v1361
      %v1999 = vpop.f32.mrb[0].mxu0
      %v2000 = vadd.f32 0.0, %v1999
      %v2001 = vpop.f32.mrb[0].mxu0
      %2002 = vmatprep.mubr.f32.mxu0 0.0
      %2003 = vmatmul.mubr.f32.gmra.mrb[0].mxu0 %v1364
      %v2004 = vpop.f32.mrb[0].mxu0
      %v2005 = vadd.f32 0.0, %v2004
      %v2006 = vpop.f32.mrb[0].mxu0
      %2007 = vmatprep.mubr.f32.mxu0 0.0
      %2008 = vmatmul.mubr.f32.gmra.mrb[0].mxu0 %v1367
      %v2009 = vpop.f32.mrb[0].mxu0
      %v2010 = vadd.f32 0.0, %v2009
      %v2011 = vpop.f32.mrb[0].mxu0
      %2012 = vmatprep.mubr.f32.mxu0 0.0
      %2013 = vmatmul.mubr.f32.gmra.mrb[0].mxu0 %v1370
      %v2014 = vpop.f32.mrb[0].mxu0
      %v2015 = vadd.f32 0.0, %v2014
      %v2016 = vpop.f32.mrb[0].mxu0
      %2017 = vmatprep.mubr.f32.mxu0 0.0
      %2018 = vmatmul.mubr.f32.gmra.mrb[0].mxu0 %v1373
      %v2019 = vpop.f32.mrb[0].mxu0
      %v2020 = vadd.f32 0.0, %v2019
      %v2021 = vpop.f32.mrb[0].mxu0
      %2022 = vmatprep.mubr.f32.mxu0 0.0
      %2023 = vmatmul.mubr.f32.gmra.mrb[0].mxu0 %v1376
      %v2024 = vpop.f32.mrb[0].mxu0
      %v2025 = vadd.f32 0.0, %v2024
      %v2026 = vpop.f32.mrb[0].mxu0
      %2027 = vmatprep.mubr.f32.mxu0 0.0
      %2028 = vmatmul.mubr.f32.gmra.mrb[0].mxu0 %v1909
      %v2029 = vpop.f32.mrb[0].mxu0
      %v2030 = vadd.f32 0.0, %v2029
      %v2031 = vpop.f32.mrb[0].mxu0
      %2032 = vdwg.mxu0
      %v2033 = vadd.f32 %v1897, %v1995
      %v2034 = vadd.f32 %v1898, %v2000
      %v2035 = vadd.f32 %v1899, %v2005
      %v2036 = vadd.f32 %v1900, %v2010
      %v2037 = vadd.f32 %v1901, %v2015
      %v2038 = vadd.f32 %v1902, %v2020
      %v2039 = vadd.f32 %v1903, %v2025
      %v2040 = vadd.f32 %v1904, %v2030
      %v2041 = vrot.slane %v1317, 2
      %v2042 = vrot.slane %v1318, 2
      %v2043 = vsel %vm1612, %v2041, %v2042
      %s2045 = scalar_lea.vmem %s4, 640
      %v2046 = vld [vmem:[%s2045] sm:$0xff]
      %v2047 = vld [vmem:[%s2045 + $0x8] sm:$0xff]
      %v2048 = vld [vmem:[%s2045 + $0x10] sm:$0xff]
      %v2049 = vld [vmem:[%s2045 + $0x18] sm:$0xff]
      %v2050 = vld [vmem:[%s2045 + $0x20] sm:$0xff]
      %v2051 = vld [vmem:[%s2045 + $0x28] sm:$0xff]
      %v2052 = vld [vmem:[%s2045 + $0x30] sm:$0xff]
      %v2053 = vld [vmem:[%s2045 + $0x38] sm:$0xff]
      %v2054 = vld [vmem:[%s2045 + $0x40] sm:$0xff]
      %v2055 = vld [vmem:[%s2045 + $0x48] sm:$0xff]
      %v2056 = vld [vmem:[%s2045 + $0x50] sm:$0xff]
      %v2057 = vld [vmem:[%s2045 + $0x58] sm:$0xff]
      %v2058 = vld [vmem:[%s2045 + $0x60] sm:$0xff]
      %v2059 = vld [vmem:[%s2045 + $0x68] sm:$0xff]
      %v2060 = vld [vmem:[%s2045 + $0x70] sm:$0xff]
      %v2061 = vld [vmem:[%s2045 + $0x78] sm:$0xff]
      %2062 = vmatprep.subr.mxu0 0.0
      %2063 = vmatpush1.msra.mxu0 %v2046
      %2064 = vmatprep.subr.mxu0 0.0
      %2065 = vmatpush1.msra.mxu0 %v2047
      %2066 = vmatprep.subr.mxu0 0.0
      %2067 = vmatpush1.msra.mxu0 %v2048
      %2068 = vmatprep.subr.mxu0 0.0
      %2069 = vmatpush1.msra.mxu0 %v2049
      %2070 = vmatprep.subr.mxu0 0.0
      %2071 = vmatpush1.msra.mxu0 %v2050
      %2072 = vmatprep.subr.mxu0 0.0
      %2073 = vmatpush1.msra.mxu0 %v2051
      %2074 = vmatprep.subr.mxu0 0.0
      %2075 = vmatpush1.msra.mxu0 %v2052
      %2076 = vmatprep.subr.mxu0 0.0
      %2077 = vmatpush1.msra.mxu0 %v2053
      %2078 = vmatprep.subr.mxu0 0.0
      %2079 = vmatpush1.msra.mxu0 %v2054
      %2080 = vmatprep.subr.mxu0 0.0
      %2081 = vmatpush1.msra.mxu0 %v2055
      %2082 = vmatprep.subr.mxu0 0.0
      %2083 = vmatpush1.msra.mxu0 %v2056
      %2084 = vmatprep.subr.mxu0 0.0
      %2085 = vmatpush1.msra.mxu0 %v2057
      %2086 = vmatprep.subr.mxu0 0.0
      %2087 = vmatpush1.msra.mxu0 %v2058
      %2088 = vmatprep.subr.mxu0 0.0
      %2089 = vmatpush1.msra.mxu0 %v2059
      %2090 = vmatprep.subr.mxu0 0.0
      %2091 = vmatpush1.msra.mxu0 %v2060
      %2092 = vmatprep.subr.mxu0 0.0
      %2093 = vmatpush1.msra.mxu0 %v2061
      %2094 = vmatprep.subr.mxu0 0.0
      %2095 = vmatpush1.msra.mxu0 0.0
      %2096 = vmatprep.subr.mxu0 0.0
      %2097 = vmatpush1.msra.mxu0 0.0
      %2098 = vmatprep.subr.mxu0 0.0
      %2099 = vmatpush1.msra.mxu0 0.0
      %2100 = vmatprep.subr.mxu0 0.0
      %2101 = vmatpush1.msra.mxu0 0.0
      %2102 = vmatprep.subr.mxu0 0.0
      %2103 = vmatpush1.msra.mxu0 0.0
      %2104 = vmatprep.subr.mxu0 0.0
      %2105 = vmatpush1.msra.mxu0 0.0
      %2106 = vmatprep.subr.mxu0 0.0
      %2107 = vmatpush1.msra.mxu0 0.0
      %2108 = vmatprep.subr.mxu0 0.0
      %2109 = vmatpush1.msra.mxu0 0.0
      %2110 = vmatprep.subr.mxu0 0.0
      %2111 = vmatpush1.msra.mxu0 0.0
      %2112 = vmatprep.subr.mxu0 0.0
      %2113 = vmatpush1.msra.mxu0 0.0
      %2114 = vmatprep.subr.mxu0 0.0
      %2115 = vmatpush1.msra.mxu0 0.0
      %2116 = vmatprep.subr.mxu0 0.0
      %2117 = vmatpush1.msra.mxu0 0.0
      %2118 = vmatprep.subr.mxu0 0.0
      %2119 = vmatpush1.msra.mxu0 0.0
      %2120 = vmatprep.subr.mxu0 0.0
      %2121 = vmatpush1.msra.mxu0 0.0
      %2122 = vmatprep.subr.mxu0 0.0
      %2123 = vmatpush1.msra.mxu0 0.0
      %2124 = vmatprep.subr.mxu0 0.0
      %2125 = vmatpush1.msra.mxu0 0.0
      %2126 = vmatprep.mubr.f32.mxu0 0.0
      %2127 = vmatmul.mubr.f32.gmra.mrb[0].mxu0 %v1618
      %v2128 = vpop.f32.mrb[0].mxu0
      %v2129 = vadd.f32 0.0, %v2128
      %v2130 = vpop.f32.mrb[0].mxu0
      %2131 = vmatprep.mubr.f32.mxu0 0.0
      %2132 = vmatmul.mubr.f32.gmra.mrb[0].mxu0 %v1621
      %v2133 = vpop.f32.mrb[0].mxu0
      %v2134 = vadd.f32 0.0, %v2133
      %v2135 = vpop.f32.mrb[0].mxu0
      %2136 = vmatprep.mubr.f32.mxu0 0.0
      %2137 = vmatmul.mubr.f32.gmra.mrb[0].mxu0 %v1624
      %v2138 = vpop.f32.mrb[0].mxu0
      %v2139 = vadd.f32 0.0, %v2138
      %v2140 = vpop.f32.mrb[0].mxu0
      %2141 = vmatprep.mubr.f32.mxu0 0.0
      %2142 = vmatmul.mubr.f32.gmra.mrb[0].mxu0 %v1627
      %v2143 = vpop.f32.mrb[0].mxu0
      %v2144 = vadd.f32 0.0, %v2143
      %v2145 = vpop.f32.mrb[0].mxu0
      %2146 = vmatprep.mubr.f32.mxu0 0.0
      %2147 = vmatmul.mubr.f32.gmra.mrb[0].mxu0 %v1630
      %v2148 = vpop.f32.mrb[0].mxu0
      %v2149 = vadd.f32 0.0, %v2148
      %v2150 = vpop.f32.mrb[0].mxu0
      %2151 = vmatprep.mubr.f32.mxu0 0.0
      %2152 = vmatmul.mubr.f32.gmra.mrb[0].mxu0 %v1633
      %v2153 = vpop.f32.mrb[0].mxu0
      %v2154 = vadd.f32 0.0, %v2153
      %v2155 = vpop.f32.mrb[0].mxu0
      %2156 = vmatprep.mubr.f32.mxu0 0.0
      %2157 = vmatmul.mubr.f32.gmra.mrb[0].mxu0 %v1636
      %v2158 = vpop.f32.mrb[0].mxu0
      %v2159 = vadd.f32 0.0, %v2158
      %v2160 = vpop.f32.mrb[0].mxu0
      %2161 = vmatprep.mubr.f32.mxu0 0.0
      %2162 = vmatmul.mubr.f32.gmra.mrb[0].mxu0 %v2043
      %v2163 = vpop.f32.mrb[0].mxu0
      %v2164 = vadd.f32 0.0, %v2163
      %v2165 = vpop.f32.mrb[0].mxu0
      %2166 = vdwg.mxu0
      %v2167 = vadd.f32 %v2033, %v2129
      %v2168 = vadd.f32 %v2034, %v2134
      %v2169 = vadd.f32 %v2035, %v2139
      %v2170 = vadd.f32 %v2036, %v2144
      %v2171 = vadd.f32 %v2037, %v2149
      %v2172 = vadd.f32 %v2038, %v2154
      %v2173 = vadd.f32 %v2039, %v2159
      %v2174 = vadd.f32 %v2040, %v2164
      %s2175 = scalar_lea.vmem %s4, 768
      %v2176 = vld [vmem:[%s2175] sm:$0xff]
      %v2177 = vld [vmem:[%s2175 + $0x8] sm:$0xff]
      %v2178 = vld [vmem:[%s2175 + $0x10] sm:$0xff]
      %v2179 = vld [vmem:[%s2175 + $0x18] sm:$0xff]
      %v2180 = vld [vmem:[%s2175 + $0x20] sm:$0xff]
      %v2181 = vld [vmem:[%s2175 + $0x28] sm:$0xff]
      %v2182 = vld [vmem:[%s2175 + $0x30] sm:$0xff]
      %v2183 = vld [vmem:[%s2175 + $0x38] sm:$0xff]
      %v2184 = vld [vmem:[%s2175 + $0x40] sm:$0xff]
      %v2185 = vld [vmem:[%s2175 + $0x48] sm:$0xff]
      %v2186 = vld [vmem:[%s2175 + $0x50] sm:$0xff]
      %v2187 = vld [vmem:[%s2175 + $0x58] sm:$0xff]
      %v2188 = vld [vmem:[%s2175 + $0x60] sm:$0xff]
      %v2189 = vld [vmem:[%s2175 + $0x68] sm:$0xff]
      %v2190 = vld [vmem:[%s2175 + $0x70] sm:$0xff]
      %v2191 = vld [vmem:[%s2175 + $0x78] sm:$0xff]
      %2192 = vmatprep.subr.mxu0 0.0
      %2193 = vmatpush1.msra.mxu0 %v2176
      %2194 = vmatprep.subr.mxu0 0.0
      %2195 = vmatpush1.msra.mxu0 %v2177
      %2196 = vmatprep.subr.mxu0 0.0
      %2197 = vmatpush1.msra.mxu0 %v2178
      %2198 = vmatprep.subr.mxu0 0.0
      %2199 = vmatpush1.msra.mxu0 %v2179
      %2200 = vmatprep.subr.mxu0 0.0
      %2201 = vmatpush1.msra.mxu0 %v2180
      %2202 = vmatprep.subr.mxu0 0.0
      %2203 = vmatpush1.msra.mxu0 %v2181
      %2204 = vmatprep.subr.mxu0 0.0
      %2205 = vmatpush1.msra.mxu0 %v2182
      %2206 = vmatprep.subr.mxu0 0.0
      %2207 = vmatpush1.msra.mxu0 %v2183
      %2208 = vmatprep.subr.mxu0 0.0
      %2209 = vmatpush1.msra.mxu0 %v2184
      %2210 = vmatprep.subr.mxu0 0.0
      %2211 = vmatpush1.msra.mxu0 %v2185
      %2212 = vmatprep.subr.mxu0 0.0
      %2213 = vmatpush1.msra.mxu0 %v2186
      %2214 = vmatprep.subr.mxu0 0.0
      %2215 = vmatpush1.msra.mxu0 %v2187
      %2216 = vmatprep.subr.mxu0 0.0
      %2217 = vmatpush1.msra.mxu0 %v2188
      %2218 = vmatprep.subr.mxu0 0.0
      %2219 = vmatpush1.msra.mxu0 %v2189
      %2220 = vmatprep.subr.mxu0 0.0
      %2221 = vmatpush1.msra.mxu0 %v2190
      %2222 = vmatprep.subr.mxu0 0.0
      %2223 = vmatpush1.msra.mxu0 %v2191
      %2224 = vmatprep.subr.mxu0 0.0
      %2225 = vmatpush1.msra.mxu0 0.0
      %2226 = vmatprep.subr.mxu0 0.0
      %2227 = vmatpush1.msra.mxu0 0.0
      %2228 = vmatprep.subr.mxu0 0.0
      %2229 = vmatpush1.msra.mxu0 0.0
      %2230 = vmatprep.subr.mxu0 0.0
      %2231 = vmatpush1.msra.mxu0 0.0
      %2232 = vmatprep.subr.mxu0 0.0
      %2233 = vmatpush1.msra.mxu0 0.0
      %2234 = vmatprep.subr.mxu0 0.0
      %2235 = vmatpush1.msra.mxu0 0.0
      %2236 = vmatprep.subr.mxu0 0.0
      %2237 = vmatpush1.msra.mxu0 0.0
      %2238 = vmatprep.subr.mxu0 0.0
      %2239 = vmatpush1.msra.mxu0 0.0
      %2240 = vmatprep.subr.mxu0 0.0
      %2241 = vmatpush1.msra.mxu0 0.0
      %2242 = vmatprep.subr.mxu0 0.0
      %2243 = vmatpush1.msra.mxu0 0.0
      %2244 = vmatprep.subr.mxu0 0.0
      %2245 = vmatpush1.msra.mxu0 0.0
      %2246 = vmatprep.subr.mxu0 0.0
      %2247 = vmatpush1.msra.mxu0 0.0
      %2248 = vmatprep.subr.mxu0 0.0
      %2249 = vmatpush1.msra.mxu0 0.0
      %2250 = vmatprep.subr.mxu0 0.0
      %2251 = vmatpush1.msra.mxu0 0.0
      %2252 = vmatprep.subr.mxu0 0.0
      %2253 = vmatpush1.msra.mxu0 0.0
      %2254 = vmatprep.subr.mxu0 0.0
      %2255 = vmatpush1.msra.mxu0 0.0
      %2256 = vmatprep.mubr.f32.mxu0 0.0
      %2257 = vmatmul.mubr.f32.gmra.mrb[0].mxu0 %v1305
      %v2258 = vpop.f32.mrb[0].mxu0
      %v2259 = vadd.f32 0.0, %v2258
      %v2260 = vpop.f32.mrb[0].mxu0
      %2261 = vmatprep.mubr.f32.mxu0 0.0
      %2262 = vmatmul.mubr.f32.gmra.mrb[0].mxu0 %v1307
      %v2263 = vpop.f32.mrb[0].mxu0
      %v2264 = vadd.f32 0.0, %v2263
      %v2265 = vpop.f32.mrb[0].mxu0
      %2266 = vmatprep.mubr.f32.mxu0 0.0
      %2267 = vmatmul.mubr.f32.gmra.mrb[0].mxu0 %v1309
      %v2268 = vpop.f32.mrb[0].mxu0
      %v2269 = vadd.f32 0.0, %v2268
      %v2270 = vpop.f32.mrb[0].mxu0
      %2271 = vmatprep.mubr.f32.mxu0 0.0
      %2272 = vmatmul.mubr.f32.gmra.mrb[0].mxu0 %v1311
      %v2273 = vpop.f32.mrb[0].mxu0
      %v2274 = vadd.f32 0.0, %v2273
      %v2275 = vpop.f32.mrb[0].mxu0
      %2276 = vmatprep.mubr.f32.mxu0 0.0
      %2277 = vmatmul.mubr.f32.gmra.mrb[0].mxu0 %v1313
      %v2278 = vpop.f32.mrb[0].mxu0
      %v2279 = vadd.f32 0.0, %v2278
      %v2280 = vpop.f32.mrb[0].mxu0
      %2281 = vmatprep.mubr.f32.mxu0 0.0
      %2282 = vmatmul.mubr.f32.gmra.mrb[0].mxu0 %v1315
      %v2283 = vpop.f32.mrb[0].mxu0
      %v2284 = vadd.f32 0.0, %v2283
      %v2285 = vpop.f32.mrb[0].mxu0
      %2286 = vmatprep.mubr.f32.mxu0 0.0
      %2287 = vmatmul.mubr.f32.gmra.mrb[0].mxu0 %v1317
      %v2288 = vpop.f32.mrb[0].mxu0
      %v2289 = vadd.f32 0.0, %v2288
      %v2290 = vpop.f32.mrb[0].mxu0
      %2291 = vmatprep.mubr.f32.mxu0 0.0
      %2292 = vmatmul.mubr.f32.gmra.mrb[0].mxu0 %v1319
      %v2293 = vpop.f32.mrb[0].mxu0
      %v2294 = vadd.f32 0.0, %v2293
      %v2295 = vpop.f32.mrb[0].mxu0
      %2296 = vdwg.mxu0
      %v2297 = vadd.f32 %v2167, %v2259
      %v2298 = vadd.f32 %v2168, %v2264
      %v2299 = vadd.f32 %v2169, %v2269
      %v2300 = vadd.f32 %v2170, %v2274
      %v2301 = vadd.f32 %v2171, %v2279
      %v2302 = vadd.f32 %v2172, %v2284
      %v2303 = vadd.f32 %v2173, %v2289
      %v2304 = vadd.f32 %v2174, %v2294
      %v2307 = vrot.slane %v1319, 1
      %v2308 = vrot.slane %v1320, 1
      %v2309 = vsel %vm291, %v2307, %v2308
      %s2311 = scalar_lea.vmem %s4, 896
      %v2312 = vld [vmem:[%s2311] sm:$0xff]
      %v2313 = vld [vmem:[%s2311 + $0x8] sm:$0xff]
      %v2314 = vld [vmem:[%s2311 + $0x10] sm:$0xff]
      %v2315 = vld [vmem:[%s2311 + $0x18] sm:$0xff]
      %v2316 = vld [vmem:[%s2311 + $0x20] sm:$0xff]
      %v2317 = vld [vmem:[%s2311 + $0x28] sm:$0xff]
      %v2318 = vld [vmem:[%s2311 + $0x30] sm:$0xff]
      %v2319 = vld [vmem:[%s2311 + $0x38] sm:$0xff]
      %v2320 = vld [vmem:[%s2311 + $0x40] sm:$0xff]
      %v2321 = vld [vmem:[%s2311 + $0x48] sm:$0xff]
      %v2322 = vld [vmem:[%s2311 + $0x50] sm:$0xff]
      %v2323 = vld [vmem:[%s2311 + $0x58] sm:$0xff]
      %v2324 = vld [vmem:[%s2311 + $0x60] sm:$0xff]
      %v2325 = vld [vmem:[%s2311 + $0x68] sm:$0xff]
      %v2326 = vld [vmem:[%s2311 + $0x70] sm:$0xff]
      %v2327 = vld [vmem:[%s2311 + $0x78] sm:$0xff]
      %2328 = vmatprep.subr.mxu0 0.0
      %2329 = vmatpush1.msra.mxu0 %v2312
      %2330 = vmatprep.subr.mxu0 0.0
      %2331 = vmatpush1.msra.mxu0 %v2313
      %2332 = vmatprep.subr.mxu0 0.0
      %2333 = vmatpush1.msra.mxu0 %v2314
      %2334 = vmatprep.subr.mxu0 0.0
      %2335 = vmatpush1.msra.mxu0 %v2315
      %2336 = vmatprep.subr.mxu0 0.0
      %2337 = vmatpush1.msra.mxu0 %v2316
      %2338 = vmatprep.subr.mxu0 0.0
      %2339 = vmatpush1.msra.mxu0 %v2317
      %2340 = vmatprep.subr.mxu0 0.0
      %2341 = vmatpush1.msra.mxu0 %v2318
      %2342 = vmatprep.subr.mxu0 0.0
      %2343 = vmatpush1.msra.mxu0 %v2319
      %2344 = vmatprep.subr.mxu0 0.0
      %2345 = vmatpush1.msra.mxu0 %v2320
      %2346 = vmatprep.subr.mxu0 0.0
      %2347 = vmatpush1.msra.mxu0 %v2321
      %2348 = vmatprep.subr.mxu0 0.0
      %2349 = vmatpush1.msra.mxu0 %v2322
      %2350 = vmatprep.subr.mxu0 0.0
      %2351 = vmatpush1.msra.mxu0 %v2323
      %2352 = vmatprep.subr.mxu0 0.0
      %2353 = vmatpush1.msra.mxu0 %v2324
      %2354 = vmatprep.subr.mxu0 0.0
      %2355 = vmatpush1.msra.mxu0 %v2325
      %2356 = vmatprep.subr.mxu0 0.0
      %2357 = vmatpush1.msra.mxu0 %v2326
      %2358 = vmatprep.subr.mxu0 0.0
      %2359 = vmatpush1.msra.mxu0 %v2327
      %2360 = vmatprep.subr.mxu0 0.0
      %2361 = vmatpush1.msra.mxu0 0.0
      %2362 = vmatprep.subr.mxu0 0.0
      %2363 = vmatpush1.msra.mxu0 0.0
      %2364 = vmatprep.subr.mxu0 0.0
      %2365 = vmatpush1.msra.mxu0 0.0
      %2366 = vmatprep.subr.mxu0 0.0
      %2367 = vmatpush1.msra.mxu0 0.0
      %2368 = vmatprep.subr.mxu0 0.0
      %2369 = vmatpush1.msra.mxu0 0.0
      %2370 = vmatprep.subr.mxu0 0.0
      %2371 = vmatpush1.msra.mxu0 0.0
      %2372 = vmatprep.subr.mxu0 0.0
      %2373 = vmatpush1.msra.mxu0 0.0
      %2374 = vmatprep.subr.mxu0 0.0
      %2375 = vmatpush1.msra.mxu0 0.0
      %2376 = vmatprep.subr.mxu0 0.0
      %2377 = vmatpush1.msra.mxu0 0.0
      %2378 = vmatprep.subr.mxu0 0.0
      %2379 = vmatpush1.msra.mxu0 0.0
      %2380 = vmatprep.subr.mxu0 0.0
      %2381 = vmatpush1.msra.mxu0 0.0
      %2382 = vmatprep.subr.mxu0 0.0
      %2383 = vmatpush1.msra.mxu0 0.0
      %2384 = vmatprep.subr.mxu0 0.0
      %2385 = vmatpush1.msra.mxu0 0.0
      %2386 = vmatprep.subr.mxu0 0.0
      %2387 = vmatpush1.msra.mxu0 0.0
      %2388 = vmatprep.subr.mxu0 0.0
      %2389 = vmatpush1.msra.mxu0 0.0
      %2390 = vmatprep.subr.mxu0 0.0
      %2391 = vmatpush1.msra.mxu0 0.0
      %2392 = vmatprep.mubr.f32.mxu0 0.0
      %2393 = vmatmul.mubr.f32.gmra.mrb[0].mxu0 %v1361
      %v2394 = vpop.f32.mrb[0].mxu0
      %v2395 = vadd.f32 0.0, %v2394
      %v2396 = vpop.f32.mrb[0].mxu0
      %2397 = vmatprep.mubr.f32.mxu0 0.0
      %2398 = vmatmul.mubr.f32.gmra.mrb[0].mxu0 %v1364
      %v2399 = vpop.f32.mrb[0].mxu0
      %v2400 = vadd.f32 0.0, %v2399
      %v2401 = vpop.f32.mrb[0].mxu0
      %2402 = vmatprep.mubr.f32.mxu0 0.0
      %2403 = vmatmul.mubr.f32.gmra.mrb[0].mxu0 %v1367
      %v2404 = vpop.f32.mrb[0].mxu0
      %v2405 = vadd.f32 0.0, %v2404
      %v2406 = vpop.f32.mrb[0].mxu0
      %2407 = vmatprep.mubr.f32.mxu0 0.0
      %2408 = vmatmul.mubr.f32.gmra.mrb[0].mxu0 %v1370
      %v2409 = vpop.f32.mrb[0].mxu0
      %v2410 = vadd.f32 0.0, %v2409
      %v2411 = vpop.f32.mrb[0].mxu0
      %2412 = vmatprep.mubr.f32.mxu0 0.0
      %2413 = vmatmul.mubr.f32.gmra.mrb[0].mxu0 %v1373
      %v2414 = vpop.f32.mrb[0].mxu0
      %v2415 = vadd.f32 0.0, %v2414
      %v2416 = vpop.f32.mrb[0].mxu0
      %2417 = vmatprep.mubr.f32.mxu0 0.0
      %2418 = vmatmul.mubr.f32.gmra.mrb[0].mxu0 %v1376
      %v2419 = vpop.f32.mrb[0].mxu0
      %v2420 = vadd.f32 0.0, %v2419
      %v2421 = vpop.f32.mrb[0].mxu0
      %2422 = vmatprep.mubr.f32.mxu0 0.0
      %2423 = vmatmul.mubr.f32.gmra.mrb[0].mxu0 %v1909
      %v2424 = vpop.f32.mrb[0].mxu0
      %v2425 = vadd.f32 0.0, %v2424
      %v2426 = vpop.f32.mrb[0].mxu0
      %2427 = vmatprep.mubr.f32.mxu0 0.0
      %2428 = vmatmul.mubr.f32.gmra.mrb[0].mxu0 %v2309
      %v2429 = vpop.f32.mrb[0].mxu0
      %v2430 = vadd.f32 0.0, %v2429
      %v2431 = vpop.f32.mrb[0].mxu0
      %2432 = vdwg.mxu0
      %v2433 = vadd.f32 %v2297, %v2395
      %v2434 = vadd.f32 %v2298, %v2400
      %v2435 = vadd.f32 %v2299, %v2405
      %v2436 = vadd.f32 %v2300, %v2410
      %v2437 = vadd.f32 %v2301, %v2415
      %v2438 = vadd.f32 %v2302, %v2420
      %v2439 = vadd.f32 %v2303, %v2425
      %v2440 = vadd.f32 %v2304, %v2430
      %v2441 = vrot.slane %v1319, 2
      %v2442 = vrot.slane %v1320, 2
      %v2443 = vsel %vm1612, %v2441, %v2442
      %s2445 = scalar_lea.vmem %s4, 1024
      %v2446 = vld [vmem:[%s2445] sm:$0xff]
      %v2447 = vld [vmem:[%s2445 + $0x8] sm:$0xff]
      %v2448 = vld [vmem:[%s2445 + $0x10] sm:$0xff]
      %v2449 = vld [vmem:[%s2445 + $0x18] sm:$0xff]
      %v2450 = vld [vmem:[%s2445 + $0x20] sm:$0xff]
      %v2451 = vld [vmem:[%s2445 + $0x28] sm:$0xff]
      %v2452 = vld [vmem:[%s2445 + $0x30] sm:$0xff]
      %v2453 = vld [vmem:[%s2445 + $0x38] sm:$0xff]
      %v2454 = vld [vmem:[%s2445 + $0x40] sm:$0xff]
      %v2455 = vld [vmem:[%s2445 + $0x48] sm:$0xff]
      %v2456 = vld [vmem:[%s2445 + $0x50] sm:$0xff]
      %v2457 = vld [vmem:[%s2445 + $0x58] sm:$0xff]
      %v2458 = vld [vmem:[%s2445 + $0x60] sm:$0xff]
      %v2459 = vld [vmem:[%s2445 + $0x68] sm:$0xff]
      %v2460 = vld [vmem:[%s2445 + $0x70] sm:$0xff]
      %v2461 = vld [vmem:[%s2445 + $0x78] sm:$0xff]
      %2462 = vmatprep.subr.mxu0 0.0
      %2463 = vmatpush1.msra.mxu0 %v2446
      %2464 = vmatprep.subr.mxu0 0.0
      %2465 = vmatpush1.msra.mxu0 %v2447
      %2466 = vmatprep.subr.mxu0 0.0
      %2467 = vmatpush1.msra.mxu0 %v2448
      %2468 = vmatprep.subr.mxu0 0.0
      %2469 = vmatpush1.msra.mxu0 %v2449
      %2470 = vmatprep.subr.mxu0 0.0
      %2471 = vmatpush1.msra.mxu0 %v2450
      %2472 = vmatprep.subr.mxu0 0.0
      %2473 = vmatpush1.msra.mxu0 %v2451
      %2474 = vmatprep.subr.mxu0 0.0
      %2475 = vmatpush1.msra.mxu0 %v2452
      %2476 = vmatprep.subr.mxu0 0.0
      %2477 = vmatpush1.msra.mxu0 %v2453
      %2478 = vmatprep.subr.mxu0 0.0
      %2479 = vmatpush1.msra.mxu0 %v2454
      %2480 = vmatprep.subr.mxu0 0.0
      %2481 = vmatpush1.msra.mxu0 %v2455
      %2482 = vmatprep.subr.mxu0 0.0
      %2483 = vmatpush1.msra.mxu0 %v2456
      %2484 = vmatprep.subr.mxu0 0.0
      %2485 = vmatpush1.msra.mxu0 %v2457
      %2486 = vmatprep.subr.mxu0 0.0
      %2487 = vmatpush1.msra.mxu0 %v2458
      %2488 = vmatprep.subr.mxu0 0.0
      %2489 = vmatpush1.msra.mxu0 %v2459
      %2490 = vmatprep.subr.mxu0 0.0
      %2491 = vmatpush1.msra.mxu0 %v2460
      %2492 = vmatprep.subr.mxu0 0.0
      %2493 = vmatpush1.msra.mxu0 %v2461
      %2494 = vmatprep.subr.mxu0 0.0
      %2495 = vmatpush1.msra.mxu0 0.0
      %2496 = vmatprep.subr.mxu0 0.0
      %2497 = vmatpush1.msra.mxu0 0.0
      %2498 = vmatprep.subr.mxu0 0.0
      %2499 = vmatpush1.msra.mxu0 0.0
      %2500 = vmatprep.subr.mxu0 0.0
      %2501 = vmatpush1.msra.mxu0 0.0
      %2502 = vmatprep.subr.mxu0 0.0
      %2503 = vmatpush1.msra.mxu0 0.0
      %2504 = vmatprep.subr.mxu0 0.0
      %2505 = vmatpush1.msra.mxu0 0.0
      %2506 = vmatprep.subr.mxu0 0.0
      %2507 = vmatpush1.msra.mxu0 0.0
      %2508 = vmatprep.subr.mxu0 0.0
      %2509 = vmatpush1.msra.mxu0 0.0
      %2510 = vmatprep.subr.mxu0 0.0
      %2511 = vmatpush1.msra.mxu0 0.0
      %2512 = vmatprep.subr.mxu0 0.0
      %2513 = vmatpush1.msra.mxu0 0.0
      %2514 = vmatprep.subr.mxu0 0.0
      %2515 = vmatpush1.msra.mxu0 0.0
      %2516 = vmatprep.subr.mxu0 0.0
      %2517 = vmatpush1.msra.mxu0 0.0
      %2518 = vmatprep.subr.mxu0 0.0
      %2519 = vmatpush1.msra.mxu0 0.0
      %2520 = vmatprep.subr.mxu0 0.0
      %2521 = vmatpush1.msra.mxu0 0.0
      %2522 = vmatprep.subr.mxu0 0.0
      %2523 = vmatpush1.msra.mxu0 0.0
      %2524 = vmatprep.subr.mxu0 0.0
      %2525 = vmatpush1.msra.mxu0 0.0
      %2526 = vmatprep.mubr.f32.mxu0 0.0
      %2527 = vmatmul.mubr.f32.gmra.mrb[0].mxu0 %v1621
      %v2528 = vpop.f32.mrb[0].mxu0
      %v2529 = vadd.f32 0.0, %v2528
      %v2530 = vpop.f32.mrb[0].mxu0
      %2531 = vmatprep.mubr.f32.mxu0 0.0
      %2532 = vmatmul.mubr.f32.gmra.mrb[0].mxu0 %v1624
      %v2533 = vpop.f32.mrb[0].mxu0
      %v2534 = vadd.f32 0.0, %v2533
      %v2535 = vpop.f32.mrb[0].mxu0
      %2536 = vmatprep.mubr.f32.mxu0 0.0
      %2537 = vmatmul.mubr.f32.gmra.mrb[0].mxu0 %v1627
      %v2538 = vpop.f32.mrb[0].mxu0
      %v2539 = vadd.f32 0.0, %v2538
      %v2540 = vpop.f32.mrb[0].mxu0
      %2541 = vmatprep.mubr.f32.mxu0 0.0
      %2542 = vmatmul.mubr.f32.gmra.mrb[0].mxu0 %v1630
      %v2543 = vpop.f32.mrb[0].mxu0
      %v2544 = vadd.f32 0.0, %v2543
      %v2545 = vpop.f32.mrb[0].mxu0
      %2546 = vmatprep.mubr.f32.mxu0 0.0
      %2547 = vmatmul.mubr.f32.gmra.mrb[0].mxu0 %v1633
      %v2548 = vpop.f32.mrb[0].mxu0
      %v2549 = vadd.f32 0.0, %v2548
      %v2550 = vpop.f32.mrb[0].mxu0
      %2551 = vmatprep.mubr.f32.mxu0 0.0
      %2552 = vmatmul.mubr.f32.gmra.mrb[0].mxu0 %v1636
      %v2553 = vpop.f32.mrb[0].mxu0
      %v2554 = vadd.f32 0.0, %v2553
      %v2555 = vpop.f32.mrb[0].mxu0
      %2556 = vmatprep.mubr.f32.mxu0 0.0
      %2557 = vmatmul.mubr.f32.gmra.mrb[0].mxu0 %v2043
      %v2558 = vpop.f32.mrb[0].mxu0
      %v2559 = vadd.f32 0.0, %v2558
      %v2560 = vpop.f32.mrb[0].mxu0
      %2561 = vmatprep.mubr.f32.mxu0 0.0
      %2562 = vmatmul.mubr.f32.gmra.mrb[0].mxu0 %v2443
      %v2563 = vpop.f32.mrb[0].mxu0
      %v2564 = vadd.f32 0.0, %v2563
      %v2565 = vpop.f32.mrb[0].mxu0
      %2566 = vdwg.mxu0
      %v2567 = vadd.f32 %v2433, %v2529
      %v2568 = vadd.f32 %v2434, %v2534
      %v2569 = vadd.f32 %v2435, %v2539
      %v2570 = vadd.f32 %v2436, %v2544
      %v2571 = vadd.f32 %v2437, %v2549
      %v2572 = vadd.f32 %v2438, %v2554
      %v2573 = vadd.f32 %v2439, %v2559
      %v2574 = vadd.f32 %v2440, %v2564
      %vm2575 = vcmp.gt.f32.partialorder %v2567, 0.0
      %vm2576 = vcmp.gt.f32.partialorder %v2568, 0.0
      %vm2577 = vcmp.gt.f32.partialorder %v2569, 0.0
      %vm2578 = vcmp.gt.f32.partialorder %v2570, 0.0
      %vm2579 = vcmp.gt.f32.partialorder %v2571, 0.0
      %vm2580 = vcmp.gt.f32.partialorder %v2572, 0.0
      %vm2581 = vcmp.gt.f32.partialorder %v2573, 0.0
      %vm2582 = vcmp.gt.f32.partialorder %v2574, 0.0
      %v2583 = vmul.f32 %v2567, 0.2
      %v2584 = vmul.f32 %v2568, 0.2
      %v2585 = vmul.f32 %v2569, 0.2
      %v2586 = vmul.f32 %v2570, 0.2
      %v2587 = vmul.f32 %v2571, 0.2
      %v2588 = vmul.f32 %v2572, 0.2
      %v2589 = vmul.f32 %v2573, 0.2
      %v2590 = vmul.f32 %v2574, 0.2
      %v2591 = vsel %vm2575, %v2567, %v2583
      %v2592 = vsel %vm2576, %v2568, %v2584
      %v2593 = vsel %vm2577, %v2569, %v2585
      %v2594 = vsel %vm2578, %v2570, %v2586
      %v2595 = vsel %vm2579, %v2571, %v2587
      %v2596 = vsel %vm2580, %v2572, %v2588
      %v2597 = vsel %vm2581, %v2573, %v2589
      %v2598 = vsel %vm2582, %v2574, %v2590
      %v2599 = vld [vmem:[%s5] sm:$0x1]
      %v2601 = vlaneseq
      %v2602 = vshrl.u32 %v2601, 7
      %v2603 = vsub.s32 0, %v2602
      %v2604 = vrot.slane %v2599, %v2603
      %v2606 = vadd.f32 %v1240, %v2604
      %v2607 = vadd.f32 %v1241, %v2604
      %v2608 = vadd.f32 %v1242, %v2604
      %v2609 = vadd.f32 %v1243, %v2604
      %v2610 = vadd.f32 %v1244, %v2604
      %v2611 = vadd.f32 %v1245, %v2604
      %v2612 = vadd.f32 %v1246, %v2604
      %v2613 = vadd.f32 %v1247, %v2604
      %s2614 = sld [smem:[#allocation3]]
      %v2615 = vstv %s2614
      %v2616 = vmul.f32 %v2615, %v2591
      %v2617 = vmul.f32 %v2615, %v2592
      %v2618 = vmul.f32 %v2615, %v2593
      %v2619 = vmul.f32 %v2615, %v2594
      %v2620 = vmul.f32 %v2615, %v2595
      %v2621 = vmul.f32 %v2615, %v2596
      %v2622 = vmul.f32 %v2615, %v2597
      %v2623 = vmul.f32 %v2615, %v2598
      %v2624 = vadd.f32 %v2606, %v2616
      %v2625 = vadd.f32 %v2607, %v2617
      %v2626 = vadd.f32 %v2608, %v2618
      %v2627 = vadd.f32 %v2609, %v2619
      %v2628 = vadd.f32 %v2610, %v2620
      %v2629 = vadd.f32 %v2611, %v2621
      %v2630 = vadd.f32 %v2612, %v2622
      %v2631 = vadd.f32 %v2613, %v2623
      %2632 = vst [vmem:[%s252] sm:$0xff] %v2624
      %2633 = vst [vmem:[%s252 + $0x8] sm:$0xff] %v2625
      %2634 = vst [vmem:[%s252 + $0x10] sm:$0xff] %v2626
      %2635 = vst [vmem:[%s252 + $0x18] sm:$0xff] %v2627
      %2636 = vst [vmem:[%s252 + $0x20] sm:$0xff] %v2628
      %2637 = vst [vmem:[%s252 + $0x28] sm:$0xff] %v2629
      %2638 = vst [vmem:[%s252 + $0x30] sm:$0xff] %v2630
      %2639 = vst [vmem:[%s252 + $0x38] sm:$0xff] %v2631
      %p2640 = scmp.lt.s32.totalorder %s18, 1
      %s2641 = scalar_select %p2640, %s18, 1
      %s2642 = smul.addr %s2641, 8
      %s2643 = smul.addr %s2642, 8
      %s2644 = scalar_lea.vmem %s6, %s2643
      // Predicated region
      $region45: #{resd_forward.1} parent=43 // pred_check
        %p2645 = pneg %p167
      $region46: #{resd_forward.1} parent=43 // pred_check_branch
        %2647 = sbr.rel (%p2645) target = $region48
      $region47: #{resd_forward.1} parent=43 // pred_region
        _
      $region48: #{resd_forward.1} parent=43 // pred_fallthru
        _
    $region44: #{resd_forward.1} parent=5 // pred_fallthru
      _
    %p2648 = scmp.le.s32.totalorder 2, %s13
    // Predicated region
    $region49: #{resd_forward.1} parent=5 // pred_check
      %p2649 = pneg %p2648
    $region50: #{resd_forward.1} parent=5 // pred_check_branch
      %2651 = sbr.rel (%p2649) target = $region52
    $region51: #{resd_forward.1} parent=5 // pred_region
      %s2652 = ssub.s32 %s13, 2
      // Predicated region
      $region53: #{resd_forward.1} parent=51 // pred_check
        %p2653 = pneg %p173
      $region54: #{resd_forward.1} parent=51 // pred_check_branch
        %2655 = sbr.rel (%p2653) target = $region56
      $region55: #{resd_forward.1} parent=51 // pred_region
        %p2656 = scmp.lt.s32.totalorder %s19, 1
        %s2657 = scalar_select %p2656, %s19, 1
        %s2658 = smul.addr %s2657, 8
        %s2659 = smul.addr %s2658, 8
        %s2660 = scalar_lea.vmem %s6, %s2659
      $region56: #{resd_forward.1} parent=51 // pred_fallthru
        _
    $region52: #{resd_forward.1} parent=5 // pred_fallthru
      _
  $region6: #{resd_forward.1} parent=0 // loop_footer
    %s17 = sadd.s32 1, %s13
  $region7: #{resd_forward.1} parent=0 // loop_footer_branch
    %12 = sbr.rel target = $region3
  $region8: #{resd_forward.1} parent=0 // loop_exit
    _

</llo_original>
